<compile_context>
chip_gen: v7x
topology: tpu7x:2x2x1
jax: 0.10.0
libtpu: 0.0.40
codegen_flags: <defaults>
</compile_context>

<pallas_src>
import functools

import jax
import jax.numpy as jnp
from jax.experimental import pallas as pl
from jax.experimental.pallas import tpu as pltpu


# --------------------------- fused forward kernel ----------------------------

def make_fused_lstm_kernel(T, B, H, num_layers):
    """Builds the fused kernel for static (T, B, H, num_layers)."""
    TB = T * B

    def kernel(*refs):
        # inputs: ids, emb, h0, c0, [wih_t, whh_t, b] x (2 dirs) x layers, fc
        ids_ref, emb_ref, h0_ref, c0_ref = refs[0:4]
        n_lw = 6 * num_layers
        lstm_w = refs[4:4 + n_lw]
        w1_ref, b1_ref, w2_ref, b2_ref = refs[4 + n_lw:8 + n_lw]
        logits_ref = refs[8 + n_lw]
        scratch = refs[9 + n_lw:]               # 2*num_layers VMEM (TB, H) bufs

        V, _E = emb_ref.shape

        # ---- embedding lookup: one-hot (TB, V) @ (V, E); table stays in VMEM.
        ids = ids_ref[...]                                       # (TB, 1) int32
        vocab_iota = jax.lax.broadcasted_iota(jnp.int32, (TB, V), 1)
        one_hot = (vocab_iota == ids).astype(jnp.float32)
        x_emb = jnp.dot(one_hot, emb_ref[...],
                        preferred_element_type=jnp.float32)      # (TB, E)

        def cell_chain(proj, whh, h0, c0, out_ref, reverse):
            # proj: (TB, 4H) = x @ W_ih^T + (b_ih + b_hh), hoisted out of the
            # serial loop.  T is small & static -> fully unrolled recurrence.
            h, c = h0, c0
            steps = range(T - 1, -1, -1) if reverse else range(T)
            for t in steps:
                r = t * B
                gates = proj[r:r + B, :] + jnp.dot(
                    h, whh, preferred_element_type=jnp.float32)  # (B, 4H)
                # Full-tile transcendentals + lane-mask select (gate order
                # i, f, g, o like PyTorch), then static lane slices.
                lane = jax.lax.broadcasted_iota(jnp.int32, gates.shape, 1)
                is_g = (lane >= 2 * H) & (lane < 3 * H)
                acts = jnp.where(is_g, jnp.tanh(gates), jax.nn.sigmoid(gates))
                i_g = acts[:, 0 * H:1 * H]
                f_g = acts[:, 1 * H:2 * H]
                g_g = acts[:, 2 * H:3 * H]
                o_g = acts[:, 3 * H:4 * H]
                c = f_g * c + i_g * g_g
                h = o_g * jnp.tanh(c)
                out_ref[pl.ds(r, B), :] = h      # VMEM scratch, row block t

        prev_f = prev_b = None
        for layer in range(num_layers):
            wih_f, whh_f, b_f = lstm_w[6 * layer + 0:6 * layer + 3]
            wih_b, whh_b, b_b = lstm_w[6 * layer + 3:6 * layer + 6]
            of_ref = scratch[2 * layer]
            ob_ref = scratch[2 * layer + 1]

            if layer == 0:
                proj_f = jnp.dot(x_emb, wih_f[...],
                                 preferred_element_type=jnp.float32) + b_f[...]
                proj_b = jnp.dot(x_emb, wih_b[...],
                                 preferred_element_type=jnp.float32) + b_b[...]
            else:
                # Previous layer kept as two (TB, H) buffers; split W_ih rows
                # (fwd rows 0:H, bwd rows H:2H) to avoid a lane concat.
                xf = prev_f[...]
                xb = prev_b[...]
                wf = wih_f[...]
                wb = wih_b[...]
                proj_f = (jnp.dot(xf, wf[0:H, :], preferred_element_type=jnp.float32)
                          + jnp.dot(xb, wf[H:2 * H, :], preferred_element_type=jnp.float32)
                          + b_f[...])
                proj_b = (jnp.dot(xf, wb[0:H, :], preferred_element_type=jnp.float32)
                          + jnp.dot(xb, wb[H:2 * H, :], preferred_element_type=jnp.float32)
                          + b_b[...])

            cell_chain(proj_f, whh_f[...], h0_ref[2 * layer],
                       c0_ref[2 * layer], of_ref, reverse=False)
            cell_chain(proj_b, whh_b[...], h0_ref[2 * layer + 1],
                       c0_ref[2 * layer + 1], ob_ref, reverse=True)
            prev_f, prev_b = of_ref, ob_ref
            # TODO(synk): nn.Dropout / inter-layer LSTM dropout treated as identity (eval mode).

        # feat = cat(out[:, 0, :], out[:, -1, :]) = [fwd_0 | bwd_0 | fwd_{T-1} | bwd_{T-1}]
        # fc1 applied with its input rows pre-split -> no lane concat needed.
        f0 = prev_f[pl.ds(0, B), :]
        b0 = prev_b[pl.ds(0, B), :]
        fL = prev_f[pl.ds((T - 1) * B, B), :]
        bL = prev_b[pl.ds((T - 1) * B, B), :]
        w1 = w1_ref[...]                                         # (4H, F)
        hid = (jnp.dot(f0, w1[0 * H:1 * H, :], preferred_element_type=jnp.float32)
               + jnp.dot(b0, w1[1 * H:2 * H, :], preferred_element_type=jnp.float32)
               + jnp.dot(fL, w1[2 * H:3 * H, :], preferred_element_type=jnp.float32)
               + jnp.dot(bL, w1[3 * H:4 * H, :], preferred_element_type=jnp.float32)
               + b1_ref[...])
        hid = jnp.maximum(hid, 0.0)                              # relu_
        logits_ref[...] = (jnp.dot(hid, w2_ref[...],
                                   preferred_element_type=jnp.float32)
                           + b2_ref[...])

    return kernel


def fused_forward_call(ids_tm, emb, h0, c0, lstm_params, fc1, fc2,
                       *, T, B, H, num_layers):
    args = [ids_tm, emb, h0, c0]
    for dirs in lstm_params:
        for p in dirs:
            args.extend([p["wih_t"], p["whh_t"], p["b"]])
    args.extend([fc1[0], fc1[1], fc2[0], fc2[1]])

    kernel = make_fused_lstm_kernel(T, B, H, num_layers)
    return pl.pallas_call(
        kernel,
        out_shape=jax.ShapeDtypeStruct((B, 2), jnp.float32),
        scratch_shapes=[pltpu.VMEM((T * B, H), jnp.float32)
                        for _ in range(2 * num_layers)],
    )(*args)


# ------------------------------- parameters ----------------------------------

def init_params(key, vocab_size, embed_dim, hidden_dim, forward_dim,
                lstm_layers):
    keys = iter(jax.random.split(key, 64))
    params = {}

    emb = jax.random.normal(next(keys), (vocab_size, embed_dim), jnp.float32)
    emb = emb.at[0].set(0.0)                    # padding_idx=0
    params["embedding"] = emb

    k = 1.0 / (hidden_dim ** 0.5)               # PyTorch LSTM uniform init range
    lstm = []
    for layer in range(lstm_layers):
        in_dim = embed_dim if layer == 0 else 2 * hidden_dim
        dirs = []
        for _d in range(2):                      # forward, backward
            wih = jax.random.uniform(next(keys), (4 * hidden_dim, in_dim),
                                     jnp.float32, -k, k)
            whh = jax.random.uniform(next(keys), (4 * hidden_dim, hidden_dim),
                                     jnp.float32, -k, k)
            bih = jax.random.uniform(next(keys), (4 * hidden_dim,),
                                     jnp.float32, -k, k)
            bhh = jax.random.uniform(next(keys), (4 * hidden_dim,),
                                     jnp.float32, -k, k)
            dirs.append(dict(wih_t=wih.T, whh_t=whh.T,
                             b=(bih + bhh).reshape(1, -1)))
        lstm.append(dirs)
    params["lstm"] = lstm

    k1 = 1.0 / ((4 * hidden_dim) ** 0.5)
    w1 = jax.random.uniform(next(keys), (forward_dim, 4 * hidden_dim),
                            jnp.float32, -k1, k1)
    b1 = jax.random.uniform(next(keys), (forward_dim,), jnp.float32, -k1, k1)
    k2 = 1.0 / (forward_dim ** 0.5)
    w2 = jax.random.uniform(next(keys), (2, forward_dim), jnp.float32, -k2, k2)
    b2 = jax.random.uniform(next(keys), (2,), jnp.float32, -k2, k2)
    params["fc1"] = (w1.T, b1.reshape(1, -1))
    params["fc2"] = (w2.T, b2.reshape(1, -1))
    return params


# --------------------------------- forward -----------------------------------

def forward(params, input_ids, labels, state_key, hidden_dim, lstm_layers):
    B, T = input_ids.shape
    H = hidden_dim

    # torch.zeros(...) then xavier_normal_ -> random initial states each call;
    # reproduced deterministically from a key with the xavier-normal std for a
    # (2L, B, H) tensor: fan_in = B*H, fan_out = 2L*H.
    num_state = 2 * lstm_layers
    std = (2.0 / (B * H + num_state * H)) ** 0.5
    kh, kc = jax.random.split(state_key)
    h0 = jax.random.normal(kh, (num_state, B, H), jnp.float32) * std
    c0 = jax.random.normal(kc, (num_state, B, H), jnp.float32) * std

    # time-major row layout: row t*B + b = input_ids[b, t]
    ids_tm = input_ids.astype(jnp.int32).T.reshape(T * B, 1)

    logits = fused_forward_call(ids_tm, params["embedding"], h0, c0,
                                params["lstm"], params["fc1"], params["fc2"],
                                T=T, B=B, H=H, num_layers=lstm_layers)

    loss = None
    if labels is not None:
        logp = jax.nn.log_softmax(logits, axis=-1)
        loss = -jnp.mean(jnp.take_along_axis(logp, labels.reshape(-1, 1),
                                             axis=-1))
    return loss, logits


# ----------------------------------- main -------------------------------------

if __name__ == "__main__":
    vocab_size, embed_dim, hidden_dim, forward_dim, lstm_layers = 50, 32, 32, 64, 2
    B, T = 2, 8

    key = jax.random.PRNGKey(0)
    k_param, k_state, k_ids, k_labels = jax.random.split(key, 4)

    params = init_params(k_param, vocab_size, embed_dim, hidden_dim,
                         forward_dim, lstm_layers)
    input_ids = jax.random.randint(k_ids, (B, T), 0, vocab_size, dtype=jnp.int32)
    labels = jax.random.randint(k_labels, (B,), 0, 2, dtype=jnp.int32)

    fwd = jax.jit(functools.partial(forward, hidden_dim=hidden_dim,
                                    lstm_layers=lstm_layers))
    loss, logits = fwd(params, input_ids, labels, k_state)
    jax.block_until_ready((loss, logits))
    assert logits.shape == (B, 2) and loss.shape == ()
    print("KERNEL_OK")
</pallas_src>

<mosaic_0001>
module attributes {stable_mosaic.version = 11 : i64} {
  func.func @kernel(%arg0: memref<16x1xi32, #tpu.memory_space<vmem>>, %arg1: memref<50x32xf32, #tpu.memory_space<vmem>>, %arg2: memref<4x2x32xf32, #tpu.memory_space<vmem>>, %arg3: memref<4x2x32xf32, #tpu.memory_space<vmem>>, %arg4: memref<32x128xf32, #tpu.memory_space<vmem>>, %arg5: memref<32x128xf32, #tpu.memory_space<vmem>>, %arg6: memref<1x128xf32, #tpu.memory_space<vmem>>, %arg7: memref<32x128xf32, #tpu.memory_space<vmem>>, %arg8: memref<32x128xf32, #tpu.memory_space<vmem>>, %arg9: memref<1x128xf32, #tpu.memory_space<vmem>>, %arg10: memref<64x128xf32, #tpu.memory_space<vmem>>, %arg11: memref<32x128xf32, #tpu.memory_space<vmem>>, %arg12: memref<1x128xf32, #tpu.memory_space<vmem>>, %arg13: memref<64x128xf32, #tpu.memory_space<vmem>>, %arg14: memref<32x128xf32, #tpu.memory_space<vmem>>, %arg15: memref<1x128xf32, #tpu.memory_space<vmem>>, %arg16: memref<128x64xf32, #tpu.memory_space<vmem>>, %arg17: memref<1x64xf32, #tpu.memory_space<vmem>>, %arg18: memref<64x2xf32, #tpu.memory_space<vmem>>, %arg19: memref<1x2xf32, #tpu.memory_space<vmem>>, %arg20: memref<2x2xf32, #tpu.memory_space<vmem>>, %arg21: memref<16x32xf32, #tpu.memory_space<vmem>>, %arg22: memref<16x32xf32, #tpu.memory_space<vmem>>, %arg23: memref<16x32xf32, #tpu.memory_space<vmem>>, %arg24: memref<16x32xf32, #tpu.memory_space<vmem>>) attributes {dimension_semantics = [], scalar_prefetch = 0 : i64, scratch_operands = 4 : i64, tpu.core_type = #tpu.core_type<tc>} {
    %c0 = arith.constant 0 : index
    %c0_0 = arith.constant 0 : index
    %0 = vector.load %arg0[%c0, %c0_0] : memref<16x1xi32, #tpu.memory_space<vmem>>, vector<16x1xi32>
    %1 = tpu.iota {dimensions = array<i32: 1>} : vector<16x50xi32>
    %2 = vector.broadcast %0 : vector<16x1xi32> to vector<16x50xi32>
    %3 = arith.cmpi eq, %1, %2 : vector<16x50xi32>
    %4 = arith.extui %3 : vector<16x50xi1> to vector<16x50xi32>
    %5 = arith.sitofp %4 : vector<16x50xi32> to vector<16x50xf32>
    %c0_1 = arith.constant 0 : index
    %c0_2 = arith.constant 0 : index
    %6 = vector.load %arg1[%c0_1, %c0_2] : memref<50x32xf32, #tpu.memory_space<vmem>>, vector<50x32xf32>
    %cst = arith.constant dense<0.000000e+00> : vector<16x32xf32>
    %7 = tpu.matmul %5, %6, %cst {dimension_numbers = #tpu.dot_dimension_numbers<[1], [0], [0], [1], [0, 0, 1, 1], [], []>} : vector<16x50xf32>, vector<50x32xf32>, vector<16x32xf32> -> vector<16x32xf32>
    %c0_3 = arith.constant 0 : index
    %c0_4 = arith.constant 0 : index
    %8 = vector.load %arg4[%c0_3, %c0_4] : memref<32x128xf32, #tpu.memory_space<vmem>>, vector<32x128xf32>
    %cst_5 = arith.constant dense<0.000000e+00> : vector<16x128xf32>
    %9 = tpu.matmul %7, %8, %cst_5 {dimension_numbers = #tpu.dot_dimension_numbers<[1], [0], [0], [1], [0, 0, 1, 1], [], []>} : vector<16x32xf32>, vector<32x128xf32>, vector<16x128xf32> -> vector<16x128xf32>
    %c0_6 = arith.constant 0 : index
    %c0_7 = arith.constant 0 : index
    %10 = vector.load %arg6[%c0_6, %c0_7] : memref<1x128xf32, #tpu.memory_space<vmem>>, vector<1x128xf32>
    %11 = vector.broadcast %10 : vector<1x128xf32> to vector<16x128xf32>
    %12 = arith.addf %9, %11 : vector<16x128xf32>
    %c0_8 = arith.constant 0 : index
    %c0_9 = arith.constant 0 : index
    %13 = vector.load %arg7[%c0_8, %c0_9] : memref<32x128xf32, #tpu.memory_space<vmem>>, vector<32x128xf32>
    %cst_10 = arith.constant dense<0.000000e+00> : vector<16x128xf32>
    %14 = tpu.matmul %7, %13, %cst_10 {dimension_numbers = #tpu.dot_dimension_numbers<[1], [0], [0], [1], [0, 0, 1, 1], [], []>} : vector<16x32xf32>, vector<32x128xf32>, vector<16x128xf32> -> vector<16x128xf32>
    %c0_11 = arith.constant 0 : index
    %c0_12 = arith.constant 0 : index
    %15 = vector.load %arg9[%c0_11, %c0_12] : memref<1x128xf32, #tpu.memory_space<vmem>>, vector<1x128xf32>
    %16 = vector.broadcast %15 : vector<1x128xf32> to vector<16x128xf32>
    %17 = arith.addf %14, %16 : vector<16x128xf32>
    %c0_13 = arith.constant 0 : index
    %c0_14 = arith.constant 0 : index
    %18 = vector.load %arg5[%c0_13, %c0_14] : memref<32x128xf32, #tpu.memory_space<vmem>>, vector<32x128xf32>
    %c0_15 = arith.constant 0 : index
    %c0_16 = arith.constant 0 : index
    %c0_17 = arith.constant 0 : index
    %19 = vector.load %arg2[%c0_15, %c0_16, %c0_17] : memref<4x2x32xf32, #tpu.memory_space<vmem>>, vector<1x2x32xf32>
    %20 = vector.shape_cast %19 : vector<1x2x32xf32> to vector<2x32xf32>
    %c0_18 = arith.constant 0 : index
    %c0_19 = arith.constant 0 : index
    %c0_20 = arith.constant 0 : index
    %21 = vector.load %arg3[%c0_18, %c0_19, %c0_20] : memref<4x2x32xf32, #tpu.memory_space<vmem>>, vector<1x2x32xf32>
    %22 = vector.shape_cast %21 : vector<1x2x32xf32> to vector<2x32xf32>
    %23 = vector.extract_strided_slice %12 {offsets = [0, 0], sizes = [2, 128], strides = [1, 1]} : vector<16x128xf32> to vector<2x128xf32>
    %cst_21 = arith.constant dense<0.000000e+00> : vector<2x128xf32>
    %24 = tpu.matmul %20, %18, %cst_21 {dimension_numbers = #tpu.dot_dimension_numbers<[1], [0], [0], [1], [0, 0, 1, 1], [], []>} : vector<2x32xf32>, vector<32x128xf32>, vector<2x128xf32> -> vector<2x128xf32>
    %25 = arith.addf %23, %24 : vector<2x128xf32>
    %26 = tpu.iota {dimensions = array<i32: 1>} : vector<2x128xi32>
    %c64_i32 = arith.constant 64 : i32
    %27 = vector.broadcast %c64_i32 : i32 to vector<2x128xi32>
    %28 = arith.cmpi sge, %26, %27 : vector<2x128xi32>
    %c96_i32 = arith.constant 96 : i32
    %29 = vector.broadcast %c96_i32 : i32 to vector<2x128xi32>
    %30 = arith.cmpi slt, %26, %29 : vector<2x128xi32>
    %31 = arith.andi %28, %30 : vector<2x128xi1>
    %32 = math.tanh %25 : vector<2x128xf32>
    %33 = arith.negf %25 : vector<2x128xf32>
    %34 = math.exp %33 : vector<2x128xf32>
    %cst_22 = arith.constant 1.000000e+00 : f32
    %35 = vector.broadcast %cst_22 : f32 to vector<2x128xf32>
    %36 = arith.addf %35, %34 : vector<2x128xf32>
    %37 = arith.divf %35, %36 : vector<2x128xf32>
    %38 = arith.select %31, %32, %37 : vector<2x128xi1>, vector<2x128xf32>
    %39 = vector.extract_strided_slice %38 {offsets = [0, 0], sizes = [2, 32], strides = [1, 1]} : vector<2x128xf32> to vector<2x32xf32>
    %40 = vector.extract_strided_slice %38 {offsets = [0, 32], sizes = [2, 32], strides = [1, 1]} : vector<2x128xf32> to vector<2x32xf32>
    %41 = vector.extract_strided_slice %38 {offsets = [0, 64], sizes = [2, 32], strides = [1, 1]} : vector<2x128xf32> to vector<2x32xf32>
    %42 = vector.extract_strided_slice %38 {offsets = [0, 96], sizes = [2, 32], strides = [1, 1]} : vector<2x128xf32> to vector<2x32xf32>
    %43 = arith.mulf %40, %22 : vector<2x32xf32>
    %44 = arith.mulf %39, %41 : vector<2x32xf32>
    %45 = arith.addf %43, %44 : vector<2x32xf32>
    %46 = math.tanh %45 : vector<2x32xf32>
    %47 = arith.mulf %42, %46 : vector<2x32xf32>
    %c0_23 = arith.constant 0 : index
    %c0_24 = arith.constant 0 : index
    %48 = vector.load %arg21[%c0_23, %c0_24] : memref<16x32xf32, #tpu.memory_space<vmem>>, vector<2x32xf32>
    tpu.vector_store %arg21[%c0_23, %c0_24], %47 {strides = array<i32>} : memref<16x32xf32, #tpu.memory_space<vmem>>, vector<2x32xf32>,
    %49 = vector.extract_strided_slice %12 {offsets = [2, 0], sizes = [2, 128], strides = [1, 1]} : vector<16x128xf32> to vector<2x128xf32>
    %cst_25 = arith.constant dense<0.000000e+00> : vector<2x128xf32>
    %50 = tpu.matmul %47, %18, %cst_25 {dimension_numbers = #tpu.dot_dimension_numbers<[1], [0], [0], [1], [0, 0, 1, 1], [], []>} : vector<2x32xf32>, vector<32x128xf32>, vector<2x128xf32> -> vector<2x128xf32>
    %51 = arith.addf %49, %50 : vector<2x128xf32>
    %52 = tpu.iota {dimensions = array<i32: 1>} : vector<2x128xi32>
    %c64_i32_26 = arith.constant 64 : i32
    %53 = vector.broadcast %c64_i32_26 : i32 to vector<2x128xi32>
    %54 = arith.cmpi sge, %52, %53 : vector<2x128xi32>
    %c96_i32_27 = arith.constant 96 : i32
    %55 = vector.broadcast %c96_i32_27 : i32 to vector<2x128xi32>
    %56 = arith.cmpi slt, %52, %55 : vector<2x128xi32>
    %57 = arith.andi %54, %56 : vector<2x128xi1>
    %58 = math.tanh %51 : vector<2x128xf32>
    %59 = arith.negf %51 : vector<2x128xf32>
    %60 = math.exp %59 : vector<2x128xf32>
    %cst_28 = arith.constant 1.000000e+00 : f32
    %61 = vector.broadcast %cst_28 : f32 to vector<2x128xf32>
    %62 = arith.addf %61, %60 : vector<2x128xf32>
    %63 = arith.divf %61, %62 : vector<2x128xf32>
    %64 = arith.select %57, %58, %63 : vector<2x128xi1>, vector<2x128xf32>
    %65 = vector.extract_strided_slice %64 {offsets = [0, 0], sizes = [2, 32], strides = [1, 1]} : vector<2x128xf32> to vector<2x32xf32>
    %66 = vector.extract_strided_slice %64 {offsets = [0, 32], sizes = [2, 32], strides = [1, 1]} : vector<2x128xf32> to vector<2x32xf32>
    %67 = vector.extract_strided_slice %64 {offsets = [0, 64], sizes = [2, 32], strides = [1, 1]} : vector<2x128xf32> to vector<2x32xf32>
    %68 = vector.extract_strided_slice %64 {offsets = [0, 96], sizes = [2, 32], strides = [1, 1]} : vector<2x128xf32> to vector<2x32xf32>
    %69 = arith.mulf %66, %45 : vector<2x32xf32>
    %70 = arith.mulf %65, %67 : vector<2x32xf32>
    %71 = arith.addf %69, %70 : vector<2x32xf32>
    %72 = math.tanh %71 : vector<2x32xf32>
    %73 = arith.mulf %68, %72 : vector<2x32xf32>
    %c2 = arith.constant 2 : index
    %c0_29 = arith.constant 0 : index
    %74 = vector.load %arg21[%c2, %c0_29] : memref<16x32xf32, #tpu.memory_space<vmem>>, vector<2x32xf32>
    tpu.vector_store %arg21[%c2, %c0_29], %73 {strides = array<i32>} : memref<16x32xf32, #tpu.memory_space<vmem>>, vector<2x32xf32>,
    %75 = vector.extract_strided_slice %12 {offsets = [4, 0], sizes = [2, 128], strides = [1, 1]} : vector<16x128xf32> to vector<2x128xf32>
    %cst_30 = arith.constant dense<0.000000e+00> : vector<2x128xf32>
    %76 = tpu.matmul %73, %18, %cst_30 {dimension_numbers = #tpu.dot_dimension_numbers<[1], [0], [0], [1], [0, 0, 1, 1], [], []>} : vector<2x32xf32>, vector<32x128xf32>, vector<2x128xf32> -> vector<2x128xf32>
    %77 = arith.addf %75, %76 : vector<2x128xf32>
    %78 = tpu.iota {dimensions = array<i32: 1>} : vector<2x128xi32>
    %c64_i32_31 = arith.constant 64 : i32
    %79 = vector.broadcast %c64_i32_31 : i32 to vector<2x128xi32>
    %80 = arith.cmpi sge, %78, %79 : vector<2x128xi32>
    %c96_i32_32 = arith.constant 96 : i32
    %81 = vector.broadcast %c96_i32_32 : i32 to vector<2x128xi32>
    %82 = arith.cmpi slt, %78, %81 : vector<2x128xi32>
    %83 = arith.andi %80, %82 : vector<2x128xi1>
    %84 = math.tanh %77 : vector<2x128xf32>
    %85 = arith.negf %77 : vector<2x128xf32>
    %86 = math.exp %85 : vector<2x128xf32>
    %cst_33 = arith.constant 1.000000e+00 : f32
    %87 = vector.broadcast %cst_33 : f32 to vector<2x128xf32>
    %88 = arith.addf %87, %86 : vector<2x128xf32>
    %89 = arith.divf %87, %88 : vector<2x128xf32>
    %90 = arith.select %83, %84, %89 : vector<2x128xi1>, vector<2x128xf32>
    %91 = vector.extract_strided_slice %90 {offsets = [0, 0], sizes = [2, 32], strides = [1, 1]} : vector<2x128xf32> to vector<2x32xf32>
    %92 = vector.extract_strided_slice %90 {offsets = [0, 32], sizes = [2, 32], strides = [1, 1]} : vector<2x128xf32> to vector<2x32xf32>
    %93 = vector.extract_strided_slice %90 {offsets = [0, 64], sizes = [2, 32], strides = [1, 1]} : vector<2x128xf32> to vector<2x32xf32>
    %94 = vector.extract_strided_slice %90 {offsets = [0, 96], sizes = [2, 32], strides = [1, 1]} : vector<2x128xf32> to vector<2x32xf32>
    %95 = arith.mulf %92, %71 : vector<2x32xf32>
    %96 = arith.mulf %91, %93 : vector<2x32xf32>
    %97 = arith.addf %95, %96 : vector<2x32xf32>
    %98 = math.tanh %97 : vector<2x32xf32>
    %99 = arith.mulf %94, %98 : vector<2x32xf32>
    %c4 = arith.constant 4 : index
    %c0_34 = arith.constant 0 : index
    %100 = vector.load %arg21[%c4, %c0_34] : memref<16x32xf32, #tpu.memory_space<vmem>>, vector<2x32xf32>
    tpu.vector_store %arg21[%c4, %c0_34], %99 {strides = array<i32>} : memref<16x32xf32, #tpu.memory_space<vmem>>, vector<2x32xf32>,
    %101 = vector.extract_strided_slice %12 {offsets = [6, 0], sizes = [2, 128], strides = [1, 1]} : vector<16x128xf32> to vector<2x128xf32>
    %cst_35 = arith.constant dense<0.000000e+00> : vector<2x128xf32>
    %102 = tpu.matmul %99, %18, %cst_35 {dimension_numbers = #tpu.dot_dimension_numbers<[1], [0], [0], [1], [0, 0, 1, 1], [], []>} : vector<2x32xf32>, vector<32x128xf32>, vector<2x128xf32> -> vector<2x128xf32>
    %103 = arith.addf %101, %102 : vector<2x128xf32>
    %104 = tpu.iota {dimensions = array<i32: 1>} : vector<2x128xi32>
    %c64_i32_36 = arith.constant 64 : i32
    %105 = vector.broadcast %c64_i32_36 : i32 to vector<2x128xi32>
    %106 = arith.cmpi sge, %104, %105 : vector<2x128xi32>
    %c96_i32_37 = arith.constant 96 : i32
    %107 = vector.broadcast %c96_i32_37 : i32 to vector<2x128xi32>
    %108 = arith.cmpi slt, %104, %107 : vector<2x128xi32>
    %109 = arith.andi %106, %108 : vector<2x128xi1>
    %110 = math.tanh %103 : vector<2x128xf32>
    %111 = arith.negf %103 : vector<2x128xf32>
    %112 = math.exp %111 : vector<2x128xf32>
    %cst_38 = arith.constant 1.000000e+00 : f32
    %113 = vector.broadcast %cst_38 : f32 to vector<2x128xf32>
    %114 = arith.addf %113, %112 : vector<2x128xf32>
    %115 = arith.divf %113, %114 : vector<2x128xf32>
    %116 = arith.select %109, %110, %115 : vector<2x128xi1>, vector<2x128xf32>
    %117 = vector.extract_strided_slice %116 {offsets = [0, 0], sizes = [2, 32], strides = [1, 1]} : vector<2x128xf32> to vector<2x32xf32>
    %118 = vector.extract_strided_slice %116 {offsets = [0, 32], sizes = [2, 32], strides = [1, 1]} : vector<2x128xf32> to vector<2x32xf32>
    %119 = vector.extract_strided_slice %116 {offsets = [0, 64], sizes = [2, 32], strides = [1, 1]} : vector<2x128xf32> to vector<2x32xf32>
    %120 = vector.extract_strided_slice %116 {offsets = [0, 96], sizes = [2, 32], strides = [1, 1]} : vector<2x128xf32> to vector<2x32xf32>
    %121 = arith.mulf %118, %97 : vector<2x32xf32>
    %122 = arith.mulf %117, %119 : vector<2x32xf32>
    %123 = arith.addf %121, %122 : vector<2x32xf32>
    %124 = math.tanh %123 : vector<2x32xf32>
    %125 = arith.mulf %120, %124 : vector<2x32xf32>
    %c6 = arith.constant 6 : index
    %c0_39 = arith.constant 0 : index
    %126 = vector.load %arg21[%c6, %c0_39] : memref<16x32xf32, #tpu.memory_space<vmem>>, vector<2x32xf32>
    tpu.vector_store %arg21[%c6, %c0_39], %125 {strides = array<i32>} : memref<16x32xf32, #tpu.memory_space<vmem>>, vector<2x32xf32>,
    %127 = vector.extract_strided_slice %12 {offsets = [8, 0], sizes = [2, 128], strides = [1, 1]} : vector<16x128xf32> to vector<2x128xf32>
    %cst_40 = arith.constant dense<0.000000e+00> : vector<2x128xf32>
    %128 = tpu.matmul %125, %18, %cst_40 {dimension_numbers = #tpu.dot_dimension_numbers<[1], [0], [0], [1], [0, 0, 1, 1], [], []>} : vector<2x32xf32>, vector<32x128xf32>, vector<2x128xf32> -> vector<2x128xf32>
    %129 = arith.addf %127, %128 : vector<2x128xf32>
    %130 = tpu.iota {dimensions = array<i32: 1>} : vector<2x128xi32>
    %c64_i32_41 = arith.constant 64 : i32
    %131 = vector.broadcast %c64_i32_41 : i32 to vector<2x128xi32>
    %132 = arith.cmpi sge, %130, %131 : vector<2x128xi32>
    %c96_i32_42 = arith.constant 96 : i32
    %133 = vector.broadcast %c96_i32_42 : i32 to vector<2x128xi32>
    %134 = arith.cmpi slt, %130, %133 : vector<2x128xi32>
    %135 = arith.andi %132, %134 : vector<2x128xi1>
    %136 = math.tanh %129 : vector<2x128xf32>
    %137 = arith.negf %129 : vector<2x128xf32>
    %138 = math.exp %137 : vector<2x128xf32>
    %cst_43 = arith.constant 1.000000e+00 : f32
    %139 = vector.broadcast %cst_43 : f32 to vector<2x128xf32>
    %140 = arith.addf %139, %138 : vector<2x128xf32>
    %141 = arith.divf %139, %140 : vector<2x128xf32>
    %142 = arith.select %135, %136, %141 : vector<2x128xi1>, vector<2x128xf32>
    %143 = vector.extract_strided_slice %142 {offsets = [0, 0], sizes = [2, 32], strides = [1, 1]} : vector<2x128xf32> to vector<2x32xf32>
    %144 = vector.extract_strided_slice %142 {offsets = [0, 32], sizes = [2, 32], strides = [1, 1]} : vector<2x128xf32> to vector<2x32xf32>
    %145 = vector.extract_strided_slice %142 {offsets = [0, 64], sizes = [2, 32], strides = [1, 1]} : vector<2x128xf32> to vector<2x32xf32>
    %146 = vector.extract_strided_slice %142 {offsets = [0, 96], sizes = [2, 32], strides = [1, 1]} : vector<2x128xf32> to vector<2x32xf32>
    %147 = arith.mulf %144, %123 : vector<2x32xf32>
    %148 = arith.mulf %143, %145 : vector<2x32xf32>
    %149 = arith.addf %147, %148 : vector<2x32xf32>
    %150 = math.tanh %149 : vector<2x32xf32>
    %151 = arith.mulf %146, %150 : vector<2x32xf32>
    %c8 = arith.constant 8 : index
    %c0_44 = arith.constant 0 : index
    %152 = vector.load %arg21[%c8, %c0_44] : memref<16x32xf32, #tpu.memory_space<vmem>>, vector<2x32xf32>
    tpu.vector_store %arg21[%c8, %c0_44], %151 {strides = array<i32>} : memref<16x32xf32, #tpu.memory_space<vmem>>, vector<2x32xf32>,
    %153 = vector.extract_strided_slice %12 {offsets = [10, 0], sizes = [2, 128], strides = [1, 1]} : vector<16x128xf32> to vector<2x128xf32>
    %cst_45 = arith.constant dense<0.000000e+00> : vector<2x128xf32>
    %154 = tpu.matmul %151, %18, %cst_45 {dimension_numbers = #tpu.dot_dimension_numbers<[1], [0], [0], [1], [0, 0, 1, 1], [], []>} : vector<2x32xf32>, vector<32x128xf32>, vector<2x128xf32> -> vector<2x128xf32>
    %155 = arith.addf %153, %154 : vector<2x128xf32>
    %156 = tpu.iota {dimensions = array<i32: 1>} : vector<2x128xi32>
    %c64_i32_46 = arith.constant 64 : i32
    %157 = vector.broadcast %c64_i32_46 : i32 to vector<2x128xi32>
    %158 = arith.cmpi sge, %156, %157 : vector<2x128xi32>
    %c96_i32_47 = arith.constant 96 : i32
    %159 = vector.broadcast %c96_i32_47 : i32 to vector<2x128xi32>
    %160 = arith.cmpi slt, %156, %159 : vector<2x128xi32>
    %161 = arith.andi %158, %160 : vector<2x128xi1>
    %162 = math.tanh %155 : vector<2x128xf32>
    %163 = arith.negf %155 : vector<2x128xf32>
    %164 = math.exp %163 : vector<2x128xf32>
    %cst_48 = arith.constant 1.000000e+00 : f32
    %165 = vector.broadcast %cst_48 : f32 to vector<2x128xf32>
    %166 = arith.addf %165, %164 : vector<2x128xf32>
    %167 = arith.divf %165, %166 : vector<2x128xf32>
    %168 = arith.select %161, %162, %167 : vector<2x128xi1>, vector<2x128xf32>
    %169 = vector.extract_strided_slice %168 {offsets = [0, 0], sizes = [2, 32], strides = [1, 1]} : vector<2x128xf32> to vector<2x32xf32>
    %170 = vector.extract_strided_slice %168 {offsets = [0, 32], sizes = [2, 32], strides = [1, 1]} : vector<2x128xf32> to vector<2x32xf32>
    %171 = vector.extract_strided_slice %168 {offsets = [0, 64], sizes = [2, 32], strides = [1, 1]} : vector<2x128xf32> to vector<2x32xf32>
    %172 = vector.extract_strided_slice %168 {offsets = [0, 96], sizes = [2, 32], strides = [1, 1]} : vector<2x128xf32> to vector<2x32xf32>
    %173 = arith.mulf %170, %149 : vector<2x32xf32>
    %174 = arith.mulf %169, %171 : vector<2x32xf32>
    %175 = arith.addf %173, %174 : vector<2x32xf32>
    %176 = math.tanh %175 : vector<2x32xf32>
    %177 = arith.mulf %172, %176 : vector<2x32xf32>
    %c10 = arith.constant 10 : index
    %c0_49 = arith.constant 0 : index
    %178 = vector.load %arg21[%c10, %c0_49] : memref<16x32xf32, #tpu.memory_space<vmem>>, vector<2x32xf32>
    tpu.vector_store %arg21[%c10, %c0_49], %177 {strides = array<i32>} : memref<16x32xf32, #tpu.memory_space<vmem>>, vector<2x32xf32>,
    %179 = vector.extract_strided_slice %12 {offsets = [12, 0], sizes = [2, 128], strides = [1, 1]} : vector<16x128xf32> to vector<2x128xf32>
    %cst_50 = arith.constant dense<0.000000e+00> : vector<2x128xf32>
    %180 = tpu.matmul %177, %18, %cst_50 {dimension_numbers = #tpu.dot_dimension_numbers<[1], [0], [0], [1], [0, 0, 1, 1], [], []>} : vector<2x32xf32>, vector<32x128xf32>, vector<2x128xf32> -> vector<2x128xf32>
    %181 = arith.addf %179, %180 : vector<2x128xf32>
    %182 = tpu.iota {dimensions = array<i32: 1>} : vector<2x128xi32>
    %c64_i32_51 = arith.constant 64 : i32
    %183 = vector.broadcast %c64_i32_51 : i32 to vector<2x128xi32>
    %184 = arith.cmpi sge, %182, %183 : vector<2x128xi32>
    %c96_i32_52 = arith.constant 96 : i32
    %185 = vector.broadcast %c96_i32_52 : i32 to vector<2x128xi32>
    %186 = arith.cmpi slt, %182, %185 : vector<2x128xi32>
    %187 = arith.andi %184, %186 : vector<2x128xi1>
    %188 = math.tanh %181 : vector<2x128xf32>
    %189 = arith.negf %181 : vector<2x128xf32>
    %190 = math.exp %189 : vector<2x128xf32>
    %cst_53 = arith.constant 1.000000e+00 : f32
    %191 = vector.broadcast %cst_53 : f32 to vector<2x128xf32>
    %192 = arith.addf %191, %190 : vector<2x128xf32>
    %193 = arith.divf %191, %192 : vector<2x128xf32>
    %194 = arith.select %187, %188, %193 : vector<2x128xi1>, vector<2x128xf32>
    %195 = vector.extract_strided_slice %194 {offsets = [0, 0], sizes = [2, 32], strides = [1, 1]} : vector<2x128xf32> to vector<2x32xf32>
    %196 = vector.extract_strided_slice %194 {offsets = [0, 32], sizes = [2, 32], strides = [1, 1]} : vector<2x128xf32> to vector<2x32xf32>
    %197 = vector.extract_strided_slice %194 {offsets = [0, 64], sizes = [2, 32], strides = [1, 1]} : vector<2x128xf32> to vector<2x32xf32>
    %198 = vector.extract_strided_slice %194 {offsets = [0, 96], sizes = [2, 32], strides = [1, 1]} : vector<2x128xf32> to vector<2x32xf32>
    %199 = arith.mulf %196, %175 : vector<2x32xf32>
    %200 = arith.mulf %195, %197 : vector<2x32xf32>
    %201 = arith.addf %199, %200 : vector<2x32xf32>
    %202 = math.tanh %201 : vector<2x32xf32>
    %203 = arith.mulf %198, %202 : vector<2x32xf32>
    %c12 = arith.constant 12 : index
    %c0_54 = arith.constant 0 : index
    %204 = vector.load %arg21[%c12, %c0_54] : memref<16x32xf32, #tpu.memory_space<vmem>>, vector<2x32xf32>
    tpu.vector_store %arg21[%c12, %c0_54], %203 {strides = array<i32>} : memref<16x32xf32, #tpu.memory_space<vmem>>, vector<2x32xf32>,
    %205 = vector.extract_strided_slice %12 {offsets = [14, 0], sizes = [2, 128], strides = [1, 1]} : vector<16x128xf32> to vector<2x128xf32>
    %cst_55 = arith.constant dense<0.000000e+00> : vector<2x128xf32>
    %206 = tpu.matmul %203, %18, %cst_55 {dimension_numbers = #tpu.dot_dimension_numbers<[1], [0], [0], [1], [0, 0, 1, 1], [], []>} : vector<2x32xf32>, vector<32x128xf32>, vector<2x128xf32> -> vector<2x128xf32>
    %207 = arith.addf %205, %206 : vector<2x128xf32>
    %208 = tpu.iota {dimensions = array<i32: 1>} : vector<2x128xi32>
    %c64_i32_56 = arith.constant 64 : i32
    %209 = vector.broadcast %c64_i32_56 : i32 to vector<2x128xi32>
    %210 = arith.cmpi sge, %208, %209 : vector<2x128xi32>
    %c96_i32_57 = arith.constant 96 : i32
    %211 = vector.broadcast %c96_i32_57 : i32 to vector<2x128xi32>
    %212 = arith.cmpi slt, %208, %211 : vector<2x128xi32>
    %213 = arith.andi %210, %212 : vector<2x128xi1>
    %214 = math.tanh %207 : vector<2x128xf32>
    %215 = arith.negf %207 : vector<2x128xf32>
    %216 = math.exp %215 : vector<2x128xf32>
    %cst_58 = arith.constant 1.000000e+00 : f32
    %217 = vector.broadcast %cst_58 : f32 to vector<2x128xf32>
    %218 = arith.addf %217, %216 : vector<2x128xf32>
    %219 = arith.divf %217, %218 : vector<2x128xf32>
    %220 = arith.select %213, %214, %219 : vector<2x128xi1>, vector<2x128xf32>
    %221 = vector.extract_strided_slice %220 {offsets = [0, 0], sizes = [2, 32], strides = [1, 1]} : vector<2x128xf32> to vector<2x32xf32>
    %222 = vector.extract_strided_slice %220 {offsets = [0, 32], sizes = [2, 32], strides = [1, 1]} : vector<2x128xf32> to vector<2x32xf32>
    %223 = vector.extract_strided_slice %220 {offsets = [0, 64], sizes = [2, 32], strides = [1, 1]} : vector<2x128xf32> to vector<2x32xf32>
    %224 = vector.extract_strided_slice %220 {offsets = [0, 96], sizes = [2, 32], strides = [1, 1]} : vector<2x128xf32> to vector<2x32xf32>
    %225 = arith.mulf %222, %201 : vector<2x32xf32>
    %226 = arith.mulf %221, %223 : vector<2x32xf32>
    %227 = arith.addf %225, %226 : vector<2x32xf32>
    %228 = math.tanh %227 : vector<2x32xf32>
    %229 = arith.mulf %224, %228 : vector<2x32xf32>
    %c14 = arith.constant 14 : index
    %c0_59 = arith.constant 0 : index
    %230 = vector.load %arg21[%c14, %c0_59] : memref<16x32xf32, #tpu.memory_space<vmem>>, vector<2x32xf32>
    tpu.vector_store %arg21[%c14, %c0_59], %229 {strides = array<i32>} : memref<16x32xf32, #tpu.memory_space<vmem>>, vector<2x32xf32>,
    %c0_60 = arith.constant 0 : index
    %c0_61 = arith.constant 0 : index
    %231 = vector.load %arg8[%c0_60, %c0_61] : memref<32x128xf32, #tpu.memory_space<vmem>>, vector<32x128xf32>
    %c1 = arith.constant 1 : index
    %c0_62 = arith.constant 0 : index
    %c0_63 = arith.constant 0 : index
    %232 = vector.load %arg2[%c1, %c0_62, %c0_63] : memref<4x2x32xf32, #tpu.memory_space<vmem>>, vector<1x2x32xf32>
    %233 = vector.shape_cast %232 : vector<1x2x32xf32> to vector<2x32xf32>
    %c1_64 = arith.constant 1 : index
    %c0_65 = arith.constant 0 : index
    %c0_66 = arith.constant 0 : index
    %234 = vector.load %arg3[%c1_64, %c0_65, %c0_66] : memref<4x2x32xf32, #tpu.memory_space<vmem>>, vector<1x2x32xf32>
    %235 = vector.shape_cast %234 : vector<1x2x32xf32> to vector<2x32xf32>
    %236 = vector.extract_strided_slice %17 {offsets = [14, 0], sizes = [2, 128], strides = [1, 1]} : vector<16x128xf32> to vector<2x128xf32>
    %cst_67 = arith.constant dense<0.000000e+00> : vector<2x128xf32>
    %237 = tpu.matmul %233, %231, %cst_67 {dimension_numbers = #tpu.dot_dimension_numbers<[1], [0], [0], [1], [0, 0, 1, 1], [], []>} : vector<2x32xf32>, vector<32x128xf32>, vector<2x128xf32> -> vector<2x128xf32>
    %238 = arith.addf %236, %237 : vector<2x128xf32>
    %239 = tpu.iota {dimensions = array<i32: 1>} : vector<2x128xi32>
    %c64_i32_68 = arith.constant 64 : i32
    %240 = vector.broadcast %c64_i32_68 : i32 to vector<2x128xi32>
    %241 = arith.cmpi sge, %239, %240 : vector<2x128xi32>
    %c96_i32_69 = arith.constant 96 : i32
    %242 = vector.broadcast %c96_i32_69 : i32 to vector<2x128xi32>
    %243 = arith.cmpi slt, %239, %242 : vector<2x128xi32>
    %244 = arith.andi %241, %243 : vector<2x128xi1>
    %245 = math.tanh %238 : vector<2x128xf32>
    %246 = arith.negf %238 : vector<2x128xf32>
    %247 = math.exp %246 : vector<2x128xf32>
    %cst_70 = arith.constant 1.000000e+00 : f32
    %248 = vector.broadcast %cst_70 : f32 to vector<2x128xf32>
    %249 = arith.addf %248, %247 : vector<2x128xf32>
    %250 = arith.divf %248, %249 : vector<2x128xf32>
    %251 = arith.select %244, %245, %250 : vector<2x128xi1>, vector<2x128xf32>
    %252 = vector.extract_strided_slice %251 {offsets = [0, 0], sizes = [2, 32], strides = [1, 1]} : vector<2x128xf32> to vector<2x32xf32>
    %253 = vector.extract_strided_slice %251 {offsets = [0, 32], sizes = [2, 32], strides = [1, 1]} : vector<2x128xf32> to vector<2x32xf32>
    %254 = vector.extract_strided_slice %251 {offsets = [0, 64], sizes = [2, 32], strides = [1, 1]} : vector<2x128xf32> to vector<2x32xf32>
    %255 = vector.extract_strided_slice %251 {offsets = [0, 96], sizes = [2, 32], strides = [1, 1]} : vector<2x128xf32> to vector<2x32xf32>
    %256 = arith.mulf %253, %235 : vector<2x32xf32>
    %257 = arith.mulf %252, %254 : vector<2x32xf32>
    %258 = arith.addf %256, %257 : vector<2x32xf32>
    %259 = math.tanh %258 : vector<2x32xf32>
    %260 = arith.mulf %255, %259 : vector<2x32xf32>
    %c14_71 = arith.constant 14 : index
    %c0_72 = arith.constant 0 : index
    %261 = vector.load %arg22[%c14_71, %c0_72] : memref<16x32xf32, #tpu.memory_space<vmem>>, vector<2x32xf32>
    tpu.vector_store %arg22[%c14_71, %c0_72], %260 {strides = array<i32>} : memref<16x32xf32, #tpu.memory_space<vmem>>, vector<2x32xf32>,
    %262 = vector.extract_strided_slice %17 {offsets = [12, 0], sizes = [2, 128], strides = [1, 1]} : vector<16x128xf32> to vector<2x128xf32>
    %cst_73 = arith.constant dense<0.000000e+00> : vector<2x128xf32>
    %263 = tpu.matmul %260, %231, %cst_73 {dimension_numbers = #tpu.dot_dimension_numbers<[1], [0], [0], [1], [0, 0, 1, 1], [], []>} : vector<2x32xf32>, vector<32x128xf32>, vector<2x128xf32> -> vector<2x128xf32>
    %264 = arith.addf %262, %263 : vector<2x128xf32>
    %265 = tpu.iota {dimensions = array<i32: 1>} : vector<2x128xi32>
    %c64_i32_74 = arith.constant 64 : i32
    %266 = vector.broadcast %c64_i32_74 : i32 to vector<2x128xi32>
    %267 = arith.cmpi sge, %265, %266 : vector<2x128xi32>
    %c96_i32_75 = arith.constant 96 : i32
    %268 = vector.broadcast %c96_i32_75 : i32 to vector<2x128xi32>
    %269 = arith.cmpi slt, %265, %268 : vector<2x128xi32>
    %270 = arith.andi %267, %269 : vector<2x128xi1>
    %271 = math.tanh %264 : vector<2x128xf32>
    %272 = arith.negf %264 : vector<2x128xf32>
    %273 = math.exp %272 : vector<2x128xf32>
    %cst_76 = arith.constant 1.000000e+00 : f32
    %274 = vector.broadcast %cst_76 : f32 to vector<2x128xf32>
    %275 = arith.addf %274, %273 : vector<2x128xf32>
    %276 = arith.divf %274, %275 : vector<2x128xf32>
    %277 = arith.select %270, %271, %276 : vector<2x128xi1>, vector<2x128xf32>
    %278 = vector.extract_strided_slice %277 {offsets = [0, 0], sizes = [2, 32], strides = [1, 1]} : vector<2x128xf32> to vector<2x32xf32>
    %279 = vector.extract_strided_slice %277 {offsets = [0, 32], sizes = [2, 32], strides = [1, 1]} : vector<2x128xf32> to vector<2x32xf32>
    %280 = vector.extract_strided_slice %277 {offsets = [0, 64], sizes = [2, 32], strides = [1, 1]} : vector<2x128xf32> to vector<2x32xf32>
    %281 = vector.extract_strided_slice %277 {offsets = [0, 96], sizes = [2, 32], strides = [1, 1]} : vector<2x128xf32> to vector<2x32xf32>
    %282 = arith.mulf %279, %258 : vector<2x32xf32>
    %283 = arith.mulf %278, %280 : vector<2x32xf32>
    %284 = arith.addf %282, %283 : vector<2x32xf32>
    %285 = math.tanh %284 : vector<2x32xf32>
    %286 = arith.mulf %281, %285 : vector<2x32xf32>
    %c12_77 = arith.constant 12 : index
    %c0_78 = arith.constant 0 : index
    %287 = vector.load %arg22[%c12_77, %c0_78] : memref<16x32xf32, #tpu.memory_space<vmem>>, vector<2x32xf32>
    tpu.vector_store %arg22[%c12_77, %c0_78], %286 {strides = array<i32>} : memref<16x32xf32, #tpu.memory_space<vmem>>, vector<2x32xf32>,
    %288 = vector.extract_strided_slice %17 {offsets = [10, 0], sizes = [2, 128], strides = [1, 1]} : vector<16x128xf32> to vector<2x128xf32>
    %cst_79 = arith.constant dense<0.000000e+00> : vector<2x128xf32>
    %289 = tpu.matmul %286, %231, %cst_79 {dimension_numbers = #tpu.dot_dimension_numbers<[1], [0], [0], [1], [0, 0, 1, 1], [], []>} : vector<2x32xf32>, vector<32x128xf32>, vector<2x128xf32> -> vector<2x128xf32>
    %290 = arith.addf %288, %289 : vector<2x128xf32>
    %291 = tpu.iota {dimensions = array<i32: 1>} : vector<2x128xi32>
    %c64_i32_80 = arith.constant 64 : i32
    %292 = vector.broadcast %c64_i32_80 : i32 to vector<2x128xi32>
    %293 = arith.cmpi sge, %291, %292 : vector<2x128xi32>
    %c96_i32_81 = arith.constant 96 : i32
    %294 = vector.broadcast %c96_i32_81 : i32 to vector<2x128xi32>
    %295 = arith.cmpi slt, %291, %294 : vector<2x128xi32>
    %296 = arith.andi %293, %295 : vector<2x128xi1>
    %297 = math.tanh %290 : vector<2x128xf32>
    %298 = arith.negf %290 : vector<2x128xf32>
    %299 = math.exp %298 : vector<2x128xf32>
    %cst_82 = arith.constant 1.000000e+00 : f32
    %300 = vector.broadcast %cst_82 : f32 to vector<2x128xf32>
    %301 = arith.addf %300, %299 : vector<2x128xf32>
    %302 = arith.divf %300, %301 : vector<2x128xf32>
    %303 = arith.select %296, %297, %302 : vector<2x128xi1>, vector<2x128xf32>
    %304 = vector.extract_strided_slice %303 {offsets = [0, 0], sizes = [2, 32], strides = [1, 1]} : vector<2x128xf32> to vector<2x32xf32>
    %305 = vector.extract_strided_slice %303 {offsets = [0, 32], sizes = [2, 32], strides = [1, 1]} : vector<2x128xf32> to vector<2x32xf32>
    %306 = vector.extract_strided_slice %303 {offsets = [0, 64], sizes = [2, 32], strides = [1, 1]} : vector<2x128xf32> to vector<2x32xf32>
    %307 = vector.extract_strided_slice %303 {offsets = [0, 96], sizes = [2, 32], strides = [1, 1]} : vector<2x128xf32> to vector<2x32xf32>
    %308 = arith.mulf %305, %284 : vector<2x32xf32>
    %309 = arith.mulf %304, %306 : vector<2x32xf32>
    %310 = arith.addf %308, %309 : vector<2x32xf32>
    %311 = math.tanh %310 : vector<2x32xf32>
    %312 = arith.mulf %307, %311 : vector<2x32xf32>
    %c10_83 = arith.constant 10 : index
    %c0_84 = arith.constant 0 : index
    %313 = vector.load %arg22[%c10_83, %c0_84] : memref<16x32xf32, #tpu.memory_space<vmem>>, vector<2x32xf32>
    tpu.vector_store %arg22[%c10_83, %c0_84], %312 {strides = array<i32>} : memref<16x32xf32, #tpu.memory_space<vmem>>, vector<2x32xf32>,
    %314 = vector.extract_strided_slice %17 {offsets = [8, 0], sizes = [2, 128], strides = [1, 1]} : vector<16x128xf32> to vector<2x128xf32>
    %cst_85 = arith.constant dense<0.000000e+00> : vector<2x128xf32>
    %315 = tpu.matmul %312, %231, %cst_85 {dimension_numbers = #tpu.dot_dimension_numbers<[1], [0], [0], [1], [0, 0, 1, 1], [], []>} : vector<2x32xf32>, vector<32x128xf32>, vector<2x128xf32> -> vector<2x128xf32>
    %316 = arith.addf %314, %315 : vector<2x128xf32>
    %317 = tpu.iota {dimensions = array<i32: 1>} : vector<2x128xi32>
    %c64_i32_86 = arith.constant 64 : i32
    %318 = vector.broadcast %c64_i32_86 : i32 to vector<2x128xi32>
    %319 = arith.cmpi sge, %317, %318 : vector<2x128xi32>
    %c96_i32_87 = arith.constant 96 : i32
    %320 = vector.broadcast %c96_i32_87 : i32 to vector<2x128xi32>
    %321 = arith.cmpi slt, %317, %320 : vector<2x128xi32>
    %322 = arith.andi %319, %321 : vector<2x128xi1>
    %323 = math.tanh %316 : vector<2x128xf32>
    %324 = arith.negf %316 : vector<2x128xf32>
    %325 = math.exp %324 : vector<2x128xf32>
    %cst_88 = arith.constant 1.000000e+00 : f32
    %326 = vector.broadcast %cst_88 : f32 to vector<2x128xf32>
    %327 = arith.addf %326, %325 : vector<2x128xf32>
    %328 = arith.divf %326, %327 : vector<2x128xf32>
    %329 = arith.select %322, %323, %328 : vector<2x128xi1>, vector<2x128xf32>
    %330 = vector.extract_strided_slice %329 {offsets = [0, 0], sizes = [2, 32], strides = [1, 1]} : vector<2x128xf32> to vector<2x32xf32>
    %331 = vector.extract_strided_slice %329 {offsets = [0, 32], sizes = [2, 32], strides = [1, 1]} : vector<2x128xf32> to vector<2x32xf32>
    %332 = vector.extract_strided_slice %329 {offsets = [0, 64], sizes = [2, 32], strides = [1, 1]} : vector<2x128xf32> to vector<2x32xf32>
    %333 = vector.extract_strided_slice %329 {offsets = [0, 96], sizes = [2, 32], strides = [1, 1]} : vector<2x128xf32> to vector<2x32xf32>
    %334 = arith.mulf %331, %310 : vector<2x32xf32>
    %335 = arith.mulf %330, %332 : vector<2x32xf32>
    %336 = arith.addf %334, %335 : vector<2x32xf32>
    %337 = math.tanh %336 : vector<2x32xf32>
    %338 = arith.mulf %333, %337 : vector<2x32xf32>
    %c8_89 = arith.constant 8 : index
    %c0_90 = arith.constant 0 : index
    %339 = vector.load %arg22[%c8_89, %c0_90] : memref<16x32xf32, #tpu.memory_space<vmem>>, vector<2x32xf32>
    tpu.vector_store %arg22[%c8_89, %c0_90], %338 {strides = array<i32>} : memref<16x32xf32, #tpu.memory_space<vmem>>, vector<2x32xf32>,
    %340 = vector.extract_strided_slice %17 {offsets = [6, 0], sizes = [2, 128], strides = [1, 1]} : vector<16x128xf32> to vector<2x128xf32>
    %cst_91 = arith.constant dense<0.000000e+00> : vector<2x128xf32>
    %341 = tpu.matmul %338, %231, %cst_91 {dimension_numbers = #tpu.dot_dimension_numbers<[1], [0], [0], [1], [0, 0, 1, 1], [], []>} : vector<2x32xf32>, vector<32x128xf32>, vector<2x128xf32> -> vector<2x128xf32>
    %342 = arith.addf %340, %341 : vector<2x128xf32>
    %343 = tpu.iota {dimensions = array<i32: 1>} : vector<2x128xi32>
    %c64_i32_92 = arith.constant 64 : i32
    %344 = vector.broadcast %c64_i32_92 : i32 to vector<2x128xi32>
    %345 = arith.cmpi sge, %343, %344 : vector<2x128xi32>
    %c96_i32_93 = arith.constant 96 : i32
    %346 = vector.broadcast %c96_i32_93 : i32 to vector<2x128xi32>
    %347 = arith.cmpi slt, %343, %346 : vector<2x128xi32>
    %348 = arith.andi %345, %347 : vector<2x128xi1>
    %349 = math.tanh %342 : vector<2x128xf32>
    %350 = arith.negf %342 : vector<2x128xf32>
    %351 = math.exp %350 : vector<2x128xf32>
    %cst_94 = arith.constant 1.000000e+00 : f32
    %352 = vector.broadcast %cst_94 : f32 to vector<2x128xf32>
    %353 = arith.addf %352, %351 : vector<2x128xf32>
    %354 = arith.divf %352, %353 : vector<2x128xf32>
    %355 = arith.select %348, %349, %354 : vector<2x128xi1>, vector<2x128xf32>
    %356 = vector.extract_strided_slice %355 {offsets = [0, 0], sizes = [2, 32], strides = [1, 1]} : vector<2x128xf32> to vector<2x32xf32>
    %357 = vector.extract_strided_slice %355 {offsets = [0, 32], sizes = [2, 32], strides = [1, 1]} : vector<2x128xf32> to vector<2x32xf32>
    %358 = vector.extract_strided_slice %355 {offsets = [0, 64], sizes = [2, 32], strides = [1, 1]} : vector<2x128xf32> to vector<2x32xf32>
    %359 = vector.extract_strided_slice %355 {offsets = [0, 96], sizes = [2, 32], strides = [1, 1]} : vector<2x128xf32> to vector<2x32xf32>
    %360 = arith.mulf %357, %336 : vector<2x32xf32>
    %361 = arith.mulf %356, %358 : vector<2x32xf32>
    %362 = arith.addf %360, %361 : vector<2x32xf32>
    %363 = math.tanh %362 : vector<2x32xf32>
    %364 = arith.mulf %359, %363 : vector<2x32xf32>
    %c6_95 = arith.constant 6 : index
    %c0_96 = arith.constant 0 : index
    %365 = vector.load %arg22[%c6_95, %c0_96] : memref<16x32xf32, #tpu.memory_space<vmem>>, vector<2x32xf32>
    tpu.vector_store %arg22[%c6_95, %c0_96], %364 {strides = array<i32>} : memref<16x32xf32, #tpu.memory_space<vmem>>, vector<2x32xf32>,
    %366 = vector.extract_strided_slice %17 {offsets = [4, 0], sizes = [2, 128], strides = [1, 1]} : vector<16x128xf32> to vector<2x128xf32>
    %cst_97 = arith.constant dense<0.000000e+00> : vector<2x128xf32>
    %367 = tpu.matmul %364, %231, %cst_97 {dimension_numbers = #tpu.dot_dimension_numbers<[1], [0], [0], [1], [0, 0, 1, 1], [], []>} : vector<2x32xf32>, vector<32x128xf32>, vector<2x128xf32> -> vector<2x128xf32>
    %368 = arith.addf %366, %367 : vector<2x128xf32>
    %369 = tpu.iota {dimensions = array<i32: 1>} : vector<2x128xi32>
    %c64_i32_98 = arith.constant 64 : i32
    %370 = vector.broadcast %c64_i32_98 : i32 to vector<2x128xi32>
    %371 = arith.cmpi sge, %369, %370 : vector<2x128xi32>
    %c96_i32_99 = arith.constant 96 : i32
    %372 = vector.broadcast %c96_i32_99 : i32 to vector<2x128xi32>
    %373 = arith.cmpi slt, %369, %372 : vector<2x128xi32>
    %374 = arith.andi %371, %373 : vector<2x128xi1>
    %375 = math.tanh %368 : vector<2x128xf32>
    %376 = arith.negf %368 : vector<2x128xf32>
    %377 = math.exp %376 : vector<2x128xf32>
    %cst_100 = arith.constant 1.000000e+00 : f32
    %378 = vector.broadcast %cst_100 : f32 to vector<2x128xf32>
    %379 = arith.addf %378, %377 : vector<2x128xf32>
    %380 = arith.divf %378, %379 : vector<2x128xf32>
    %381 = arith.select %374, %375, %380 : vector<2x128xi1>, vector<2x128xf32>
    %382 = vector.extract_strided_slice %381 {offsets = [0, 0], sizes = [2, 32], strides = [1, 1]} : vector<2x128xf32> to vector<2x32xf32>
    %383 = vector.extract_strided_slice %381 {offsets = [0, 32], sizes = [2, 32], strides = [1, 1]} : vector<2x128xf32> to vector<2x32xf32>
    %384 = vector.extract_strided_slice %381 {offsets = [0, 64], sizes = [2, 32], strides = [1, 1]} : vector<2x128xf32> to vector<2x32xf32>
    %385 = vector.extract_strided_slice %381 {offsets = [0, 96], sizes = [2, 32], strides = [1, 1]} : vector<2x128xf32> to vector<2x32xf32>
    %386 = arith.mulf %383, %362 : vector<2x32xf32>
    %387 = arith.mulf %382, %384 : vector<2x32xf32>
    %388 = arith.addf %386, %387 : vector<2x32xf32>
    %389 = math.tanh %388 : vector<2x32xf32>
    %390 = arith.mulf %385, %389 : vector<2x32xf32>
    %c4_101 = arith.constant 4 : index
    %c0_102 = arith.constant 0 : index
    %391 = vector.load %arg22[%c4_101, %c0_102] : memref<16x32xf32, #tpu.memory_space<vmem>>, vector<2x32xf32>
    tpu.vector_store %arg22[%c4_101, %c0_102], %390 {strides = array<i32>} : memref<16x32xf32, #tpu.memory_space<vmem>>, vector<2x32xf32>,
    %392 = vector.extract_strided_slice %17 {offsets = [2, 0], sizes = [2, 128], strides = [1, 1]} : vector<16x128xf32> to vector<2x128xf32>
    %cst_103 = arith.constant dense<0.000000e+00> : vector<2x128xf32>
    %393 = tpu.matmul %390, %231, %cst_103 {dimension_numbers = #tpu.dot_dimension_numbers<[1], [0], [0], [1], [0, 0, 1, 1], [], []>} : vector<2x32xf32>, vector<32x128xf32>, vector<2x128xf32> -> vector<2x128xf32>
    %394 = arith.addf %392, %393 : vector<2x128xf32>
    %395 = tpu.iota {dimensions = array<i32: 1>} : vector<2x128xi32>
    %c64_i32_104 = arith.constant 64 : i32
    %396 = vector.broadcast %c64_i32_104 : i32 to vector<2x128xi32>
    %397 = arith.cmpi sge, %395, %396 : vector<2x128xi32>
    %c96_i32_105 = arith.constant 96 : i32
    %398 = vector.broadcast %c96_i32_105 : i32 to vector<2x128xi32>
    %399 = arith.cmpi slt, %395, %398 : vector<2x128xi32>
    %400 = arith.andi %397, %399 : vector<2x128xi1>
    %401 = math.tanh %394 : vector<2x128xf32>
    %402 = arith.negf %394 : vector<2x128xf32>
    %403 = math.exp %402 : vector<2x128xf32>
    %cst_106 = arith.constant 1.000000e+00 : f32
    %404 = vector.broadcast %cst_106 : f32 to vector<2x128xf32>
    %405 = arith.addf %404, %403 : vector<2x128xf32>
    %406 = arith.divf %404, %405 : vector<2x128xf32>
    %407 = arith.select %400, %401, %406 : vector<2x128xi1>, vector<2x128xf32>
    %408 = vector.extract_strided_slice %407 {offsets = [0, 0], sizes = [2, 32], strides = [1, 1]} : vector<2x128xf32> to vector<2x32xf32>
    %409 = vector.extract_strided_slice %407 {offsets = [0, 32], sizes = [2, 32], strides = [1, 1]} : vector<2x128xf32> to vector<2x32xf32>
    %410 = vector.extract_strided_slice %407 {offsets = [0, 64], sizes = [2, 32], strides = [1, 1]} : vector<2x128xf32> to vector<2x32xf32>
    %411 = vector.extract_strided_slice %407 {offsets = [0, 96], sizes = [2, 32], strides = [1, 1]} : vector<2x128xf32> to vector<2x32xf32>
    %412 = arith.mulf %409, %388 : vector<2x32xf32>
    %413 = arith.mulf %408, %410 : vector<2x32xf32>
    %414 = arith.addf %412, %413 : vector<2x32xf32>
    %415 = math.tanh %414 : vector<2x32xf32>
    %416 = arith.mulf %411, %415 : vector<2x32xf32>
    %c2_107 = arith.constant 2 : index
    %c0_108 = arith.constant 0 : index
    %417 = vector.load %arg22[%c2_107, %c0_108] : memref<16x32xf32, #tpu.memory_space<vmem>>, vector<2x32xf32>
    tpu.vector_store %arg22[%c2_107, %c0_108], %416 {strides = array<i32>} : memref<16x32xf32, #tpu.memory_space<vmem>>, vector<2x32xf32>,
    %418 = vector.extract_strided_slice %17 {offsets = [0, 0], sizes = [2, 128], strides = [1, 1]} : vector<16x128xf32> to vector<2x128xf32>
    %cst_109 = arith.constant dense<0.000000e+00> : vector<2x128xf32>
    %419 = tpu.matmul %416, %231, %cst_109 {dimension_numbers = #tpu.dot_dimension_numbers<[1], [0], [0], [1], [0, 0, 1, 1], [], []>} : vector<2x32xf32>, vector<32x128xf32>, vector<2x128xf32> -> vector<2x128xf32>
    %420 = arith.addf %418, %419 : vector<2x128xf32>
    %421 = tpu.iota {dimensions = array<i32: 1>} : vector<2x128xi32>
    %c64_i32_110 = arith.constant 64 : i32
    %422 = vector.broadcast %c64_i32_110 : i32 to vector<2x128xi32>
    %423 = arith.cmpi sge, %421, %422 : vector<2x128xi32>
    %c96_i32_111 = arith.constant 96 : i32
    %424 = vector.broadcast %c96_i32_111 : i32 to vector<2x128xi32>
    %425 = arith.cmpi slt, %421, %424 : vector<2x128xi32>
    %426 = arith.andi %423, %425 : vector<2x128xi1>
    %427 = math.tanh %420 : vector<2x128xf32>
    %428 = arith.negf %420 : vector<2x128xf32>
    %429 = math.exp %428 : vector<2x128xf32>
    %cst_112 = arith.constant 1.000000e+00 : f32
    %430 = vector.broadcast %cst_112 : f32 to vector<2x128xf32>
    %431 = arith.addf %430, %429 : vector<2x128xf32>
    %432 = arith.divf %430, %431 : vector<2x128xf32>
    %433 = arith.select %426, %427, %432 : vector<2x128xi1>, vector<2x128xf32>
    %434 = vector.extract_strided_slice %433 {offsets = [0, 0], sizes = [2, 32], strides = [1, 1]} : vector<2x128xf32> to vector<2x32xf32>
    %435 = vector.extract_strided_slice %433 {offsets = [0, 32], sizes = [2, 32], strides = [1, 1]} : vector<2x128xf32> to vector<2x32xf32>
    %436 = vector.extract_strided_slice %433 {offsets = [0, 64], sizes = [2, 32], strides = [1, 1]} : vector<2x128xf32> to vector<2x32xf32>
    %437 = vector.extract_strided_slice %433 {offsets = [0, 96], sizes = [2, 32], strides = [1, 1]} : vector<2x128xf32> to vector<2x32xf32>
    %438 = arith.mulf %435, %414 : vector<2x32xf32>
    %439 = arith.mulf %434, %436 : vector<2x32xf32>
    %440 = arith.addf %438, %439 : vector<2x32xf32>
    %441 = math.tanh %440 : vector<2x32xf32>
    %442 = arith.mulf %437, %441 : vector<2x32xf32>
    %c0_113 = arith.constant 0 : index
    %c0_114 = arith.constant 0 : index
    %443 = vector.load %arg22[%c0_113, %c0_114] : memref<16x32xf32, #tpu.memory_space<vmem>>, vector<2x32xf32>
    tpu.vector_store %arg22[%c0_113, %c0_114], %442 {strides = array<i32>} : memref<16x32xf32, #tpu.memory_space<vmem>>, vector<2x32xf32>,
    %c0_115 = arith.constant 0 : index
    %c0_116 = arith.constant 0 : index
    %444 = vector.load %arg21[%c0_115, %c0_116] : memref<16x32xf32, #tpu.memory_space<vmem>>, vector<16x32xf32>
    %c0_117 = arith.constant 0 : index
    %c0_118 = arith.constant 0 : index
    %445 = vector.load %arg22[%c0_117, %c0_118] : memref<16x32xf32, #tpu.memory_space<vmem>>, vector<16x32xf32>
    %c0_119 = arith.constant 0 : index
    %c0_120 = arith.constant 0 : index
    %446 = vector.load %arg10[%c0_119, %c0_120] : memref<64x128xf32, #tpu.memory_space<vmem>>, vector<64x128xf32>
    %c0_121 = arith.constant 0 : index
    %c0_122 = arith.constant 0 : index
    %447 = vector.load %arg13[%c0_121, %c0_122] : memref<64x128xf32, #tpu.memory_space<vmem>>, vector<64x128xf32>
    %448 = vector.extract_strided_slice %446 {offsets = [0, 0], sizes = [32, 128], strides = [1, 1]} : vector<64x128xf32> to vector<32x128xf32>
    %cst_123 = arith.constant dense<0.000000e+00> : vector<16x128xf32>
    %449 = tpu.matmul %444, %448, %cst_123 {dimension_numbers = #tpu.dot_dimension_numbers<[1], [0], [0], [1], [0, 0, 1, 1], [], []>} : vector<16x32xf32>, vector<32x128xf32>, vector<16x128xf32> -> vector<16x128xf32>
    %450 = vector.extract_strided_slice %446 {offsets = [32, 0], sizes = [32, 128], strides = [1, 1]} : vector<64x128xf32> to vector<32x128xf32>
    %cst_124 = arith.constant dense<0.000000e+00> : vector<16x128xf32>
    %451 = tpu.matmul %445, %450, %cst_124 {dimension_numbers = #tpu.dot_dimension_numbers<[1], [0], [0], [1], [0, 0, 1, 1], [], []>} : vector<16x32xf32>, vector<32x128xf32>, vector<16x128xf32> -> vector<16x128xf32>
    %452 = arith.addf %449, %451 : vector<16x128xf32>
    %c0_125 = arith.constant 0 : index
    %c0_126 = arith.constant 0 : index
    %453 = vector.load %arg12[%c0_125, %c0_126] : memref<1x128xf32, #tpu.memory_space<vmem>>, vector<1x128xf32>
    %454 = vector.broadcast %453 : vector<1x128xf32> to vector<16x128xf32>
    %455 = arith.addf %452, %454 : vector<16x128xf32>
    %456 = vector.extract_strided_slice %447 {offsets = [0, 0], sizes = [32, 128], strides = [1, 1]} : vector<64x128xf32> to vector<32x128xf32>
    %cst_127 = arith.constant dense<0.000000e+00> : vector<16x128xf32>
    %457 = tpu.matmul %444, %456, %cst_127 {dimension_numbers = #tpu.dot_dimension_numbers<[1], [0], [0], [1], [0, 0, 1, 1], [], []>} : vector<16x32xf32>, vector<32x128xf32>, vector<16x128xf32> -> vector<16x128xf32>
    %458 = vector.extract_strided_slice %447 {offsets = [32, 0], sizes = [32, 128], strides = [1, 1]} : vector<64x128xf32> to vector<32x128xf32>
    %cst_128 = arith.constant dense<0.000000e+00> : vector<16x128xf32>
    %459 = tpu.matmul %445, %458, %cst_128 {dimension_numbers = #tpu.dot_dimension_numbers<[1], [0], [0], [1], [0, 0, 1, 1], [], []>} : vector<16x32xf32>, vector<32x128xf32>, vector<16x128xf32> -> vector<16x128xf32>
    %460 = arith.addf %457, %459 : vector<16x128xf32>
    %c0_129 = arith.constant 0 : index
    %c0_130 = arith.constant 0 : index
    %461 = vector.load %arg15[%c0_129, %c0_130] : memref<1x128xf32, #tpu.memory_space<vmem>>, vector<1x128xf32>
    %462 = vector.broadcast %461 : vector<1x128xf32> to vector<16x128xf32>
    %463 = arith.addf %460, %462 : vector<16x128xf32>
    %c0_131 = arith.constant 0 : index
    %c0_132 = arith.constant 0 : index
    %464 = vector.load %arg11[%c0_131, %c0_132] : memref<32x128xf32, #tpu.memory_space<vmem>>, vector<32x128xf32>
    %c2_133 = arith.constant 2 : index
    %c0_134 = arith.constant 0 : index
    %c0_135 = arith.constant 0 : index
    %465 = vector.load %arg2[%c2_133, %c0_134, %c0_135] : memref<4x2x32xf32, #tpu.memory_space<vmem>>, vector<1x2x32xf32>
    %466 = vector.shape_cast %465 : vector<1x2x32xf32> to vector<2x32xf32>
    %c2_136 = arith.constant 2 : index
    %c0_137 = arith.constant 0 : index
    %c0_138 = arith.constant 0 : index
    %467 = vector.load %arg3[%c2_136, %c0_137, %c0_138] : memref<4x2x32xf32, #tpu.memory_space<vmem>>, vector<1x2x32xf32>
    %468 = vector.shape_cast %467 : vector<1x2x32xf32> to vector<2x32xf32>
    %469 = vector.extract_strided_slice %455 {offsets = [0, 0], sizes = [2, 128], strides = [1, 1]} : vector<16x128xf32> to vector<2x128xf32>
    %cst_139 = arith.constant dense<0.000000e+00> : vector<2x128xf32>
    %470 = tpu.matmul %466, %464, %cst_139 {dimension_numbers = #tpu.dot_dimension_numbers<[1], [0], [0], [1], [0, 0, 1, 1], [], []>} : vector<2x32xf32>, vector<32x128xf32>, vector<2x128xf32> -> vector<2x128xf32>
    %471 = arith.addf %469, %470 : vector<2x128xf32>
    %472 = tpu.iota {dimensions = array<i32: 1>} : vector<2x128xi32>
    %c64_i32_140 = arith.constant 64 : i32
    %473 = vector.broadcast %c64_i32_140 : i32 to vector<2x128xi32>
    %474 = arith.cmpi sge, %472, %473 : vector<2x128xi32>
    %c96_i32_141 = arith.constant 96 : i32
    %475 = vector.broadcast %c96_i32_141 : i32 to vector<2x128xi32>
    %476 = arith.cmpi slt, %472, %475 : vector<2x128xi32>
    %477 = arith.andi %474, %476 : vector<2x128xi1>
    %478 = math.tanh %471 : vector<2x128xf32>
    %479 = arith.negf %471 : vector<2x128xf32>
    %480 = math.exp %479 : vector<2x128xf32>
    %cst_142 = arith.constant 1.000000e+00 : f32
    %481 = vector.broadcast %cst_142 : f32 to vector<2x128xf32>
    %482 = arith.addf %481, %480 : vector<2x128xf32>
    %483 = arith.divf %481, %482 : vector<2x128xf32>
    %484 = arith.select %477, %478, %483 : vector<2x128xi1>, vector<2x128xf32>
    %485 = vector.extract_strided_slice %484 {offsets = [0, 0], sizes = [2, 32], strides = [1, 1]} : vector<2x128xf32> to vector<2x32xf32>
    %486 = vector.extract_strided_slice %484 {offsets = [0, 32], sizes = [2, 32], strides = [1, 1]} : vector<2x128xf32> to vector<2x32xf32>
    %487 = vector.extract_strided_slice %484 {offsets = [0, 64], sizes = [2, 32], strides = [1, 1]} : vector<2x128xf32> to vector<2x32xf32>
    %488 = vector.extract_strided_slice %484 {offsets = [0, 96], sizes = [2, 32], strides = [1, 1]} : vector<2x128xf32> to vector<2x32xf32>
    %489 = arith.mulf %486, %468 : vector<2x32xf32>
    %490 = arith.mulf %485, %487 : vector<2x32xf32>
    %491 = arith.addf %489, %490 : vector<2x32xf32>
    %492 = math.tanh %491 : vector<2x32xf32>
    %493 = arith.mulf %488, %492 : vector<2x32xf32>
    %c0_143 = arith.constant 0 : index
    %c0_144 = arith.constant 0 : index
    %494 = vector.load %arg23[%c0_143, %c0_144] : memref<16x32xf32, #tpu.memory_space<vmem>>, vector<2x32xf32>
    tpu.vector_store %arg23[%c0_143, %c0_144], %493 {strides = array<i32>} : memref<16x32xf32, #tpu.memory_space<vmem>>, vector<2x32xf32>,
    %495 = vector.extract_strided_slice %455 {offsets = [2, 0], sizes = [2, 128], strides = [1, 1]} : vector<16x128xf32> to vector<2x128xf32>
    %cst_145 = arith.constant dense<0.000000e+00> : vector<2x128xf32>
    %496 = tpu.matmul %493, %464, %cst_145 {dimension_numbers = #tpu.dot_dimension_numbers<[1], [0], [0], [1], [0, 0, 1, 1], [], []>} : vector<2x32xf32>, vector<32x128xf32>, vector<2x128xf32> -> vector<2x128xf32>
    %497 = arith.addf %495, %496 : vector<2x128xf32>
    %498 = tpu.iota {dimensions = array<i32: 1>} : vector<2x128xi32>
    %c64_i32_146 = arith.constant 64 : i32
    %499 = vector.broadcast %c64_i32_146 : i32 to vector<2x128xi32>
    %500 = arith.cmpi sge, %498, %499 : vector<2x128xi32>
    %c96_i32_147 = arith.constant 96 : i32
    %501 = vector.broadcast %c96_i32_147 : i32 to vector<2x128xi32>
    %502 = arith.cmpi slt, %498, %501 : vector<2x128xi32>
    %503 = arith.andi %500, %502 : vector<2x128xi1>
    %504 = math.tanh %497 : vector<2x128xf32>
    %505 = arith.negf %497 : vector<2x128xf32>
    %506 = math.exp %505 : vector<2x128xf32>
    %cst_148 = arith.constant 1.000000e+00 : f32
    %507 = vector.broadcast %cst_148 : f32 to vector<2x128xf32>
    %508 = arith.addf %507, %506 : vector<2x128xf32>
    %509 = arith.divf %507, %508 : vector<2x128xf32>
    %510 = arith.select %503, %504, %509 : vector<2x128xi1>, vector<2x128xf32>
    %511 = vector.extract_strided_slice %510 {offsets = [0, 0], sizes = [2, 32], strides = [1, 1]} : vector<2x128xf32> to vector<2x32xf32>
    %512 = vector.extract_strided_slice %510 {offsets = [0, 32], sizes = [2, 32], strides = [1, 1]} : vector<2x128xf32> to vector<2x32xf32>
    %513 = vector.extract_strided_slice %510 {offsets = [0, 64], sizes = [2, 32], strides = [1, 1]} : vector<2x128xf32> to vector<2x32xf32>
    %514 = vector.extract_strided_slice %510 {offsets = [0, 96], sizes = [2, 32], strides = [1, 1]} : vector<2x128xf32> to vector<2x32xf32>
    %515 = arith.mulf %512, %491 : vector<2x32xf32>
    %516 = arith.mulf %511, %513 : vector<2x32xf32>
    %517 = arith.addf %515, %516 : vector<2x32xf32>
    %518 = math.tanh %517 : vector<2x32xf32>
    %519 = arith.mulf %514, %518 : vector<2x32xf32>
    %c2_149 = arith.constant 2 : index
    %c0_150 = arith.constant 0 : index
    %520 = vector.load %arg23[%c2_149, %c0_150] : memref<16x32xf32, #tpu.memory_space<vmem>>, vector<2x32xf32>
    tpu.vector_store %arg23[%c2_149, %c0_150], %519 {strides = array<i32>} : memref<16x32xf32, #tpu.memory_space<vmem>>, vector<2x32xf32>,
    %521 = vector.extract_strided_slice %455 {offsets = [4, 0], sizes = [2, 128], strides = [1, 1]} : vector<16x128xf32> to vector<2x128xf32>
    %cst_151 = arith.constant dense<0.000000e+00> : vector<2x128xf32>
    %522 = tpu.matmul %519, %464, %cst_151 {dimension_numbers = #tpu.dot_dimension_numbers<[1], [0], [0], [1], [0, 0, 1, 1], [], []>} : vector<2x32xf32>, vector<32x128xf32>, vector<2x128xf32> -> vector<2x128xf32>
    %523 = arith.addf %521, %522 : vector<2x128xf32>
    %524 = tpu.iota {dimensions = array<i32: 1>} : vector<2x128xi32>
    %c64_i32_152 = arith.constant 64 : i32
    %525 = vector.broadcast %c64_i32_152 : i32 to vector<2x128xi32>
    %526 = arith.cmpi sge, %524, %525 : vector<2x128xi32>
    %c96_i32_153 = arith.constant 96 : i32
    %527 = vector.broadcast %c96_i32_153 : i32 to vector<2x128xi32>
    %528 = arith.cmpi slt, %524, %527 : vector<2x128xi32>
    %529 = arith.andi %526, %528 : vector<2x128xi1>
    %530 = math.tanh %523 : vector<2x128xf32>
    %531 = arith.negf %523 : vector<2x128xf32>
    %532 = math.exp %531 : vector<2x128xf32>
    %cst_154 = arith.constant 1.000000e+00 : f32
    %533 = vector.broadcast %cst_154 : f32 to vector<2x128xf32>
    %534 = arith.addf %533, %532 : vector<2x128xf32>
    %535 = arith.divf %533, %534 : vector<2x128xf32>
    %536 = arith.select %529, %530, %535 : vector<2x128xi1>, vector<2x128xf32>
    %537 = vector.extract_strided_slice %536 {offsets = [0, 0], sizes = [2, 32], strides = [1, 1]} : vector<2x128xf32> to vector<2x32xf32>
    %538 = vector.extract_strided_slice %536 {offsets = [0, 32], sizes = [2, 32], strides = [1, 1]} : vector<2x128xf32> to vector<2x32xf32>
    %539 = vector.extract_strided_slice %536 {offsets = [0, 64], sizes = [2, 32], strides = [1, 1]} : vector<2x128xf32> to vector<2x32xf32>
    %540 = vector.extract_strided_slice %536 {offsets = [0, 96], sizes = [2, 32], strides = [1, 1]} : vector<2x128xf32> to vector<2x32xf32>
    %541 = arith.mulf %538, %517 : vector<2x32xf32>
    %542 = arith.mulf %537, %539 : vector<2x32xf32>
    %543 = arith.addf %541, %542 : vector<2x32xf32>
    %544 = math.tanh %543 : vector<2x32xf32>
    %545 = arith.mulf %540, %544 : vector<2x32xf32>
    %c4_155 = arith.constant 4 : index
    %c0_156 = arith.constant 0 : index
    %546 = vector.load %arg23[%c4_155, %c0_156] : memref<16x32xf32, #tpu.memory_space<vmem>>, vector<2x32xf32>
    tpu.vector_store %arg23[%c4_155, %c0_156], %545 {strides = array<i32>} : memref<16x32xf32, #tpu.memory_space<vmem>>, vector<2x32xf32>,
    %547 = vector.extract_strided_slice %455 {offsets = [6, 0], sizes = [2, 128], strides = [1, 1]} : vector<16x128xf32> to vector<2x128xf32>
    %cst_157 = arith.constant dense<0.000000e+00> : vector<2x128xf32>
    %548 = tpu.matmul %545, %464, %cst_157 {dimension_numbers = #tpu.dot_dimension_numbers<[1], [0], [0], [1], [0, 0, 1, 1], [], []>} : vector<2x32xf32>, vector<32x128xf32>, vector<2x128xf32> -> vector<2x128xf32>
    %549 = arith.addf %547, %548 : vector<2x128xf32>
    %550 = tpu.iota {dimensions = array<i32: 1>} : vector<2x128xi32>
    %c64_i32_158 = arith.constant 64 : i32
    %551 = vector.broadcast %c64_i32_158 : i32 to vector<2x128xi32>
    %552 = arith.cmpi sge, %550, %551 : vector<2x128xi32>
    %c96_i32_159 = arith.constant 96 : i32
    %553 = vector.broadcast %c96_i32_159 : i32 to vector<2x128xi32>
    %554 = arith.cmpi slt, %550, %553 : vector<2x128xi32>
    %555 = arith.andi %552, %554 : vector<2x128xi1>
    %556 = math.tanh %549 : vector<2x128xf32>
    %557 = arith.negf %549 : vector<2x128xf32>
    %558 = math.exp %557 : vector<2x128xf32>
    %cst_160 = arith.constant 1.000000e+00 : f32
    %559 = vector.broadcast %cst_160 : f32 to vector<2x128xf32>
    %560 = arith.addf %559, %558 : vector<2x128xf32>
    %561 = arith.divf %559, %560 : vector<2x128xf32>
    %562 = arith.select %555, %556, %561 : vector<2x128xi1>, vector<2x128xf32>
    %563 = vector.extract_strided_slice %562 {offsets = [0, 0], sizes = [2, 32], strides = [1, 1]} : vector<2x128xf32> to vector<2x32xf32>
    %564 = vector.extract_strided_slice %562 {offsets = [0, 32], sizes = [2, 32], strides = [1, 1]} : vector<2x128xf32> to vector<2x32xf32>
    %565 = vector.extract_strided_slice %562 {offsets = [0, 64], sizes = [2, 32], strides = [1, 1]} : vector<2x128xf32> to vector<2x32xf32>
    %566 = vector.extract_strided_slice %562 {offsets = [0, 96], sizes = [2, 32], strides = [1, 1]} : vector<2x128xf32> to vector<2x32xf32>
    %567 = arith.mulf %564, %543 : vector<2x32xf32>
    %568 = arith.mulf %563, %565 : vector<2x32xf32>
    %569 = arith.addf %567, %568 : vector<2x32xf32>
    %570 = math.tanh %569 : vector<2x32xf32>
    %571 = arith.mulf %566, %570 : vector<2x32xf32>
    %c6_161 = arith.constant 6 : index
    %c0_162 = arith.constant 0 : index
    %572 = vector.load %arg23[%c6_161, %c0_162] : memref<16x32xf32, #tpu.memory_space<vmem>>, vector<2x32xf32>
    tpu.vector_store %arg23[%c6_161, %c0_162], %571 {strides = array<i32>} : memref<16x32xf32, #tpu.memory_space<vmem>>, vector<2x32xf32>,
    %573 = vector.extract_strided_slice %455 {offsets = [8, 0], sizes = [2, 128], strides = [1, 1]} : vector<16x128xf32> to vector<2x128xf32>
    %cst_163 = arith.constant dense<0.000000e+00> : vector<2x128xf32>
    %574 = tpu.matmul %571, %464, %cst_163 {dimension_numbers = #tpu.dot_dimension_numbers<[1], [0], [0], [1], [0, 0, 1, 1], [], []>} : vector<2x32xf32>, vector<32x128xf32>, vector<2x128xf32> -> vector<2x128xf32>
    %575 = arith.addf %573, %574 : vector<2x128xf32>
    %576 = tpu.iota {dimensions = array<i32: 1>} : vector<2x128xi32>
    %c64_i32_164 = arith.constant 64 : i32
    %577 = vector.broadcast %c64_i32_164 : i32 to vector<2x128xi32>
    %578 = arith.cmpi sge, %576, %577 : vector<2x128xi32>
    %c96_i32_165 = arith.constant 96 : i32
    %579 = vector.broadcast %c96_i32_165 : i32 to vector<2x128xi32>
    %580 = arith.cmpi slt, %576, %579 : vector<2x128xi32>
    %581 = arith.andi %578, %580 : vector<2x128xi1>
    %582 = math.tanh %575 : vector<2x128xf32>
    %583 = arith.negf %575 : vector<2x128xf32>
    %584 = math.exp %583 : vector<2x128xf32>
    %cst_166 = arith.constant 1.000000e+00 : f32
    %585 = vector.broadcast %cst_166 : f32 to vector<2x128xf32>
    %586 = arith.addf %585, %584 : vector<2x128xf32>
    %587 = arith.divf %585, %586 : vector<2x128xf32>
    %588 = arith.select %581, %582, %587 : vector<2x128xi1>, vector<2x128xf32>
    %589 = vector.extract_strided_slice %588 {offsets = [0, 0], sizes = [2, 32], strides = [1, 1]} : vector<2x128xf32> to vector<2x32xf32>
    %590 = vector.extract_strided_slice %588 {offsets = [0, 32], sizes = [2, 32], strides = [1, 1]} : vector<2x128xf32> to vector<2x32xf32>
    %591 = vector.extract_strided_slice %588 {offsets = [0, 64], sizes = [2, 32], strides = [1, 1]} : vector<2x128xf32> to vector<2x32xf32>
    %592 = vector.extract_strided_slice %588 {offsets = [0, 96], sizes = [2, 32], strides = [1, 1]} : vector<2x128xf32> to vector<2x32xf32>
    %593 = arith.mulf %590, %569 : vector<2x32xf32>
    %594 = arith.mulf %589, %591 : vector<2x32xf32>
    %595 = arith.addf %593, %594 : vector<2x32xf32>
    %596 = math.tanh %595 : vector<2x32xf32>
    %597 = arith.mulf %592, %596 : vector<2x32xf32>
    %c8_167 = arith.constant 8 : index
    %c0_168 = arith.constant 0 : index
    %598 = vector.load %arg23[%c8_167, %c0_168] : memref<16x32xf32, #tpu.memory_space<vmem>>, vector<2x32xf32>
    tpu.vector_store %arg23[%c8_167, %c0_168], %597 {strides = array<i32>} : memref<16x32xf32, #tpu.memory_space<vmem>>, vector<2x32xf32>,
    %599 = vector.extract_strided_slice %455 {offsets = [10, 0], sizes = [2, 128], strides = [1, 1]} : vector<16x128xf32> to vector<2x128xf32>
    %cst_169 = arith.constant dense<0.000000e+00> : vector<2x128xf32>
    %600 = tpu.matmul %597, %464, %cst_169 {dimension_numbers = #tpu.dot_dimension_numbers<[1], [0], [0], [1], [0, 0, 1, 1], [], []>} : vector<2x32xf32>, vector<32x128xf32>, vector<2x128xf32> -> vector<2x128xf32>
    %601 = arith.addf %599, %600 : vector<2x128xf32>
    %602 = tpu.iota {dimensions = array<i32: 1>} : vector<2x128xi32>
    %c64_i32_170 = arith.constant 64 : i32
    %603 = vector.broadcast %c64_i32_170 : i32 to vector<2x128xi32>
    %604 = arith.cmpi sge, %602, %603 : vector<2x128xi32>
    %c96_i32_171 = arith.constant 96 : i32
    %605 = vector.broadcast %c96_i32_171 : i32 to vector<2x128xi32>
    %606 = arith.cmpi slt, %602, %605 : vector<2x128xi32>
    %607 = arith.andi %604, %606 : vector<2x128xi1>
    %608 = math.tanh %601 : vector<2x128xf32>
    %609 = arith.negf %601 : vector<2x128xf32>
    %610 = math.exp %609 : vector<2x128xf32>
    %cst_172 = arith.constant 1.000000e+00 : f32
    %611 = vector.broadcast %cst_172 : f32 to vector<2x128xf32>
    %612 = arith.addf %611, %610 : vector<2x128xf32>
    %613 = arith.divf %611, %612 : vector<2x128xf32>
    %614 = arith.select %607, %608, %613 : vector<2x128xi1>, vector<2x128xf32>
    %615 = vector.extract_strided_slice %614 {offsets = [0, 0], sizes = [2, 32], strides = [1, 1]} : vector<2x128xf32> to vector<2x32xf32>
    %616 = vector.extract_strided_slice %614 {offsets = [0, 32], sizes = [2, 32], strides = [1, 1]} : vector<2x128xf32> to vector<2x32xf32>
    %617 = vector.extract_strided_slice %614 {offsets = [0, 64], sizes = [2, 32], strides = [1, 1]} : vector<2x128xf32> to vector<2x32xf32>
    %618 = vector.extract_strided_slice %614 {offsets = [0, 96], sizes = [2, 32], strides = [1, 1]} : vector<2x128xf32> to vector<2x32xf32>
    %619 = arith.mulf %616, %595 : vector<2x32xf32>
    %620 = arith.mulf %615, %617 : vector<2x32xf32>
    %621 = arith.addf %619, %620 : vector<2x32xf32>
    %622 = math.tanh %621 : vector<2x32xf32>
    %623 = arith.mulf %618, %622 : vector<2x32xf32>
    %c10_173 = arith.constant 10 : index
    %c0_174 = arith.constant 0 : index
    %624 = vector.load %arg23[%c10_173, %c0_174] : memref<16x32xf32, #tpu.memory_space<vmem>>, vector<2x32xf32>
    tpu.vector_store %arg23[%c10_173, %c0_174], %623 {strides = array<i32>} : memref<16x32xf32, #tpu.memory_space<vmem>>, vector<2x32xf32>,
    %625 = vector.extract_strided_slice %455 {offsets = [12, 0], sizes = [2, 128], strides = [1, 1]} : vector<16x128xf32> to vector<2x128xf32>
    %cst_175 = arith.constant dense<0.000000e+00> : vector<2x128xf32>
    %626 = tpu.matmul %623, %464, %cst_175 {dimension_numbers = #tpu.dot_dimension_numbers<[1], [0], [0], [1], [0, 0, 1, 1], [], []>} : vector<2x32xf32>, vector<32x128xf32>, vector<2x128xf32> -> vector<2x128xf32>
    %627 = arith.addf %625, %626 : vector<2x128xf32>
    %628 = tpu.iota {dimensions = array<i32: 1>} : vector<2x128xi32>
    %c64_i32_176 = arith.constant 64 : i32
    %629 = vector.broadcast %c64_i32_176 : i32 to vector<2x128xi32>
    %630 = arith.cmpi sge, %628, %629 : vector<2x128xi32>
    %c96_i32_177 = arith.constant 96 : i32
    %631 = vector.broadcast %c96_i32_177 : i32 to vector<2x128xi32>
    %632 = arith.cmpi slt, %628, %631 : vector<2x128xi32>
    %633 = arith.andi %630, %632 : vector<2x128xi1>
    %634 = math.tanh %627 : vector<2x128xf32>
    %635 = arith.negf %627 : vector<2x128xf32>
    %636 = math.exp %635 : vector<2x128xf32>
    %cst_178 = arith.constant 1.000000e+00 : f32
    %637 = vector.broadcast %cst_178 : f32 to vector<2x128xf32>
    %638 = arith.addf %637, %636 : vector<2x128xf32>
    %639 = arith.divf %637, %638 : vector<2x128xf32>
    %640 = arith.select %633, %634, %639 : vector<2x128xi1>, vector<2x128xf32>
    %641 = vector.extract_strided_slice %640 {offsets = [0, 0], sizes = [2, 32], strides = [1, 1]} : vector<2x128xf32> to vector<2x32xf32>
    %642 = vector.extract_strided_slice %640 {offsets = [0, 32], sizes = [2, 32], strides = [1, 1]} : vector<2x128xf32> to vector<2x32xf32>
    %643 = vector.extract_strided_slice %640 {offsets = [0, 64], sizes = [2, 32], strides = [1, 1]} : vector<2x128xf32> to vector<2x32xf32>
    %644 = vector.extract_strided_slice %640 {offsets = [0, 96], sizes = [2, 32], strides = [1, 1]} : vector<2x128xf32> to vector<2x32xf32>
    %645 = arith.mulf %642, %621 : vector<2x32xf32>
    %646 = arith.mulf %641, %643 : vector<2x32xf32>
    %647 = arith.addf %645, %646 : vector<2x32xf32>
    %648 = math.tanh %647 : vector<2x32xf32>
    %649 = arith.mulf %644, %648 : vector<2x32xf32>
    %c12_179 = arith.constant 12 : index
    %c0_180 = arith.constant 0 : index
    %650 = vector.load %arg23[%c12_179, %c0_180] : memref<16x32xf32, #tpu.memory_space<vmem>>, vector<2x32xf32>
    tpu.vector_store %arg23[%c12_179, %c0_180], %649 {strides = array<i32>} : memref<16x32xf32, #tpu.memory_space<vmem>>, vector<2x32xf32>,
    %651 = vector.extract_strided_slice %455 {offsets = [14, 0], sizes = [2, 128], strides = [1, 1]} : vector<16x128xf32> to vector<2x128xf32>
    %cst_181 = arith.constant dense<0.000000e+00> : vector<2x128xf32>
    %652 = tpu.matmul %649, %464, %cst_181 {dimension_numbers = #tpu.dot_dimension_numbers<[1], [0], [0], [1], [0, 0, 1, 1], [], []>} : vector<2x32xf32>, vector<32x128xf32>, vector<2x128xf32> -> vector<2x128xf32>
    %653 = arith.addf %651, %652 : vector<2x128xf32>
    %654 = tpu.iota {dimensions = array<i32: 1>} : vector<2x128xi32>
    %c64_i32_182 = arith.constant 64 : i32
    %655 = vector.broadcast %c64_i32_182 : i32 to vector<2x128xi32>
    %656 = arith.cmpi sge, %654, %655 : vector<2x128xi32>
    %c96_i32_183 = arith.constant 96 : i32
    %657 = vector.broadcast %c96_i32_183 : i32 to vector<2x128xi32>
    %658 = arith.cmpi slt, %654, %657 : vector<2x128xi32>
    %659 = arith.andi %656, %658 : vector<2x128xi1>
    %660 = math.tanh %653 : vector<2x128xf32>
    %661 = arith.negf %653 : vector<2x128xf32>
    %662 = math.exp %661 : vector<2x128xf32>
    %cst_184 = arith.constant 1.000000e+00 : f32
    %663 = vector.broadcast %cst_184 : f32 to vector<2x128xf32>
    %664 = arith.addf %663, %662 : vector<2x128xf32>
    %665 = arith.divf %663, %664 : vector<2x128xf32>
    %666 = arith.select %659, %660, %665 : vector<2x128xi1>, vector<2x128xf32>
    %667 = vector.extract_strided_slice %666 {offsets = [0, 0], sizes = [2, 32], strides = [1, 1]} : vector<2x128xf32> to vector<2x32xf32>
    %668 = vector.extract_strided_slice %666 {offsets = [0, 32], sizes = [2, 32], strides = [1, 1]} : vector<2x128xf32> to vector<2x32xf32>
    %669 = vector.extract_strided_slice %666 {offsets = [0, 64], sizes = [2, 32], strides = [1, 1]} : vector<2x128xf32> to vector<2x32xf32>
    %670 = vector.extract_strided_slice %666 {offsets = [0, 96], sizes = [2, 32], strides = [1, 1]} : vector<2x128xf32> to vector<2x32xf32>
    %671 = arith.mulf %668, %647 : vector<2x32xf32>
    %672 = arith.mulf %667, %669 : vector<2x32xf32>
    %673 = arith.addf %671, %672 : vector<2x32xf32>
    %674 = math.tanh %673 : vector<2x32xf32>
    %675 = arith.mulf %670, %674 : vector<2x32xf32>
    %c14_185 = arith.constant 14 : index
    %c0_186 = arith.constant 0 : index
    %676 = vector.load %arg23[%c14_185, %c0_186] : memref<16x32xf32, #tpu.memory_space<vmem>>, vector<2x32xf32>
    tpu.vector_store %arg23[%c14_185, %c0_186], %675 {strides = array<i32>} : memref<16x32xf32, #tpu.memory_space<vmem>>, vector<2x32xf32>,
    %c0_187 = arith.constant 0 : index
    %c0_188 = arith.constant 0 : index
    %677 = vector.load %arg14[%c0_187, %c0_188] : memref<32x128xf32, #tpu.memory_space<vmem>>, vector<32x128xf32>
    %c3 = arith.constant 3 : index
    %c0_189 = arith.constant 0 : index
    %c0_190 = arith.constant 0 : index
    %678 = vector.load %arg2[%c3, %c0_189, %c0_190] : memref<4x2x32xf32, #tpu.memory_space<vmem>>, vector<1x2x32xf32>
    %679 = vector.shape_cast %678 : vector<1x2x32xf32> to vector<2x32xf32>
    %c3_191 = arith.constant 3 : index
    %c0_192 = arith.constant 0 : index
    %c0_193 = arith.constant 0 : index
    %680 = vector.load %arg3[%c3_191, %c0_192, %c0_193] : memref<4x2x32xf32, #tpu.memory_space<vmem>>, vector<1x2x32xf32>
    %681 = vector.shape_cast %680 : vector<1x2x32xf32> to vector<2x32xf32>
    %682 = vector.extract_strided_slice %463 {offsets = [14, 0], sizes = [2, 128], strides = [1, 1]} : vector<16x128xf32> to vector<2x128xf32>
    %cst_194 = arith.constant dense<0.000000e+00> : vector<2x128xf32>
    %683 = tpu.matmul %679, %677, %cst_194 {dimension_numbers = #tpu.dot_dimension_numbers<[1], [0], [0], [1], [0, 0, 1, 1], [], []>} : vector<2x32xf32>, vector<32x128xf32>, vector<2x128xf32> -> vector<2x128xf32>
    %684 = arith.addf %682, %683 : vector<2x128xf32>
    %685 = tpu.iota {dimensions = array<i32: 1>} : vector<2x128xi32>
    %c64_i32_195 = arith.constant 64 : i32
    %686 = vector.broadcast %c64_i32_195 : i32 to vector<2x128xi32>
    %687 = arith.cmpi sge, %685, %686 : vector<2x128xi32>
    %c96_i32_196 = arith.constant 96 : i32
    %688 = vector.broadcast %c96_i32_196 : i32 to vector<2x128xi32>
    %689 = arith.cmpi slt, %685, %688 : vector<2x128xi32>
    %690 = arith.andi %687, %689 : vector<2x128xi1>
    %691 = math.tanh %684 : vector<2x128xf32>
    %692 = arith.negf %684 : vector<2x128xf32>
    %693 = math.exp %692 : vector<2x128xf32>
    %cst_197 = arith.constant 1.000000e+00 : f32
    %694 = vector.broadcast %cst_197 : f32 to vector<2x128xf32>
    %695 = arith.addf %694, %693 : vector<2x128xf32>
    %696 = arith.divf %694, %695 : vector<2x128xf32>
    %697 = arith.select %690, %691, %696 : vector<2x128xi1>, vector<2x128xf32>
    %698 = vector.extract_strided_slice %697 {offsets = [0, 0], sizes = [2, 32], strides = [1, 1]} : vector<2x128xf32> to vector<2x32xf32>
    %699 = vector.extract_strided_slice %697 {offsets = [0, 32], sizes = [2, 32], strides = [1, 1]} : vector<2x128xf32> to vector<2x32xf32>
    %700 = vector.extract_strided_slice %697 {offsets = [0, 64], sizes = [2, 32], strides = [1, 1]} : vector<2x128xf32> to vector<2x32xf32>
    %701 = vector.extract_strided_slice %697 {offsets = [0, 96], sizes = [2, 32], strides = [1, 1]} : vector<2x128xf32> to vector<2x32xf32>
    %702 = arith.mulf %699, %681 : vector<2x32xf32>
    %703 = arith.mulf %698, %700 : vector<2x32xf32>
    %704 = arith.addf %702, %703 : vector<2x32xf32>
    %705 = math.tanh %704 : vector<2x32xf32>
    %706 = arith.mulf %701, %705 : vector<2x32xf32>
    %c14_198 = arith.constant 14 : index
    %c0_199 = arith.constant 0 : index
    %707 = vector.load %arg24[%c14_198, %c0_199] : memref<16x32xf32, #tpu.memory_space<vmem>>, vector<2x32xf32>
    tpu.vector_store %arg24[%c14_198, %c0_199], %706 {strides = array<i32>} : memref<16x32xf32, #tpu.memory_space<vmem>>, vector<2x32xf32>,
    %708 = vector.extract_strided_slice %463 {offsets = [12, 0], sizes = [2, 128], strides = [1, 1]} : vector<16x128xf32> to vector<2x128xf32>
    %cst_200 = arith.constant dense<0.000000e+00> : vector<2x128xf32>
    %709 = tpu.matmul %706, %677, %cst_200 {dimension_numbers = #tpu.dot_dimension_numbers<[1], [0], [0], [1], [0, 0, 1, 1], [], []>} : vector<2x32xf32>, vector<32x128xf32>, vector<2x128xf32> -> vector<2x128xf32>
    %710 = arith.addf %708, %709 : vector<2x128xf32>
    %711 = tpu.iota {dimensions = array<i32: 1>} : vector<2x128xi32>
    %c64_i32_201 = arith.constant 64 : i32
    %712 = vector.broadcast %c64_i32_201 : i32 to vector<2x128xi32>
    %713 = arith.cmpi sge, %711, %712 : vector<2x128xi32>
    %c96_i32_202 = arith.constant 96 : i32
    %714 = vector.broadcast %c96_i32_202 : i32 to vector<2x128xi32>
    %715 = arith.cmpi slt, %711, %714 : vector<2x128xi32>
    %716 = arith.andi %713, %715 : vector<2x128xi1>
    %717 = math.tanh %710 : vector<2x128xf32>
    %718 = arith.negf %710 : vector<2x128xf32>
    %719 = math.exp %718 : vector<2x128xf32>
    %cst_203 = arith.constant 1.000000e+00 : f32
    %720 = vector.broadcast %cst_203 : f32 to vector<2x128xf32>
    %721 = arith.addf %720, %719 : vector<2x128xf32>
    %722 = arith.divf %720, %721 : vector<2x128xf32>
    %723 = arith.select %716, %717, %722 : vector<2x128xi1>, vector<2x128xf32>
    %724 = vector.extract_strided_slice %723 {offsets = [0, 0], sizes = [2, 32], strides = [1, 1]} : vector<2x128xf32> to vector<2x32xf32>
    %725 = vector.extract_strided_slice %723 {offsets = [0, 32], sizes = [2, 32], strides = [1, 1]} : vector<2x128xf32> to vector<2x32xf32>
    %726 = vector.extract_strided_slice %723 {offsets = [0, 64], sizes = [2, 32], strides = [1, 1]} : vector<2x128xf32> to vector<2x32xf32>
    %727 = vector.extract_strided_slice %723 {offsets = [0, 96], sizes = [2, 32], strides = [1, 1]} : vector<2x128xf32> to vector<2x32xf32>
    %728 = arith.mulf %725, %704 : vector<2x32xf32>
    %729 = arith.mulf %724, %726 : vector<2x32xf32>
    %730 = arith.addf %728, %729 : vector<2x32xf32>
    %731 = math.tanh %730 : vector<2x32xf32>
    %732 = arith.mulf %727, %731 : vector<2x32xf32>
    %c12_204 = arith.constant 12 : index
    %c0_205 = arith.constant 0 : index
    %733 = vector.load %arg24[%c12_204, %c0_205] : memref<16x32xf32, #tpu.memory_space<vmem>>, vector<2x32xf32>
    tpu.vector_store %arg24[%c12_204, %c0_205], %732 {strides = array<i32>} : memref<16x32xf32, #tpu.memory_space<vmem>>, vector<2x32xf32>,
    %734 = vector.extract_strided_slice %463 {offsets = [10, 0], sizes = [2, 128], strides = [1, 1]} : vector<16x128xf32> to vector<2x128xf32>
    %cst_206 = arith.constant dense<0.000000e+00> : vector<2x128xf32>
    %735 = tpu.matmul %732, %677, %cst_206 {dimension_numbers = #tpu.dot_dimension_numbers<[1], [0], [0], [1], [0, 0, 1, 1], [], []>} : vector<2x32xf32>, vector<32x128xf32>, vector<2x128xf32> -> vector<2x128xf32>
    %736 = arith.addf %734, %735 : vector<2x128xf32>
    %737 = tpu.iota {dimensions = array<i32: 1>} : vector<2x128xi32>
    %c64_i32_207 = arith.constant 64 : i32
    %738 = vector.broadcast %c64_i32_207 : i32 to vector<2x128xi32>
    %739 = arith.cmpi sge, %737, %738 : vector<2x128xi32>
    %c96_i32_208 = arith.constant 96 : i32
    %740 = vector.broadcast %c96_i32_208 : i32 to vector<2x128xi32>
    %741 = arith.cmpi slt, %737, %740 : vector<2x128xi32>
    %742 = arith.andi %739, %741 : vector<2x128xi1>
    %743 = math.tanh %736 : vector<2x128xf32>
    %744 = arith.negf %736 : vector<2x128xf32>
    %745 = math.exp %744 : vector<2x128xf32>
    %cst_209 = arith.constant 1.000000e+00 : f32
    %746 = vector.broadcast %cst_209 : f32 to vector<2x128xf32>
    %747 = arith.addf %746, %745 : vector<2x128xf32>
    %748 = arith.divf %746, %747 : vector<2x128xf32>
    %749 = arith.select %742, %743, %748 : vector<2x128xi1>, vector<2x128xf32>
    %750 = vector.extract_strided_slice %749 {offsets = [0, 0], sizes = [2, 32], strides = [1, 1]} : vector<2x128xf32> to vector<2x32xf32>
    %751 = vector.extract_strided_slice %749 {offsets = [0, 32], sizes = [2, 32], strides = [1, 1]} : vector<2x128xf32> to vector<2x32xf32>
    %752 = vector.extract_strided_slice %749 {offsets = [0, 64], sizes = [2, 32], strides = [1, 1]} : vector<2x128xf32> to vector<2x32xf32>
    %753 = vector.extract_strided_slice %749 {offsets = [0, 96], sizes = [2, 32], strides = [1, 1]} : vector<2x128xf32> to vector<2x32xf32>
    %754 = arith.mulf %751, %730 : vector<2x32xf32>
    %755 = arith.mulf %750, %752 : vector<2x32xf32>
    %756 = arith.addf %754, %755 : vector<2x32xf32>
    %757 = math.tanh %756 : vector<2x32xf32>
    %758 = arith.mulf %753, %757 : vector<2x32xf32>
    %c10_210 = arith.constant 10 : index
    %c0_211 = arith.constant 0 : index
    %759 = vector.load %arg24[%c10_210, %c0_211] : memref<16x32xf32, #tpu.memory_space<vmem>>, vector<2x32xf32>
    tpu.vector_store %arg24[%c10_210, %c0_211], %758 {strides = array<i32>} : memref<16x32xf32, #tpu.memory_space<vmem>>, vector<2x32xf32>,
    %760 = vector.extract_strided_slice %463 {offsets = [8, 0], sizes = [2, 128], strides = [1, 1]} : vector<16x128xf32> to vector<2x128xf32>
    %cst_212 = arith.constant dense<0.000000e+00> : vector<2x128xf32>
    %761 = tpu.matmul %758, %677, %cst_212 {dimension_numbers = #tpu.dot_dimension_numbers<[1], [0], [0], [1], [0, 0, 1, 1], [], []>} : vector<2x32xf32>, vector<32x128xf32>, vector<2x128xf32> -> vector<2x128xf32>
    %762 = arith.addf %760, %761 : vector<2x128xf32>
    %763 = tpu.iota {dimensions = array<i32: 1>} : vector<2x128xi32>
    %c64_i32_213 = arith.constant 64 : i32
    %764 = vector.broadcast %c64_i32_213 : i32 to vector<2x128xi32>
    %765 = arith.cmpi sge, %763, %764 : vector<2x128xi32>
    %c96_i32_214 = arith.constant 96 : i32
    %766 = vector.broadcast %c96_i32_214 : i32 to vector<2x128xi32>
    %767 = arith.cmpi slt, %763, %766 : vector<2x128xi32>
    %768 = arith.andi %765, %767 : vector<2x128xi1>
    %769 = math.tanh %762 : vector<2x128xf32>
    %770 = arith.negf %762 : vector<2x128xf32>
    %771 = math.exp %770 : vector<2x128xf32>
    %cst_215 = arith.constant 1.000000e+00 : f32
    %772 = vector.broadcast %cst_215 : f32 to vector<2x128xf32>
    %773 = arith.addf %772, %771 : vector<2x128xf32>
    %774 = arith.divf %772, %773 : vector<2x128xf32>
    %775 = arith.select %768, %769, %774 : vector<2x128xi1>, vector<2x128xf32>
    %776 = vector.extract_strided_slice %775 {offsets = [0, 0], sizes = [2, 32], strides = [1, 1]} : vector<2x128xf32> to vector<2x32xf32>
    %777 = vector.extract_strided_slice %775 {offsets = [0, 32], sizes = [2, 32], strides = [1, 1]} : vector<2x128xf32> to vector<2x32xf32>
    %778 = vector.extract_strided_slice %775 {offsets = [0, 64], sizes = [2, 32], strides = [1, 1]} : vector<2x128xf32> to vector<2x32xf32>
    %779 = vector.extract_strided_slice %775 {offsets = [0, 96], sizes = [2, 32], strides = [1, 1]} : vector<2x128xf32> to vector<2x32xf32>
    %780 = arith.mulf %777, %756 : vector<2x32xf32>
    %781 = arith.mulf %776, %778 : vector<2x32xf32>
    %782 = arith.addf %780, %781 : vector<2x32xf32>
    %783 = math.tanh %782 : vector<2x32xf32>
    %784 = arith.mulf %779, %783 : vector<2x32xf32>
    %c8_216 = arith.constant 8 : index
    %c0_217 = arith.constant 0 : index
    %785 = vector.load %arg24[%c8_216, %c0_217] : memref<16x32xf32, #tpu.memory_space<vmem>>, vector<2x32xf32>
    tpu.vector_store %arg24[%c8_216, %c0_217], %784 {strides = array<i32>} : memref<16x32xf32, #tpu.memory_space<vmem>>, vector<2x32xf32>,
    %786 = vector.extract_strided_slice %463 {offsets = [6, 0], sizes = [2, 128], strides = [1, 1]} : vector<16x128xf32> to vector<2x128xf32>
    %cst_218 = arith.constant dense<0.000000e+00> : vector<2x128xf32>
    %787 = tpu.matmul %784, %677, %cst_218 {dimension_numbers = #tpu.dot_dimension_numbers<[1], [0], [0], [1], [0, 0, 1, 1], [], []>} : vector<2x32xf32>, vector<32x128xf32>, vector<2x128xf32> -> vector<2x128xf32>
    %788 = arith.addf %786, %787 : vector<2x128xf32>
    %789 = tpu.iota {dimensions = array<i32: 1>} : vector<2x128xi32>
    %c64_i32_219 = arith.constant 64 : i32
    %790 = vector.broadcast %c64_i32_219 : i32 to vector<2x128xi32>
    %791 = arith.cmpi sge, %789, %790 : vector<2x128xi32>
    %c96_i32_220 = arith.constant 96 : i32
    %792 = vector.broadcast %c96_i32_220 : i32 to vector<2x128xi32>
    %793 = arith.cmpi slt, %789, %792 : vector<2x128xi32>
    %794 = arith.andi %791, %793 : vector<2x128xi1>
    %795 = math.tanh %788 : vector<2x128xf32>
    %796 = arith.negf %788 : vector<2x128xf32>
    %797 = math.exp %796 : vector<2x128xf32>
    %cst_221 = arith.constant 1.000000e+00 : f32
    %798 = vector.broadcast %cst_221 : f32 to vector<2x128xf32>
    %799 = arith.addf %798, %797 : vector<2x128xf32>
    %800 = arith.divf %798, %799 : vector<2x128xf32>
    %801 = arith.select %794, %795, %800 : vector<2x128xi1>, vector<2x128xf32>
    %802 = vector.extract_strided_slice %801 {offsets = [0, 0], sizes = [2, 32], strides = [1, 1]} : vector<2x128xf32> to vector<2x32xf32>
    %803 = vector.extract_strided_slice %801 {offsets = [0, 32], sizes = [2, 32], strides = [1, 1]} : vector<2x128xf32> to vector<2x32xf32>
    %804 = vector.extract_strided_slice %801 {offsets = [0, 64], sizes = [2, 32], strides = [1, 1]} : vector<2x128xf32> to vector<2x32xf32>
    %805 = vector.extract_strided_slice %801 {offsets = [0, 96], sizes = [2, 32], strides = [1, 1]} : vector<2x128xf32> to vector<2x32xf32>
    %806 = arith.mulf %803, %782 : vector<2x32xf32>
    %807 = arith.mulf %802, %804 : vector<2x32xf32>
    %808 = arith.addf %806, %807 : vector<2x32xf32>
    %809 = math.tanh %808 : vector<2x32xf32>
    %810 = arith.mulf %805, %809 : vector<2x32xf32>
    %c6_222 = arith.constant 6 : index
    %c0_223 = arith.constant 0 : index
    %811 = vector.load %arg24[%c6_222, %c0_223] : memref<16x32xf32, #tpu.memory_space<vmem>>, vector<2x32xf32>
    tpu.vector_store %arg24[%c6_222, %c0_223], %810 {strides = array<i32>} : memref<16x32xf32, #tpu.memory_space<vmem>>, vector<2x32xf32>,
    %812 = vector.extract_strided_slice %463 {offsets = [4, 0], sizes = [2, 128], strides = [1, 1]} : vector<16x128xf32> to vector<2x128xf32>
    %cst_224 = arith.constant dense<0.000000e+00> : vector<2x128xf32>
    %813 = tpu.matmul %810, %677, %cst_224 {dimension_numbers = #tpu.dot_dimension_numbers<[1], [0], [0], [1], [0, 0, 1, 1], [], []>} : vector<2x32xf32>, vector<32x128xf32>, vector<2x128xf32> -> vector<2x128xf32>
    %814 = arith.addf %812, %813 : vector<2x128xf32>
    %815 = tpu.iota {dimensions = array<i32: 1>} : vector<2x128xi32>
    %c64_i32_225 = arith.constant 64 : i32
    %816 = vector.broadcast %c64_i32_225 : i32 to vector<2x128xi32>
    %817 = arith.cmpi sge, %815, %816 : vector<2x128xi32>
    %c96_i32_226 = arith.constant 96 : i32
    %818 = vector.broadcast %c96_i32_226 : i32 to vector<2x128xi32>
    %819 = arith.cmpi slt, %815, %818 : vector<2x128xi32>
    %820 = arith.andi %817, %819 : vector<2x128xi1>
    %821 = math.tanh %814 : vector<2x128xf32>
    %822 = arith.negf %814 : vector<2x128xf32>
    %823 = math.exp %822 : vector<2x128xf32>
    %cst_227 = arith.constant 1.000000e+00 : f32
    %824 = vector.broadcast %cst_227 : f32 to vector<2x128xf32>
    %825 = arith.addf %824, %823 : vector<2x128xf32>
    %826 = arith.divf %824, %825 : vector<2x128xf32>
    %827 = arith.select %820, %821, %826 : vector<2x128xi1>, vector<2x128xf32>
    %828 = vector.extract_strided_slice %827 {offsets = [0, 0], sizes = [2, 32], strides = [1, 1]} : vector<2x128xf32> to vector<2x32xf32>
    %829 = vector.extract_strided_slice %827 {offsets = [0, 32], sizes = [2, 32], strides = [1, 1]} : vector<2x128xf32> to vector<2x32xf32>
    %830 = vector.extract_strided_slice %827 {offsets = [0, 64], sizes = [2, 32], strides = [1, 1]} : vector<2x128xf32> to vector<2x32xf32>
    %831 = vector.extract_strided_slice %827 {offsets = [0, 96], sizes = [2, 32], strides = [1, 1]} : vector<2x128xf32> to vector<2x32xf32>
    %832 = arith.mulf %829, %808 : vector<2x32xf32>
    %833 = arith.mulf %828, %830 : vector<2x32xf32>
    %834 = arith.addf %832, %833 : vector<2x32xf32>
    %835 = math.tanh %834 : vector<2x32xf32>
    %836 = arith.mulf %831, %835 : vector<2x32xf32>
    %c4_228 = arith.constant 4 : index
    %c0_229 = arith.constant 0 : index
    %837 = vector.load %arg24[%c4_228, %c0_229] : memref<16x32xf32, #tpu.memory_space<vmem>>, vector<2x32xf32>
    tpu.vector_store %arg24[%c4_228, %c0_229], %836 {strides = array<i32>} : memref<16x32xf32, #tpu.memory_space<vmem>>, vector<2x32xf32>,
    %838 = vector.extract_strided_slice %463 {offsets = [2, 0], sizes = [2, 128], strides = [1, 1]} : vector<16x128xf32> to vector<2x128xf32>
    %cst_230 = arith.constant dense<0.000000e+00> : vector<2x128xf32>
    %839 = tpu.matmul %836, %677, %cst_230 {dimension_numbers = #tpu.dot_dimension_numbers<[1], [0], [0], [1], [0, 0, 1, 1], [], []>} : vector<2x32xf32>, vector<32x128xf32>, vector<2x128xf32> -> vector<2x128xf32>
    %840 = arith.addf %838, %839 : vector<2x128xf32>
    %841 = tpu.iota {dimensions = array<i32: 1>} : vector<2x128xi32>
    %c64_i32_231 = arith.constant 64 : i32
    %842 = vector.broadcast %c64_i32_231 : i32 to vector<2x128xi32>
    %843 = arith.cmpi sge, %841, %842 : vector<2x128xi32>
    %c96_i32_232 = arith.constant 96 : i32
    %844 = vector.broadcast %c96_i32_232 : i32 to vector<2x128xi32>
    %845 = arith.cmpi slt, %841, %844 : vector<2x128xi32>
    %846 = arith.andi %843, %845 : vector<2x128xi1>
    %847 = math.tanh %840 : vector<2x128xf32>
    %848 = arith.negf %840 : vector<2x128xf32>
    %849 = math.exp %848 : vector<2x128xf32>
    %cst_233 = arith.constant 1.000000e+00 : f32
    %850 = vector.broadcast %cst_233 : f32 to vector<2x128xf32>
    %851 = arith.addf %850, %849 : vector<2x128xf32>
    %852 = arith.divf %850, %851 : vector<2x128xf32>
    %853 = arith.select %846, %847, %852 : vector<2x128xi1>, vector<2x128xf32>
    %854 = vector.extract_strided_slice %853 {offsets = [0, 0], sizes = [2, 32], strides = [1, 1]} : vector<2x128xf32> to vector<2x32xf32>
    %855 = vector.extract_strided_slice %853 {offsets = [0, 32], sizes = [2, 32], strides = [1, 1]} : vector<2x128xf32> to vector<2x32xf32>
    %856 = vector.extract_strided_slice %853 {offsets = [0, 64], sizes = [2, 32], strides = [1, 1]} : vector<2x128xf32> to vector<2x32xf32>
    %857 = vector.extract_strided_slice %853 {offsets = [0, 96], sizes = [2, 32], strides = [1, 1]} : vector<2x128xf32> to vector<2x32xf32>
    %858 = arith.mulf %855, %834 : vector<2x32xf32>
    %859 = arith.mulf %854, %856 : vector<2x32xf32>
    %860 = arith.addf %858, %859 : vector<2x32xf32>
    %861 = math.tanh %860 : vector<2x32xf32>
    %862 = arith.mulf %857, %861 : vector<2x32xf32>
    %c2_234 = arith.constant 2 : index
    %c0_235 = arith.constant 0 : index
    %863 = vector.load %arg24[%c2_234, %c0_235] : memref<16x32xf32, #tpu.memory_space<vmem>>, vector<2x32xf32>
    tpu.vector_store %arg24[%c2_234, %c0_235], %862 {strides = array<i32>} : memref<16x32xf32, #tpu.memory_space<vmem>>, vector<2x32xf32>,
    %864 = vector.extract_strided_slice %463 {offsets = [0, 0], sizes = [2, 128], strides = [1, 1]} : vector<16x128xf32> to vector<2x128xf32>
    %cst_236 = arith.constant dense<0.000000e+00> : vector<2x128xf32>
    %865 = tpu.matmul %862, %677, %cst_236 {dimension_numbers = #tpu.dot_dimension_numbers<[1], [0], [0], [1], [0, 0, 1, 1], [], []>} : vector<2x32xf32>, vector<32x128xf32>, vector<2x128xf32> -> vector<2x128xf32>
    %866 = arith.addf %864, %865 : vector<2x128xf32>
    %867 = tpu.iota {dimensions = array<i32: 1>} : vector<2x128xi32>
    %c64_i32_237 = arith.constant 64 : i32
    %868 = vector.broadcast %c64_i32_237 : i32 to vector<2x128xi32>
    %869 = arith.cmpi sge, %867, %868 : vector<2x128xi32>
    %c96_i32_238 = arith.constant 96 : i32
    %870 = vector.broadcast %c96_i32_238 : i32 to vector<2x128xi32>
    %871 = arith.cmpi slt, %867, %870 : vector<2x128xi32>
    %872 = arith.andi %869, %871 : vector<2x128xi1>
    %873 = math.tanh %866 : vector<2x128xf32>
    %874 = arith.negf %866 : vector<2x128xf32>
    %875 = math.exp %874 : vector<2x128xf32>
    %cst_239 = arith.constant 1.000000e+00 : f32
    %876 = vector.broadcast %cst_239 : f32 to vector<2x128xf32>
    %877 = arith.addf %876, %875 : vector<2x128xf32>
    %878 = arith.divf %876, %877 : vector<2x128xf32>
    %879 = arith.select %872, %873, %878 : vector<2x128xi1>, vector<2x128xf32>
    %880 = vector.extract_strided_slice %879 {offsets = [0, 0], sizes = [2, 32], strides = [1, 1]} : vector<2x128xf32> to vector<2x32xf32>
    %881 = vector.extract_strided_slice %879 {offsets = [0, 32], sizes = [2, 32], strides = [1, 1]} : vector<2x128xf32> to vector<2x32xf32>
    %882 = vector.extract_strided_slice %879 {offsets = [0, 64], sizes = [2, 32], strides = [1, 1]} : vector<2x128xf32> to vector<2x32xf32>
    %883 = vector.extract_strided_slice %879 {offsets = [0, 96], sizes = [2, 32], strides = [1, 1]} : vector<2x128xf32> to vector<2x32xf32>
    %884 = arith.mulf %881, %860 : vector<2x32xf32>
    %885 = arith.mulf %880, %882 : vector<2x32xf32>
    %886 = arith.addf %884, %885 : vector<2x32xf32>
    %887 = math.tanh %886 : vector<2x32xf32>
    %888 = arith.mulf %883, %887 : vector<2x32xf32>
    %c0_240 = arith.constant 0 : index
    %c0_241 = arith.constant 0 : index
    %889 = vector.load %arg24[%c0_240, %c0_241] : memref<16x32xf32, #tpu.memory_space<vmem>>, vector<2x32xf32>
    tpu.vector_store %arg24[%c0_240, %c0_241], %888 {strides = array<i32>} : memref<16x32xf32, #tpu.memory_space<vmem>>, vector<2x32xf32>,
    %c0_242 = arith.constant 0 : index
    %c0_243 = arith.constant 0 : index
    %890 = vector.load %arg23[%c0_242, %c0_243] : memref<16x32xf32, #tpu.memory_space<vmem>>, vector<2x32xf32>
    %c0_244 = arith.constant 0 : index
    %c0_245 = arith.constant 0 : index
    %891 = vector.load %arg24[%c0_244, %c0_245] : memref<16x32xf32, #tpu.memory_space<vmem>>, vector<2x32xf32>
    %c14_246 = arith.constant 14 : index
    %c0_247 = arith.constant 0 : index
    %892 = vector.load %arg23[%c14_246, %c0_247] : memref<16x32xf32, #tpu.memory_space<vmem>>, vector<2x32xf32>
    %c14_248 = arith.constant 14 : index
    %c0_249 = arith.constant 0 : index
    %893 = vector.load %arg24[%c14_248, %c0_249] : memref<16x32xf32, #tpu.memory_space<vmem>>, vector<2x32xf32>
    %c0_250 = arith.constant 0 : index
    %c0_251 = arith.constant 0 : index
    %894 = vector.load %arg16[%c0_250, %c0_251] : memref<128x64xf32, #tpu.memory_space<vmem>>, vector<128x64xf32>
    %895 = vector.extract_strided_slice %894 {offsets = [0, 0], sizes = [32, 64], strides = [1, 1]} : vector<128x64xf32> to vector<32x64xf32>
    %cst_252 = arith.constant dense<0.000000e+00> : vector<2x64xf32>
    %896 = tpu.matmul %890, %895, %cst_252 {dimension_numbers = #tpu.dot_dimension_numbers<[1], [0], [0], [1], [0, 0, 1, 1], [], []>} : vector<2x32xf32>, vector<32x64xf32>, vector<2x64xf32> -> vector<2x64xf32>
    %897 = vector.extract_strided_slice %894 {offsets = [32, 0], sizes = [32, 64], strides = [1, 1]} : vector<128x64xf32> to vector<32x64xf32>
    %cst_253 = arith.constant dense<0.000000e+00> : vector<2x64xf32>
    %898 = tpu.matmul %891, %897, %cst_253 {dimension_numbers = #tpu.dot_dimension_numbers<[1], [0], [0], [1], [0, 0, 1, 1], [], []>} : vector<2x32xf32>, vector<32x64xf32>, vector<2x64xf32> -> vector<2x64xf32>
    %899 = arith.addf %896, %898 : vector<2x64xf32>
    %900 = vector.extract_strided_slice %894 {offsets = [64, 0], sizes = [32, 64], strides = [1, 1]} : vector<128x64xf32> to vector<32x64xf32>
    %cst_254 = arith.constant dense<0.000000e+00> : vector<2x64xf32>
    %901 = tpu.matmul %892, %900, %cst_254 {dimension_numbers = #tpu.dot_dimension_numbers<[1], [0], [0], [1], [0, 0, 1, 1], [], []>} : vector<2x32xf32>, vector<32x64xf32>, vector<2x64xf32> -> vector<2x64xf32>
    %902 = arith.addf %899, %901 : vector<2x64xf32>
    %903 = vector.extract_strided_slice %894 {offsets = [96, 0], sizes = [32, 64], strides = [1, 1]} : vector<128x64xf32> to vector<32x64xf32>
    %cst_255 = arith.constant dense<0.000000e+00> : vector<2x64xf32>
    %904 = tpu.matmul %893, %903, %cst_255 {dimension_numbers = #tpu.dot_dimension_numbers<[1], [0], [0], [1], [0, 0, 1, 1], [], []>} : vector<2x32xf32>, vector<32x64xf32>, vector<2x64xf32> -> vector<2x64xf32>
    %905 = arith.addf %902, %904 : vector<2x64xf32>
    %c0_256 = arith.constant 0 : index
    %c0_257 = arith.constant 0 : index
    %906 = vector.load %arg17[%c0_256, %c0_257] : memref<1x64xf32, #tpu.memory_space<vmem>>, vector<1x64xf32>
    %907 = vector.broadcast %906 : vector<1x64xf32> to vector<2x64xf32>
    %908 = arith.addf %905, %907 : vector<2x64xf32>
    %cst_258 = arith.constant 0.000000e+00 : f32
    %909 = vector.broadcast %cst_258 : f32 to vector<2x64xf32>
    %910 = arith.maximumf %908, %909 : vector<2x64xf32>
    %c0_259 = arith.constant 0 : index
    %c0_260 = arith.constant 0 : index
    %911 = vector.load %arg18[%c0_259, %c0_260] : memref<64x2xf32, #tpu.memory_space<vmem>>, vector<64x2xf32>
    %cst_261 = arith.constant dense<0.000000e+00> : vector<2x2xf32>
    %912 = tpu.matmul %910, %911, %cst_261 {dimension_numbers = #tpu.dot_dimension_numbers<[1], [0], [0], [1], [0, 0, 1, 1], [], []>} : vector<2x64xf32>, vector<64x2xf32>, vector<2x2xf32> -> vector<2x2xf32>
    %c0_262 = arith.constant 0 : index
    %c0_263 = arith.constant 0 : index
    %913 = vector.load %arg19[%c0_262, %c0_263] : memref<1x2xf32, #tpu.memory_space<vmem>>, vector<1x2xf32>
    %914 = vector.broadcast %913 : vector<1x2xf32> to vector<2x2xf32>
    %915 = arith.addf %912, %914 : vector<2x2xf32>
    %c0_264 = arith.constant 0 : index
    %c0_265 = arith.constant 0 : index
    %916 = vector.load %arg20[%c0_264, %c0_265] : memref<2x2xf32, #tpu.memory_space<vmem>>, vector<2x2xf32>
    tpu.vector_store %arg20[%c0_264, %c0_265], %915 {strides = array<i32>} : memref<2x2xf32, #tpu.memory_space<vmem>>, vector<2x2xf32>,
    return
  }
}

</mosaic_0001>

<llo_original>
// kernel: forward.1
$region0: #{forward.1}
  #allocation0 [shape = 'u32[]', space=smem, size = 0x4, offset = 0x4, fixed_abs, tag = 'smem constant byte address 0x4 - core index']
  #allocation1 [shape = 'u32[144,128]{1,0:T(1,128)}', space=vmem, size = 0x12000, scoped, tag = 'internal scratch']
  #allocation2 [shape = 'f32[16,32]{1,0:T(8,128)}', space=vmem, size = 0x2000, scoped, tag = 'scratch operand']
  #allocation3 [shape = 'f32[16,32]{1,0:T(8,128)}', space=vmem, size = 0x2000, scoped, tag = 'scratch operand']
  #allocation4 [shape = 'f32[16,32]{1,0:T(8,128)}', space=vmem, size = 0x2000, scoped, tag = 'scratch operand']
  #allocation5 [shape = 'f32[16,32]{1,0:T(8,128)}', space=vmem, size = 0x2000, scoped, tag = 'scratch operand']
  %s0 = inlined_call_operand.vmem [shape: s32[16,1], index: 0, kind: input, shape index: {}]
  %s1 = inlined_call_operand.vmem [shape: f32[50,32], index: 1, kind: input, shape index: {}]
  %s2 = inlined_call_operand.vmem [shape: f32[4,2,32], index: 2, kind: input, shape index: {}]
  %s3 = inlined_call_operand.vmem [shape: f32[4,2,32], index: 3, kind: input, shape index: {}]
  %s4 = inlined_call_operand.vmem [shape: f32[32,128], index: 4, kind: input, shape index: {}]
  %s5 = inlined_call_operand.vmem [shape: f32[32,128], index: 5, kind: input, shape index: {}]
  %s6 = inlined_call_operand.vmem [shape: f32[1,128], index: 6, kind: input, shape index: {}]
  %s7 = inlined_call_operand.vmem [shape: f32[32,128], index: 7, kind: input, shape index: {}]
  %s8 = inlined_call_operand.vmem [shape: f32[32,128], index: 8, kind: input, shape index: {}]
  %s9 = inlined_call_operand.vmem [shape: f32[1,128], index: 9, kind: input, shape index: {}]
  %s10 = inlined_call_operand.vmem [shape: f32[64,128], index: 10, kind: input, shape index: {}]
  %s11 = inlined_call_operand.vmem [shape: f32[32,128], index: 11, kind: input, shape index: {}]
  %s12 = inlined_call_operand.vmem [shape: f32[1,128], index: 12, kind: input, shape index: {}]
  %s13 = inlined_call_operand.vmem [shape: f32[64,128], index: 13, kind: input, shape index: {}]
  %s14 = inlined_call_operand.vmem [shape: f32[32,128], index: 14, kind: input, shape index: {}]
  %s15 = inlined_call_operand.vmem [shape: f32[1,128], index: 15, kind: input, shape index: {}]
  %s16 = inlined_call_operand.vmem [shape: f32[128,64], index: 16, kind: input, shape index: {}]
  %s17 = inlined_call_operand.vmem [shape: f32[1,64], index: 17, kind: input, shape index: {}]
  %s18 = inlined_call_operand.vmem [shape: f32[64,2], index: 18, kind: input, shape index: {}]
  %s19 = inlined_call_operand.vmem [shape: f32[1,2], index: 19, kind: input, shape index: {}]
  %s20 = inlined_call_operand.vmem [shape: f32[2,2], index: 20, kind: output, shape index: {}]
  %s21 = sld [smem:[#allocation0]]
  $region90: #{forward.1} parent=0
    _
  %s23 = ssub.s32 1, %s21
  %s24 = scalar_select 0, %s23, %s21
  // Predicated region
  $region2: #{forward.1} parent=0 // pred_check
    _
  $region3: #{forward.1} parent=0 // pred_check_branch
    %26 = sbr.rel (0) target = $region5
  $region4: #{forward.1} parent=0 // pred_region
    _
  $region5: #{forward.1} parent=0 // pred_fallthru
    _
  // Predicated region
  $region6: #{forward.1} parent=0 // pred_check
    _
  $region7: #{forward.1} parent=0 // pred_check_branch
    %28 = sbr.rel (0) target = $region9
  $region8: #{forward.1} parent=0 // pred_region
    _
  $region9: #{forward.1} parent=0 // pred_fallthru
    _
  // Predicated region
  $region10: #{forward.1} parent=0 // pred_check
    _
  $region11: #{forward.1} parent=0 // pred_check_branch
    %30 = sbr.rel (0) target = $region13
  $region12: #{forward.1} parent=0 // pred_region
    _
  $region13: #{forward.1} parent=0 // pred_fallthru
    _
  // Predicated region
  $region14: #{forward.1} parent=0 // pred_check
    _
  $region15: #{forward.1} parent=0 // pred_check_branch
    %32 = sbr.rel (0) target = $region17
  $region16: #{forward.1} parent=0 // pred_region
    _
  $region17: #{forward.1} parent=0 // pred_fallthru
    _
  // Predicated region
  $region18: #{forward.1} parent=0 // pred_check
    _
  $region19: #{forward.1} parent=0 // pred_check_branch
    %34 = sbr.rel (0) target = $region21
  $region20: #{forward.1} parent=0 // pred_region
    _
  $region21: #{forward.1} parent=0 // pred_fallthru
    _
  // Predicated region
  $region22: #{forward.1} parent=0 // pred_check
    _
  $region23: #{forward.1} parent=0 // pred_check_branch
    %36 = sbr.rel (0) target = $region25
  $region24: #{forward.1} parent=0 // pred_region
    _
  $region25: #{forward.1} parent=0 // pred_fallthru
    _
  // Predicated region
  $region26: #{forward.1} parent=0 // pred_check
    _
  $region27: #{forward.1} parent=0 // pred_check_branch
    %38 = sbr.rel (0) target = $region29
  $region28: #{forward.1} parent=0 // pred_region
    _
  $region29: #{forward.1} parent=0 // pred_fallthru
    _
  // Predicated region
  $region30: #{forward.1} parent=0 // pred_check
    _
  $region31: #{forward.1} parent=0 // pred_check_branch
    %40 = sbr.rel (0) target = $region33
  $region32: #{forward.1} parent=0 // pred_region
    _
  $region33: #{forward.1} parent=0 // pred_fallthru
    _
  // Predicated region
  $region34: #{forward.1} parent=0 // pred_check
    _
  $region35: #{forward.1} parent=0 // pred_check_branch
    %42 = sbr.rel (0) target = $region37
  $region36: #{forward.1} parent=0 // pred_region
    _
  $region37: #{forward.1} parent=0 // pred_fallthru
    _
  // Predicated region
  $region38: #{forward.1} parent=0 // pred_check
    _
  $region39: #{forward.1} parent=0 // pred_check_branch
    %44 = sbr.rel (0) target = $region41
  $region40: #{forward.1} parent=0 // pred_region
    _
  $region41: #{forward.1} parent=0 // pred_fallthru
    _
  // Predicated region
  $region42: #{forward.1} parent=0 // pred_check
    _
  $region43: #{forward.1} parent=0 // pred_check_branch
    %46 = sbr.rel (0) target = $region45
  $region44: #{forward.1} parent=0 // pred_region
    _
  $region45: #{forward.1} parent=0 // pred_fallthru
    _
  // Predicated region
  $region46: #{forward.1} parent=0 // pred_check
    _
  $region47: #{forward.1} parent=0 // pred_check_branch
    %48 = sbr.rel (0) target = $region49
  $region48: #{forward.1} parent=0 // pred_region
    _
  $region49: #{forward.1} parent=0 // pred_fallthru
    _
  // Predicated region
  $region50: #{forward.1} parent=0 // pred_check
    _
  $region51: #{forward.1} parent=0 // pred_check_branch
    %50 = sbr.rel (0) target = $region53
  $region52: #{forward.1} parent=0 // pred_region
    _
  $region53: #{forward.1} parent=0 // pred_fallthru
    _
  // Predicated region
  $region54: #{forward.1} parent=0 // pred_check
    _
  $region55: #{forward.1} parent=0 // pred_check_branch
    %52 = sbr.rel (0) target = $region57
  $region56: #{forward.1} parent=0 // pred_region
    _
  $region57: #{forward.1} parent=0 // pred_fallthru
    _
  // Predicated region
  $region58: #{forward.1} parent=0 // pred_check
    _
  $region59: #{forward.1} parent=0 // pred_check_branch
    %54 = sbr.rel (0) target = $region61
  $region60: #{forward.1} parent=0 // pred_region
    _
  $region61: #{forward.1} parent=0 // pred_fallthru
    _
  // Predicated region
  $region62: #{forward.1} parent=0 // pred_check
    _
  $region63: #{forward.1} parent=0 // pred_check_branch
    %56 = sbr.rel (0) target = $region65
  $region64: #{forward.1} parent=0 // pred_region
    _
  $region65: #{forward.1} parent=0 // pred_fallthru
    _
  // Predicated region
  $region66: #{forward.1} parent=0 // pred_check
    _
  $region67: #{forward.1} parent=0 // pred_check_branch
    %58 = sbr.rel (0) target = $region69
  $region68: #{forward.1} parent=0 // pred_region
    _
  $region69: #{forward.1} parent=0 // pred_fallthru
    _
  // Predicated region
  $region70: #{forward.1} parent=0 // pred_check
    _
  $region71: #{forward.1} parent=0 // pred_check_branch
    %60 = sbr.rel (0) target = $region73
  $region72: #{forward.1} parent=0 // pred_region
    _
  $region73: #{forward.1} parent=0 // pred_fallthru
    _
  // Predicated region
  $region74: #{forward.1} parent=0 // pred_check
    _
  $region75: #{forward.1} parent=0 // pred_check_branch
    %62 = sbr.rel (0) target = $region77
  $region76: #{forward.1} parent=0 // pred_region
    _
  $region77: #{forward.1} parent=0 // pred_fallthru
    _
  // Predicated region
  $region78: #{forward.1} parent=0 // pred_check
    _
  $region79: #{forward.1} parent=0 // pred_check_branch
    %64 = sbr.rel (0) target = $region81
  $region80: #{forward.1} parent=0 // pred_region
    _
  $region81: #{forward.1} parent=0 // pred_fallthru
    _
  %v65 = vld [vmem:[%s0] sm:$0xff]
  %v66 = vld [vmem:[%s0 + $0x8] sm:$0xff]
  %v67 = vlaneseq
  %v68 = vand.u32 %v67, 127
  %69 = vset.pattern.permute.xlu0 0
  %70 = vperm.xlu0 %69, %v65
  %v71 = vpop.permute.xlu0 %70
  %72 = vset.pattern.permute.xlu0 0
  %73 = vperm.xlu0 %72, %v66
  %v74 = vpop.permute.xlu0 %73
  %vm75 = vcmp.eq.s32.totalorder %v68, %v71
  %vm76 = vcmp.eq.s32.totalorder %v68, %v74
  %v77 = vsel %vm75, 1, 0
  %v78 = vsel %vm76, 1, 0
  %v79 = vcvt.s32.f32 %v77
  %v80 = vcvt.s32.f32 %v78
  %v81 = vld [vmem:[%s1] sm:$0xff]
  %v82 = vld [vmem:[%s1 + $0x8] sm:$0xff]
  %v83 = vld [vmem:[%s1 + $0x10] sm:$0xff]
  %v84 = vld [vmem:[%s1 + $0x18] sm:$0xff]
  %v85 = vld [vmem:[%s1 + $0x20] sm:$0xff]
  %v86 = vld [vmem:[%s1 + $0x28] sm:$0xff]
  %v87 = vld [vmem:[%s1 + $0x30] sm:$0x3]
  %vm88 = vcmask 408576
  %v90 = vsel %vm88, %v79, 0
  %v93 = vsel %vm88, %v80, 0
  %vm95 = vcmask 1041408
  %v97 = vsel %vm95, %v87, 0
  %99 = vmatprep.subr.mxu0 0.0
  %100 = vmatpush1.msra.mxu0 %v81
  %101 = vmatprep.subr.mxu0 0.0
  %102 = vmatpush1.msra.mxu0 %v82
  %103 = vmatprep.subr.mxu0 0.0
  %104 = vmatpush1.msra.mxu0 %v83
  %105 = vmatprep.subr.mxu0 0.0
  %106 = vmatpush1.msra.mxu0 %v84
  %107 = vmatprep.subr.mxu0 0.0
  %108 = vmatpush1.msra.mxu0 %v85
  %109 = vmatprep.subr.mxu0 0.0
  %110 = vmatpush1.msra.mxu0 %v86
  %111 = vmatprep.subr.mxu0 0.0
  %112 = vmatpush1.msra.mxu0 %v97
  %113 = vmatprep.subr.mxu0 0.0
  %114 = vmatpush1.msra.mxu0 0.0
  %115 = vmatprep.subr.mxu0 0.0
  %116 = vmatpush1.msra.mxu0 0.0
  %117 = vmatprep.subr.mxu0 0.0
  %118 = vmatpush1.msra.mxu0 0.0
  %119 = vmatprep.subr.mxu0 0.0
  %120 = vmatpush1.msra.mxu0 0.0
  %121 = vmatprep.subr.mxu0 0.0
  %122 = vmatpush1.msra.mxu0 0.0
  %123 = vmatprep.subr.mxu0 0.0
  %124 = vmatpush1.msra.mxu0 0.0
  %125 = vmatprep.subr.mxu0 0.0
  %126 = vmatpush1.msra.mxu0 0.0
  %127 = vmatprep.subr.mxu0 0.0
  %128 = vmatpush1.msra.mxu0 0.0
  %129 = vmatprep.subr.mxu0 0.0
  %130 = vmatpush1.msra.mxu0 0.0
  %131 = vmatprep.subr.mxu0 0.0
  %132 = vmatpush1.msra.mxu0 0.0
  %133 = vmatprep.subr.mxu0 0.0
  %134 = vmatpush1.msra.mxu0 0.0
  %135 = vmatprep.subr.mxu0 0.0
  %136 = vmatpush1.msra.mxu0 0.0
  %137 = vmatprep.subr.mxu0 0.0
  %138 = vmatpush1.msra.mxu0 0.0
  %139 = vmatprep.subr.mxu0 0.0
  %140 = vmatpush1.msra.mxu0 0.0
  %141 = vmatprep.subr.mxu0 0.0
  %142 = vmatpush1.msra.mxu0 0.0
  %143 = vmatprep.subr.mxu0 0.0
  %144 = vmatpush1.msra.mxu0 0.0
  %145 = vmatprep.subr.mxu0 0.0
  %146 = vmatpush1.msra.mxu0 0.0
  %147 = vmatprep.subr.mxu0 0.0
  %148 = vmatpush1.msra.mxu0 0.0
  %149 = vmatprep.subr.mxu0 0.0
  %150 = vmatpush1.msra.mxu0 0.0
  %151 = vmatprep.subr.mxu0 0.0
  %152 = vmatpush1.msra.mxu0 0.0
  %153 = vmatprep.subr.mxu0 0.0
  %154 = vmatpush1.msra.mxu0 0.0
  %155 = vmatprep.subr.mxu0 0.0
  %156 = vmatpush1.msra.mxu0 0.0
  %157 = vmatprep.subr.mxu0 0.0
  %158 = vmatpush1.msra.mxu0 0.0
  %159 = vmatprep.subr.mxu0 0.0
  %160 = vmatpush1.msra.mxu0 0.0
  %161 = vmatprep.subr.mxu0 0.0
  %162 = vmatpush1.msra.mxu0 0.0
  %163 = vmatprep.mubr.f32.mxu0 0.0
  %164 = vmatmul.mubr.f32.gmra.mrb[0].mxu0 %v90
  %v165 = vpop.f32.mrb[0].mxu0
  %v166 = vadd.f32 0.0, %v165
  %v167 = vpop.f32.mrb[0].mxu0
  %168 = vmatprep.mubr.f32.mxu0 0.0
  %169 = vmatmul.mubr.f32.gmra.mrb[0].mxu0 %v93
  %v170 = vpop.f32.mrb[0].mxu0
  %v171 = vadd.f32 0.0, %v170
  %v172 = vpop.f32.mrb[0].mxu0
  %173 = vdwg.mxu0
  %v174 = vld [vmem:[%s4] sm:$0xff]
  %v175 = vld [vmem:[%s4 + $0x8] sm:$0xff]
  %v176 = vld [vmem:[%s4 + $0x10] sm:$0xff]
  %v177 = vld [vmem:[%s4 + $0x18] sm:$0xff]
  %v178 = vld [vmem:[%s6] sm:$0x1]
  %v180 = vlaneseq
  %v181 = vshrl.u32 %v180, 7
  %v182 = vsub.s32 0, %v181
  %v183 = vrot.slane %v178, %v182
  %vm185 = vcmask 261120
  %v187 = vsel %vm185, %v166, 0
  %v190 = vsel %vm185, %v171, 0
  %192 = vmatprep.subr.mxu0 0.0
  %193 = vmatpush1.msra.mxu0 %v174
  %194 = vmatprep.subr.mxu0 0.0
  %195 = vmatpush1.msra.mxu0 %v175
  %196 = vmatprep.subr.mxu0 0.0
  %197 = vmatpush1.msra.mxu0 %v176
  %198 = vmatprep.subr.mxu0 0.0
  %199 = vmatpush1.msra.mxu0 %v177
  %200 = vmatprep.subr.mxu0 0.0
  %201 = vmatpush1.msra.mxu0 0.0
  %202 = vmatprep.subr.mxu0 0.0
  %203 = vmatpush1.msra.mxu0 0.0
  %204 = vmatprep.subr.mxu0 0.0
  %205 = vmatpush1.msra.mxu0 0.0
  %206 = vmatprep.subr.mxu0 0.0
  %207 = vmatpush1.msra.mxu0 0.0
  %208 = vmatprep.subr.mxu0 0.0
  %209 = vmatpush1.msra.mxu0 0.0
  %210 = vmatprep.subr.mxu0 0.0
  %211 = vmatpush1.msra.mxu0 0.0
  %212 = vmatprep.subr.mxu0 0.0
  %213 = vmatpush1.msra.mxu0 0.0
  %214 = vmatprep.subr.mxu0 0.0
  %215 = vmatpush1.msra.mxu0 0.0
  %216 = vmatprep.subr.mxu0 0.0
  %217 = vmatpush1.msra.mxu0 0.0
  %218 = vmatprep.subr.mxu0 0.0
  %219 = vmatpush1.msra.mxu0 0.0
  %220 = vmatprep.subr.mxu0 0.0
  %221 = vmatpush1.msra.mxu0 0.0
  %222 = vmatprep.subr.mxu0 0.0
  %223 = vmatpush1.msra.mxu0 0.0
  %224 = vmatprep.subr.mxu0 0.0
  %225 = vmatpush1.msra.mxu0 0.0
  %226 = vmatprep.subr.mxu0 0.0
  %227 = vmatpush1.msra.mxu0 0.0
  %228 = vmatprep.subr.mxu0 0.0
  %229 = vmatpush1.msra.mxu0 0.0
  %230 = vmatprep.subr.mxu0 0.0
  %231 = vmatpush1.msra.mxu0 0.0
  %232 = vmatprep.subr.mxu0 0.0
  %233 = vmatpush1.msra.mxu0 0.0
  %234 = vmatprep.subr.mxu0 0.0
  %235 = vmatpush1.msra.mxu0 0.0
  %236 = vmatprep.subr.mxu0 0.0
  %237 = vmatpush1.msra.mxu0 0.0
  %238 = vmatprep.subr.mxu0 0.0
  %239 = vmatpush1.msra.mxu0 0.0
  %240 = vmatprep.subr.mxu0 0.0
  %241 = vmatpush1.msra.mxu0 0.0
  %242 = vmatprep.subr.mxu0 0.0
  %243 = vmatpush1.msra.mxu0 0.0
  %244 = vmatprep.subr.mxu0 0.0
  %245 = vmatpush1.msra.mxu0 0.0
  %246 = vmatprep.subr.mxu0 0.0
  %247 = vmatpush1.msra.mxu0 0.0
  %248 = vmatprep.subr.mxu0 0.0
  %249 = vmatpush1.msra.mxu0 0.0
  %250 = vmatprep.subr.mxu0 0.0
  %251 = vmatpush1.msra.mxu0 0.0
  %252 = vmatprep.subr.mxu0 0.0
  %253 = vmatpush1.msra.mxu0 0.0
  %254 = vmatprep.subr.mxu0 0.0
  %255 = vmatpush1.msra.mxu0 0.0
  %256 = vmatprep.mubr.f32.mxu0 0.0
  %257 = vmatmul.mubr.f32.gmra.mrb[0].mxu0 %v187
  %v258 = vpop.f32.mrb[0].mxu0
  %v259 = vadd.f32 %v183, %v258
  %v260 = vpop.f32.mrb[0].mxu0
  %261 = vmatprep.mubr.f32.mxu0 0.0
  %262 = vmatmul.mubr.f32.gmra.mrb[0].mxu0 %v190
  %v263 = vpop.f32.mrb[0].mxu0
  %v264 = vadd.f32 %v183, %v263
  %v265 = vpop.f32.mrb[0].mxu0
  %266 = vdwg.mxu0
  %v267 = vld [vmem:[%s7] sm:$0xff]
  %v268 = vld [vmem:[%s7 + $0x8] sm:$0xff]
  %v269 = vld [vmem:[%s7 + $0x10] sm:$0xff]
  %v270 = vld [vmem:[%s7 + $0x18] sm:$0xff]
  %v271 = vld [vmem:[%s9] sm:$0x1]
  %v273 = vlaneseq
  %v274 = vshrl.u32 %v273, 7
  %v275 = vsub.s32 0, %v274
  %v276 = vrot.slane %v271, %v275
  %278 = vmatprep.subr.mxu0 0.0
  %279 = vmatpush1.msra.mxu0 %v267
  %280 = vmatprep.subr.mxu0 0.0
  %281 = vmatpush1.msra.mxu0 %v268
  %282 = vmatprep.subr.mxu0 0.0
  %283 = vmatpush1.msra.mxu0 %v269
  %284 = vmatprep.subr.mxu0 0.0
  %285 = vmatpush1.msra.mxu0 %v270
  %286 = vmatprep.subr.mxu0 0.0
  %287 = vmatpush1.msra.mxu0 0.0
  %288 = vmatprep.subr.mxu0 0.0
  %289 = vmatpush1.msra.mxu0 0.0
  %290 = vmatprep.subr.mxu0 0.0
  %291 = vmatpush1.msra.mxu0 0.0
  %292 = vmatprep.subr.mxu0 0.0
  %293 = vmatpush1.msra.mxu0 0.0
  %294 = vmatprep.subr.mxu0 0.0
  %295 = vmatpush1.msra.mxu0 0.0
  %296 = vmatprep.subr.mxu0 0.0
  %297 = vmatpush1.msra.mxu0 0.0
  %298 = vmatprep.subr.mxu0 0.0
  %299 = vmatpush1.msra.mxu0 0.0
  %300 = vmatprep.subr.mxu0 0.0
  %301 = vmatpush1.msra.mxu0 0.0
  %302 = vmatprep.subr.mxu0 0.0
  %303 = vmatpush1.msra.mxu0 0.0
  %304 = vmatprep.subr.mxu0 0.0
  %305 = vmatpush1.msra.mxu0 0.0
  %306 = vmatprep.subr.mxu0 0.0
  %307 = vmatpush1.msra.mxu0 0.0
  %308 = vmatprep.subr.mxu0 0.0
  %309 = vmatpush1.msra.mxu0 0.0
  %310 = vmatprep.subr.mxu0 0.0
  %311 = vmatpush1.msra.mxu0 0.0
  %312 = vmatprep.subr.mxu0 0.0
  %313 = vmatpush1.msra.mxu0 0.0
  %314 = vmatprep.subr.mxu0 0.0
  %315 = vmatpush1.msra.mxu0 0.0
  %316 = vmatprep.subr.mxu0 0.0
  %317 = vmatpush1.msra.mxu0 0.0
  %318 = vmatprep.subr.mxu0 0.0
  %319 = vmatpush1.msra.mxu0 0.0
  %320 = vmatprep.subr.mxu0 0.0
  %321 = vmatpush1.msra.mxu0 0.0
  %322 = vmatprep.subr.mxu0 0.0
  %323 = vmatpush1.msra.mxu0 0.0
  %324 = vmatprep.subr.mxu0 0.0
  %325 = vmatpush1.msra.mxu0 0.0
  %326 = vmatprep.subr.mxu0 0.0
  %327 = vmatpush1.msra.mxu0 0.0
  %328 = vmatprep.subr.mxu0 0.0
  %329 = vmatpush1.msra.mxu0 0.0
  %330 = vmatprep.subr.mxu0 0.0
  %331 = vmatpush1.msra.mxu0 0.0
  %332 = vmatprep.subr.mxu0 0.0
  %333 = vmatpush1.msra.mxu0 0.0
  %334 = vmatprep.subr.mxu0 0.0
  %335 = vmatpush1.msra.mxu0 0.0
  %336 = vmatprep.subr.mxu0 0.0
  %337 = vmatpush1.msra.mxu0 0.0
  %338 = vmatprep.subr.mxu0 0.0
  %339 = vmatpush1.msra.mxu0 0.0
  %340 = vmatprep.subr.mxu0 0.0
  %341 = vmatpush1.msra.mxu0 0.0
  %342 = vmatprep.mubr.f32.mxu0 0.0
  %343 = vmatmul.mubr.f32.gmra.mrb[0].mxu0 %v187
  %v344 = vpop.f32.mrb[0].mxu0
  %v345 = vadd.f32 %v276, %v344
  %v346 = vpop.f32.mrb[0].mxu0
  %347 = vmatprep.mubr.f32.mxu0 0.0
  %348 = vmatmul.mubr.f32.gmra.mrb[0].mxu0 %v190
  %v349 = vpop.f32.mrb[0].mxu0
  %v350 = vadd.f32 %v276, %v349
  %v351 = vpop.f32.mrb[0].mxu0
  %352 = vdwg.mxu0
  %v353 = vld [vmem:[%s5] sm:$0xff]
  %v354 = vld [vmem:[%s5 + $0x8] sm:$0xff]
  %v355 = vld [vmem:[%s5 + $0x10] sm:$0xff]
  %v356 = vld [vmem:[%s5 + $0x18] sm:$0xff]
  %v357 = vld [vmem:[%s2] sm:$0x3]
  %v358 = vld [vmem:[%s3] sm:$0x3]
  %v360 = vsel %vm185, %v357, 0
  %362 = vmatprep.subr.mxu0 0.0
  %363 = vmatpush1.msra.mxu0 %v353
  %364 = vmatprep.subr.mxu0 0.0
  %365 = vmatpush1.msra.mxu0 %v354
  %366 = vmatprep.subr.mxu0 0.0
  %367 = vmatpush1.msra.mxu0 %v355
  %368 = vmatprep.subr.mxu0 0.0
  %369 = vmatpush1.msra.mxu0 %v356
  %370 = vmatprep.subr.mxu0 0.0
  %371 = vmatpush1.msra.mxu0 0.0
  %372 = vmatprep.subr.mxu0 0.0
  %373 = vmatpush1.msra.mxu0 0.0
  %374 = vmatprep.subr.mxu0 0.0
  %375 = vmatpush1.msra.mxu0 0.0
  %376 = vmatprep.subr.mxu0 0.0
  %377 = vmatpush1.msra.mxu0 0.0
  %378 = vmatprep.subr.mxu0 0.0
  %379 = vmatpush1.msra.mxu0 0.0
  %380 = vmatprep.subr.mxu0 0.0
  %381 = vmatpush1.msra.mxu0 0.0
  %382 = vmatprep.subr.mxu0 0.0
  %383 = vmatpush1.msra.mxu0 0.0
  %384 = vmatprep.subr.mxu0 0.0
  %385 = vmatpush1.msra.mxu0 0.0
  %386 = vmatprep.subr.mxu0 0.0
  %387 = vmatpush1.msra.mxu0 0.0
  %388 = vmatprep.subr.mxu0 0.0
  %389 = vmatpush1.msra.mxu0 0.0
  %390 = vmatprep.subr.mxu0 0.0
  %391 = vmatpush1.msra.mxu0 0.0
  %392 = vmatprep.subr.mxu0 0.0
  %393 = vmatpush1.msra.mxu0 0.0
  %394 = vmatprep.subr.mxu0 0.0
  %395 = vmatpush1.msra.mxu0 0.0
  %396 = vmatprep.subr.mxu0 0.0
  %397 = vmatpush1.msra.mxu0 0.0
  %398 = vmatprep.subr.mxu0 0.0
  %399 = vmatpush1.msra.mxu0 0.0
  %400 = vmatprep.subr.mxu0 0.0
  %401 = vmatpush1.msra.mxu0 0.0
  %402 = vmatprep.subr.mxu0 0.0
  %403 = vmatpush1.msra.mxu0 0.0
  %404 = vmatprep.subr.mxu0 0.0
  %405 = vmatpush1.msra.mxu0 0.0
  %406 = vmatprep.subr.mxu0 0.0
  %407 = vmatpush1.msra.mxu0 0.0
  %408 = vmatprep.subr.mxu0 0.0
  %409 = vmatpush1.msra.mxu0 0.0
  %410 = vmatprep.subr.mxu0 0.0
  %411 = vmatpush1.msra.mxu0 0.0
  %412 = vmatprep.subr.mxu0 0.0
  %413 = vmatpush1.msra.mxu0 0.0
  %414 = vmatprep.subr.mxu0 0.0
  %415 = vmatpush1.msra.mxu0 0.0
  %416 = vmatprep.subr.mxu0 0.0
  %417 = vmatpush1.msra.mxu0 0.0
  %418 = vmatprep.subr.mxu0 0.0
  %419 = vmatpush1.msra.mxu0 0.0
  %420 = vmatprep.subr.mxu0 0.0
  %421 = vmatpush1.msra.mxu0 0.0
  %422 = vmatprep.subr.mxu0 0.0
  %423 = vmatpush1.msra.mxu0 0.0
  %424 = vmatprep.subr.mxu0 0.0
  %425 = vmatpush1.msra.mxu0 0.0
  %426 = vmatprep.mubr.f32.mxu0 0.0
  %427 = vmatmul.mubr.f32.gmra.mrb[0].mxu0 %v360
  %v428 = vpop.f32.mrb[0].mxu0
  %v429 = vadd.f32 0.0, %v428
  %v430 = vpop.f32.mrb[0].mxu0
  %431 = vdwg.mxu0
  %v432 = vadd.f32 %v259, %v429
  %vm433 = vcmp.ge.s32.totalorder %v68, 64
  %vm434 = vcmp.lt.s32.totalorder %v68, 96
  %vm435 = vmand %vm433, %vm434
  %v436 = vtanh.pop %v432
  %v437 = vxor.u32 %v432, 2147483648
  %v438 = vmul.f32 %v437, 1.442695
  %v439 = vpow.pop %v438
  %v440 = vadd.f32 %v439, 1.0
  %v441 = vrcp.pop %v440
  %v442 = vmul.f32 1.0, %v441
  %v443 = vsel %vm435, %v436, %v442
  %445 = vrot.lane.b32.xlu0 %v358, 32
  %v446 = vpop.permute.xlu0 %445
  %v448 = vmul.f32 %v443, %v446
  %450 = vrot.lane.b32.xlu0 %v443, 64
  %v451 = vpop.permute.xlu0 %450
  %v453 = vmul.f32 %v443, %v451
  %455 = vrot.lane.b32.xlu0 %v453, 32
  %v456 = vpop.permute.xlu0 %455
  %v458 = vadd.f32 %v448, %v456
  %v459 = vtanh.pop %v458
  %461 = vrot.lane.b32.xlu0 %v459, 64
  %v462 = vpop.permute.xlu0 %461
  %v464 = vmul.f32 %v443, %v462
  %466 = vrot.lane.b32.xlu0 %v464, 32
  %v467 = vpop.permute.xlu0 %466
  %vm469 = vcmask 254976
  %470 = vst.msk [vmem:[#allocation2] sm:$0x3] %vm469, %v467
  %v471 = vsel %vm185, %v467, 0
  %473 = vmatprep.subr.mxu0 0.0
  %474 = vmatpush1.msra.mxu0 %v353
  %475 = vmatprep.subr.mxu0 0.0
  %476 = vmatpush1.msra.mxu0 %v354
  %477 = vmatprep.subr.mxu0 0.0
  %478 = vmatpush1.msra.mxu0 %v355
  %479 = vmatprep.subr.mxu0 0.0
  %480 = vmatpush1.msra.mxu0 %v356
  %481 = vmatprep.subr.mxu0 0.0
  %482 = vmatpush1.msra.mxu0 0.0
  %483 = vmatprep.subr.mxu0 0.0
  %484 = vmatpush1.msra.mxu0 0.0
  %485 = vmatprep.subr.mxu0 0.0
  %486 = vmatpush1.msra.mxu0 0.0
  %487 = vmatprep.subr.mxu0 0.0
  %488 = vmatpush1.msra.mxu0 0.0
  %489 = vmatprep.subr.mxu0 0.0
  %490 = vmatpush1.msra.mxu0 0.0
  %491 = vmatprep.subr.mxu0 0.0
  %492 = vmatpush1.msra.mxu0 0.0
  %493 = vmatprep.subr.mxu0 0.0
  %494 = vmatpush1.msra.mxu0 0.0
  %495 = vmatprep.subr.mxu0 0.0
  %496 = vmatpush1.msra.mxu0 0.0
  %497 = vmatprep.subr.mxu0 0.0
  %498 = vmatpush1.msra.mxu0 0.0
  %499 = vmatprep.subr.mxu0 0.0
  %500 = vmatpush1.msra.mxu0 0.0
  %501 = vmatprep.subr.mxu0 0.0
  %502 = vmatpush1.msra.mxu0 0.0
  %503 = vmatprep.subr.mxu0 0.0
  %504 = vmatpush1.msra.mxu0 0.0
  %505 = vmatprep.subr.mxu0 0.0
  %506 = vmatpush1.msra.mxu0 0.0
  %507 = vmatprep.subr.mxu0 0.0
  %508 = vmatpush1.msra.mxu0 0.0
  %509 = vmatprep.subr.mxu0 0.0
  %510 = vmatpush1.msra.mxu0 0.0
  %511 = vmatprep.subr.mxu0 0.0
  %512 = vmatpush1.msra.mxu0 0.0
  %513 = vmatprep.subr.mxu0 0.0
  %514 = vmatpush1.msra.mxu0 0.0
  %515 = vmatprep.subr.mxu0 0.0
  %516 = vmatpush1.msra.mxu0 0.0
  %517 = vmatprep.subr.mxu0 0.0
  %518 = vmatpush1.msra.mxu0 0.0
  %519 = vmatprep.subr.mxu0 0.0
  %520 = vmatpush1.msra.mxu0 0.0
  %521 = vmatprep.subr.mxu0 0.0
  %522 = vmatpush1.msra.mxu0 0.0
  %523 = vmatprep.subr.mxu0 0.0
  %524 = vmatpush1.msra.mxu0 0.0
  %525 = vmatprep.subr.mxu0 0.0
  %526 = vmatpush1.msra.mxu0 0.0
  %527 = vmatprep.subr.mxu0 0.0
  %528 = vmatpush1.msra.mxu0 0.0
  %529 = vmatprep.subr.mxu0 0.0
  %530 = vmatpush1.msra.mxu0 0.0
  %531 = vmatprep.subr.mxu0 0.0
  %532 = vmatpush1.msra.mxu0 0.0
  %533 = vmatprep.subr.mxu0 0.0
  %534 = vmatpush1.msra.mxu0 0.0
  %535 = vmatprep.subr.mxu0 0.0
  %536 = vmatpush1.msra.mxu0 0.0
  %537 = vmatprep.mubr.f32.mxu0 0.0
  %538 = vmatmul.mubr.f32.gmra.mrb[0].mxu0 %v471
  %v539 = vpop.f32.mrb[0].mxu0
  %v540 = vadd.f32 0.0, %v539
  %v541 = vpop.f32.mrb[0].mxu0
  %542 = vdwg.mxu0
  %v544 = vrot.slane %v540, 6
  %v546 = vadd.f32 %v259, %v544
  %v547 = vtanh.pop %v546
  %v548 = vxor.u32 %v546, 2147483648
  %v549 = vmul.f32 %v548, 1.442695
  %v550 = vpow.pop %v549
  %v551 = vadd.f32 %v550, 1.0
  %v552 = vrcp.pop %v551
  %v553 = vmul.f32 1.0, %v552
  %v554 = vsel %vm435, %v547, %v553
  %v556 = vrot.slane %v458, 6
  %v558 = vmul.f32 %v554, %v556
  %560 = vrot.lane.b32.xlu0 %v554, 64
  %v561 = vpop.permute.xlu0 %560
  %v563 = vmul.f32 %v554, %v561
  %565 = vrot.lane.b32.xlu0 %v563, 32
  %v566 = vpop.permute.xlu0 %565
  %v568 = vadd.f32 %v558, %v566
  %v569 = vtanh.pop %v568
  %571 = vrot.lane.b32.xlu0 %v569, 64
  %v572 = vpop.permute.xlu0 %571
  %v574 = vmul.f32 %v554, %v572
  %576 = vrot.lane.b32.xlu0 %v574, 32
  %v577 = vpop.permute.xlu0 %576
  %vm579 = vcmask 257026
  %580 = vst.msk [vmem:[#allocation2] sm:$0xc] %vm579, %v577
  %v581 = vrot.slane %v574, 2
  %582 = vrot.lane.b32.xlu0 %v581, 32
  %v583 = vpop.permute.xlu0 %582
  %v584 = vsel %vm185, %v583, 0
  %586 = vmatprep.subr.mxu0 0.0
  %587 = vmatpush1.msra.mxu0 %v353
  %588 = vmatprep.subr.mxu0 0.0
  %589 = vmatpush1.msra.mxu0 %v354
  %590 = vmatprep.subr.mxu0 0.0
  %591 = vmatpush1.msra.mxu0 %v355
  %592 = vmatprep.subr.mxu0 0.0
  %593 = vmatpush1.msra.mxu0 %v356
  %594 = vmatprep.subr.mxu0 0.0
  %595 = vmatpush1.msra.mxu0 0.0
  %596 = vmatprep.subr.mxu0 0.0
  %597 = vmatpush1.msra.mxu0 0.0
  %598 = vmatprep.subr.mxu0 0.0
  %599 = vmatpush1.msra.mxu0 0.0
  %600 = vmatprep.subr.mxu0 0.0
  %601 = vmatpush1.msra.mxu0 0.0
  %602 = vmatprep.subr.mxu0 0.0
  %603 = vmatpush1.msra.mxu0 0.0
  %604 = vmatprep.subr.mxu0 0.0
  %605 = vmatpush1.msra.mxu0 0.0
  %606 = vmatprep.subr.mxu0 0.0
  %607 = vmatpush1.msra.mxu0 0.0
  %608 = vmatprep.subr.mxu0 0.0
  %609 = vmatpush1.msra.mxu0 0.0
  %610 = vmatprep.subr.mxu0 0.0
  %611 = vmatpush1.msra.mxu0 0.0
  %612 = vmatprep.subr.mxu0 0.0
  %613 = vmatpush1.msra.mxu0 0.0
  %614 = vmatprep.subr.mxu0 0.0
  %615 = vmatpush1.msra.mxu0 0.0
  %616 = vmatprep.subr.mxu0 0.0
  %617 = vmatpush1.msra.mxu0 0.0
  %618 = vmatprep.subr.mxu0 0.0
  %619 = vmatpush1.msra.mxu0 0.0
  %620 = vmatprep.subr.mxu0 0.0
  %621 = vmatpush1.msra.mxu0 0.0
  %622 = vmatprep.subr.mxu0 0.0
  %623 = vmatpush1.msra.mxu0 0.0
  %624 = vmatprep.subr.mxu0 0.0
  %625 = vmatpush1.msra.mxu0 0.0
  %626 = vmatprep.subr.mxu0 0.0
  %627 = vmatpush1.msra.mxu0 0.0
  %628 = vmatprep.subr.mxu0 0.0
  %629 = vmatpush1.msra.mxu0 0.0
  %630 = vmatprep.subr.mxu0 0.0
  %631 = vmatpush1.msra.mxu0 0.0
  %632 = vmatprep.subr.mxu0 0.0
  %633 = vmatpush1.msra.mxu0 0.0
  %634 = vmatprep.subr.mxu0 0.0
  %635 = vmatpush1.msra.mxu0 0.0
  %636 = vmatprep.subr.mxu0 0.0
  %637 = vmatpush1.msra.mxu0 0.0
  %638 = vmatprep.subr.mxu0 0.0
  %639 = vmatpush1.msra.mxu0 0.0
  %640 = vmatprep.subr.mxu0 0.0
  %641 = vmatpush1.msra.mxu0 0.0
  %642 = vmatprep.subr.mxu0 0.0
  %643 = vmatpush1.msra.mxu0 0.0
  %644 = vmatprep.subr.mxu0 0.0
  %645 = vmatpush1.msra.mxu0 0.0
  %646 = vmatprep.subr.mxu0 0.0
  %647 = vmatpush1.msra.mxu0 0.0
  %648 = vmatprep.subr.mxu0 0.0
  %649 = vmatpush1.msra.mxu0 0.0
  %650 = vmatprep.mubr.f32.mxu0 0.0
  %651 = vmatmul.mubr.f32.gmra.mrb[0].mxu0 %v584
  %v652 = vpop.f32.mrb[0].mxu0
  %v653 = vadd.f32 0.0, %v652
  %v654 = vpop.f32.mrb[0].mxu0
  %655 = vdwg.mxu0
  %v657 = vrot.slane %v653, 4
  %v659 = vadd.f32 %v259, %v657
  %v660 = vtanh.pop %v659
  %v661 = vxor.u32 %v659, 2147483648
  %v662 = vmul.f32 %v661, 1.442695
  %v663 = vpow.pop %v662
  %v664 = vadd.f32 %v663, 1.0
  %v665 = vrcp.pop %v664
  %v666 = vmul.f32 1.0, %v665
  %v667 = vsel %vm435, %v660, %v666
  %v669 = vrot.slane %v568, 6
  %v671 = vmul.f32 %v667, %v669
  %673 = vrot.lane.b32.xlu0 %v667, 64
  %v674 = vpop.permute.xlu0 %673
  %v676 = vmul.f32 %v667, %v674
  %678 = vrot.lane.b32.xlu0 %v676, 32
  %v679 = vpop.permute.xlu0 %678
  %v681 = vadd.f32 %v671, %v679
  %v682 = vtanh.pop %v681
  %684 = vrot.lane.b32.xlu0 %v682, 64
  %v685 = vpop.permute.xlu0 %684
  %v687 = vmul.f32 %v667, %v685
  %689 = vrot.lane.b32.xlu0 %v687, 32
  %v690 = vpop.permute.xlu0 %689
  %vm692 = vcmask 259076
  %693 = vst.msk [vmem:[#allocation2] sm:$0x30] %vm692, %v690
  %v694 = vrot.slane %v687, 4
  %695 = vrot.lane.b32.xlu0 %v694, 32
  %v696 = vpop.permute.xlu0 %695
  %v697 = vsel %vm185, %v696, 0
  %699 = vmatprep.subr.mxu0 0.0
  %700 = vmatpush1.msra.mxu0 %v353
  %701 = vmatprep.subr.mxu0 0.0
  %702 = vmatpush1.msra.mxu0 %v354
  %703 = vmatprep.subr.mxu0 0.0
  %704 = vmatpush1.msra.mxu0 %v355
  %705 = vmatprep.subr.mxu0 0.0
  %706 = vmatpush1.msra.mxu0 %v356
  %707 = vmatprep.subr.mxu0 0.0
  %708 = vmatpush1.msra.mxu0 0.0
  %709 = vmatprep.subr.mxu0 0.0
  %710 = vmatpush1.msra.mxu0 0.0
  %711 = vmatprep.subr.mxu0 0.0
  %712 = vmatpush1.msra.mxu0 0.0
  %713 = vmatprep.subr.mxu0 0.0
  %714 = vmatpush1.msra.mxu0 0.0
  %715 = vmatprep.subr.mxu0 0.0
  %716 = vmatpush1.msra.mxu0 0.0
  %717 = vmatprep.subr.mxu0 0.0
  %718 = vmatpush1.msra.mxu0 0.0
  %719 = vmatprep.subr.mxu0 0.0
  %720 = vmatpush1.msra.mxu0 0.0
  %721 = vmatprep.subr.mxu0 0.0
  %722 = vmatpush1.msra.mxu0 0.0
  %723 = vmatprep.subr.mxu0 0.0
  %724 = vmatpush1.msra.mxu0 0.0
  %725 = vmatprep.subr.mxu0 0.0
  %726 = vmatpush1.msra.mxu0 0.0
  %727 = vmatprep.subr.mxu0 0.0
  %728 = vmatpush1.msra.mxu0 0.0
  %729 = vmatprep.subr.mxu0 0.0
  %730 = vmatpush1.msra.mxu0 0.0
  %731 = vmatprep.subr.mxu0 0.0
  %732 = vmatpush1.msra.mxu0 0.0
  %733 = vmatprep.subr.mxu0 0.0
  %734 = vmatpush1.msra.mxu0 0.0
  %735 = vmatprep.subr.mxu0 0.0
  %736 = vmatpush1.msra.mxu0 0.0
  %737 = vmatprep.subr.mxu0 0.0
  %738 = vmatpush1.msra.mxu0 0.0
  %739 = vmatprep.subr.mxu0 0.0
  %740 = vmatpush1.msra.mxu0 0.0
  %741 = vmatprep.subr.mxu0 0.0
  %742 = vmatpush1.msra.mxu0 0.0
  %743 = vmatprep.subr.mxu0 0.0
  %744 = vmatpush1.msra.mxu0 0.0
  %745 = vmatprep.subr.mxu0 0.0
  %746 = vmatpush1.msra.mxu0 0.0
  %747 = vmatprep.subr.mxu0 0.0
  %748 = vmatpush1.msra.mxu0 0.0
  %749 = vmatprep.subr.mxu0 0.0
  %750 = vmatpush1.msra.mxu0 0.0
  %751 = vmatprep.subr.mxu0 0.0
  %752 = vmatpush1.msra.mxu0 0.0
  %753 = vmatprep.subr.mxu0 0.0
  %754 = vmatpush1.msra.mxu0 0.0
  %755 = vmatprep.subr.mxu0 0.0
  %756 = vmatpush1.msra.mxu0 0.0
  %757 = vmatprep.subr.mxu0 0.0
  %758 = vmatpush1.msra.mxu0 0.0
  %759 = vmatprep.subr.mxu0 0.0
  %760 = vmatpush1.msra.mxu0 0.0
  %761 = vmatprep.subr.mxu0 0.0
  %762 = vmatpush1.msra.mxu0 0.0
  %763 = vmatprep.mubr.f32.mxu0 0.0
  %764 = vmatmul.mubr.f32.gmra.mrb[0].mxu0 %v697
  %v765 = vpop.f32.mrb[0].mxu0
  %v766 = vadd.f32 0.0, %v765
  %v767 = vpop.f32.mrb[0].mxu0
  %768 = vdwg.mxu0
  %v770 = vrot.slane %v766, 2
  %v772 = vadd.f32 %v259, %v770
  %v773 = vtanh.pop %v772
  %v774 = vxor.u32 %v772, 2147483648
  %v775 = vmul.f32 %v774, 1.442695
  %v776 = vpow.pop %v775
  %v777 = vadd.f32 %v776, 1.0
  %v778 = vrcp.pop %v777
  %v779 = vmul.f32 1.0, %v778
  %v780 = vsel %vm435, %v773, %v779
  %v782 = vrot.slane %v681, 6
  %v784 = vmul.f32 %v780, %v782
  %786 = vrot.lane.b32.xlu0 %v780, 64
  %v787 = vpop.permute.xlu0 %786
  %v789 = vmul.f32 %v780, %v787
  %791 = vrot.lane.b32.xlu0 %v789, 32
  %v792 = vpop.permute.xlu0 %791
  %v794 = vadd.f32 %v784, %v792
  %v795 = vtanh.pop %v794
  %797 = vrot.lane.b32.xlu0 %v795, 64
  %v798 = vpop.permute.xlu0 %797
  %v800 = vmul.f32 %v780, %v798
  %802 = vrot.lane.b32.xlu0 %v800, 32
  %v803 = vpop.permute.xlu0 %802
  %vm805 = vcmask 261126
  %806 = vst.msk [vmem:[#allocation2] sm:$0xc0] %vm805, %v803
  %v807 = vrot.slane %v800, 6
  %808 = vrot.lane.b32.xlu0 %v807, 32
  %v809 = vpop.permute.xlu0 %808
  %v810 = vsel %vm185, %v809, 0
  %812 = vmatprep.subr.mxu0 0.0
  %813 = vmatpush1.msra.mxu0 %v353
  %814 = vmatprep.subr.mxu0 0.0
  %815 = vmatpush1.msra.mxu0 %v354
  %816 = vmatprep.subr.mxu0 0.0
  %817 = vmatpush1.msra.mxu0 %v355
  %818 = vmatprep.subr.mxu0 0.0
  %819 = vmatpush1.msra.mxu0 %v356
  %820 = vmatprep.subr.mxu0 0.0
  %821 = vmatpush1.msra.mxu0 0.0
  %822 = vmatprep.subr.mxu0 0.0
  %823 = vmatpush1.msra.mxu0 0.0
  %824 = vmatprep.subr.mxu0 0.0
  %825 = vmatpush1.msra.mxu0 0.0
  %826 = vmatprep.subr.mxu0 0.0
  %827 = vmatpush1.msra.mxu0 0.0
  %828 = vmatprep.subr.mxu0 0.0
  %829 = vmatpush1.msra.mxu0 0.0
  %830 = vmatprep.subr.mxu0 0.0
  %831 = vmatpush1.msra.mxu0 0.0
  %832 = vmatprep.subr.mxu0 0.0
  %833 = vmatpush1.msra.mxu0 0.0
  %834 = vmatprep.subr.mxu0 0.0
  %835 = vmatpush1.msra.mxu0 0.0
  %836 = vmatprep.subr.mxu0 0.0
  %837 = vmatpush1.msra.mxu0 0.0
  %838 = vmatprep.subr.mxu0 0.0
  %839 = vmatpush1.msra.mxu0 0.0
  %840 = vmatprep.subr.mxu0 0.0
  %841 = vmatpush1.msra.mxu0 0.0
  %842 = vmatprep.subr.mxu0 0.0
  %843 = vmatpush1.msra.mxu0 0.0
  %844 = vmatprep.subr.mxu0 0.0
  %845 = vmatpush1.msra.mxu0 0.0
  %846 = vmatprep.subr.mxu0 0.0
  %847 = vmatpush1.msra.mxu0 0.0
  %848 = vmatprep.subr.mxu0 0.0
  %849 = vmatpush1.msra.mxu0 0.0
  %850 = vmatprep.subr.mxu0 0.0
  %851 = vmatpush1.msra.mxu0 0.0
  %852 = vmatprep.subr.mxu0 0.0
  %853 = vmatpush1.msra.mxu0 0.0
  %854 = vmatprep.subr.mxu0 0.0
  %855 = vmatpush1.msra.mxu0 0.0
  %856 = vmatprep.subr.mxu0 0.0
  %857 = vmatpush1.msra.mxu0 0.0
  %858 = vmatprep.subr.mxu0 0.0
  %859 = vmatpush1.msra.mxu0 0.0
  %860 = vmatprep.subr.mxu0 0.0
  %861 = vmatpush1.msra.mxu0 0.0
  %862 = vmatprep.subr.mxu0 0.0
  %863 = vmatpush1.msra.mxu0 0.0
  %864 = vmatprep.subr.mxu0 0.0
  %865 = vmatpush1.msra.mxu0 0.0
  %866 = vmatprep.subr.mxu0 0.0
  %867 = vmatpush1.msra.mxu0 0.0
  %868 = vmatprep.subr.mxu0 0.0
  %869 = vmatpush1.msra.mxu0 0.0
  %870 = vmatprep.subr.mxu0 0.0
  %871 = vmatpush1.msra.mxu0 0.0
  %872 = vmatprep.subr.mxu0 0.0
  %873 = vmatpush1.msra.mxu0 0.0
  %874 = vmatprep.subr.mxu0 0.0
  %875 = vmatpush1.msra.mxu0 0.0
  %876 = vmatprep.mubr.f32.mxu0 0.0
  %877 = vmatmul.mubr.f32.gmra.mrb[0].mxu0 %v810
  %v878 = vpop.f32.mrb[0].mxu0
  %v879 = vadd.f32 0.0, %v878
  %v880 = vpop.f32.mrb[0].mxu0
  %881 = vdwg.mxu0
  %v882 = vadd.f32 %v264, %v879
  %v883 = vtanh.pop %v882
  %v884 = vxor.u32 %v882, 2147483648
  %v885 = vmul.f32 %v884, 1.442695
  %v886 = vpow.pop %v885
  %v887 = vadd.f32 %v886, 1.0
  %v888 = vrcp.pop %v887
  %v889 = vmul.f32 1.0, %v888
  %v890 = vsel %vm435, %v883, %v889
  %v892 = vrot.slane %v794, 6
  %v894 = vmul.f32 %v890, %v892
  %896 = vrot.lane.b32.xlu0 %v890, 64
  %v897 = vpop.permute.xlu0 %896
  %v899 = vmul.f32 %v890, %v897
  %901 = vrot.lane.b32.xlu0 %v899, 32
  %v902 = vpop.permute.xlu0 %901
  %v904 = vadd.f32 %v894, %v902
  %v905 = vtanh.pop %v904
  %907 = vrot.lane.b32.xlu0 %v905, 64
  %v908 = vpop.permute.xlu0 %907
  %v910 = vmul.f32 %v890, %v908
  %912 = vrot.lane.b32.xlu0 %v910, 32
  %v913 = vpop.permute.xlu0 %912
  %915 = vst.msk [vmem:[#allocation2 + $0x8] sm:$0x3] %vm469, %v913
  %v916 = vsel %vm185, %v913, 0
  %918 = vmatprep.subr.mxu0 0.0
  %919 = vmatpush1.msra.mxu0 %v353
  %920 = vmatprep.subr.mxu0 0.0
  %921 = vmatpush1.msra.mxu0 %v354
  %922 = vmatprep.subr.mxu0 0.0
  %923 = vmatpush1.msra.mxu0 %v355
  %924 = vmatprep.subr.mxu0 0.0
  %925 = vmatpush1.msra.mxu0 %v356
  %926 = vmatprep.subr.mxu0 0.0
  %927 = vmatpush1.msra.mxu0 0.0
  %928 = vmatprep.subr.mxu0 0.0
  %929 = vmatpush1.msra.mxu0 0.0
  %930 = vmatprep.subr.mxu0 0.0
  %931 = vmatpush1.msra.mxu0 0.0
  %932 = vmatprep.subr.mxu0 0.0
  %933 = vmatpush1.msra.mxu0 0.0
  %934 = vmatprep.subr.mxu0 0.0
  %935 = vmatpush1.msra.mxu0 0.0
  %936 = vmatprep.subr.mxu0 0.0
  %937 = vmatpush1.msra.mxu0 0.0
  %938 = vmatprep.subr.mxu0 0.0
  %939 = vmatpush1.msra.mxu0 0.0
  %940 = vmatprep.subr.mxu0 0.0
  %941 = vmatpush1.msra.mxu0 0.0
  %942 = vmatprep.subr.mxu0 0.0
  %943 = vmatpush1.msra.mxu0 0.0
  %944 = vmatprep.subr.mxu0 0.0
  %945 = vmatpush1.msra.mxu0 0.0
  %946 = vmatprep.subr.mxu0 0.0
  %947 = vmatpush1.msra.mxu0 0.0
  %948 = vmatprep.subr.mxu0 0.0
  %949 = vmatpush1.msra.mxu0 0.0
  %950 = vmatprep.subr.mxu0 0.0
  %951 = vmatpush1.msra.mxu0 0.0
  %952 = vmatprep.subr.mxu0 0.0
  %953 = vmatpush1.msra.mxu0 0.0
  %954 = vmatprep.subr.mxu0 0.0
  %955 = vmatpush1.msra.mxu0 0.0
  %956 = vmatprep.subr.mxu0 0.0
  %957 = vmatpush1.msra.mxu0 0.0
  %958 = vmatprep.subr.mxu0 0.0
  %959 = vmatpush1.msra.mxu0 0.0
  %960 = vmatprep.subr.mxu0 0.0
  %961 = vmatpush1.msra.mxu0 0.0
  %962 = vmatprep.subr.mxu0 0.0
  %963 = vmatpush1.msra.mxu0 0.0
  %964 = vmatprep.subr.mxu0 0.0
  %965 = vmatpush1.msra.mxu0 0.0
  %966 = vmatprep.subr.mxu0 0.0
  %967 = vmatpush1.msra.mxu0 0.0
  %968 = vmatprep.subr.mxu0 0.0
  %969 = vmatpush1.msra.mxu0 0.0
  %970 = vmatprep.subr.mxu0 0.0
  %971 = vmatpush1.msra.mxu0 0.0
  %972 = vmatprep.subr.mxu0 0.0
  %973 = vmatpush1.msra.mxu0 0.0
  %974 = vmatprep.subr.mxu0 0.0
  %975 = vmatpush1.msra.mxu0 0.0
  %976 = vmatprep.subr.mxu0 0.0
  %977 = vmatpush1.msra.mxu0 0.0
  %978 = vmatprep.subr.mxu0 0.0
  %979 = vmatpush1.msra.mxu0 0.0
  %980 = vmatprep.subr.mxu0 0.0
  %981 = vmatpush1.msra.mxu0 0.0
  %982 = vmatprep.mubr.f32.mxu0 0.0
  %983 = vmatmul.mubr.f32.gmra.mrb[0].mxu0 %v916
  %v984 = vpop.f32.mrb[0].mxu0
  %v985 = vadd.f32 0.0, %v984
  %v986 = vpop.f32.mrb[0].mxu0
  %987 = vdwg.mxu0
  %v989 = vrot.slane %v985, 6
  %v991 = vadd.f32 %v264, %v989
  %v992 = vtanh.pop %v991
  %v993 = vxor.u32 %v991, 2147483648
  %v994 = vmul.f32 %v993, 1.442695
  %v995 = vpow.pop %v994
  %v996 = vadd.f32 %v995, 1.0
  %v997 = vrcp.pop %v996
  %v998 = vmul.f32 1.0, %v997
  %v999 = vsel %vm435, %v992, %v998
  %v1001 = vrot.slane %v904, 6
  %v1003 = vmul.f32 %v999, %v1001
  %1005 = vrot.lane.b32.xlu0 %v999, 64
  %v1006 = vpop.permute.xlu0 %1005
  %v1008 = vmul.f32 %v999, %v1006
  %1010 = vrot.lane.b32.xlu0 %v1008, 32
  %v1011 = vpop.permute.xlu0 %1010
  %v1013 = vadd.f32 %v1003, %v1011
  %v1014 = vtanh.pop %v1013
  %1016 = vrot.lane.b32.xlu0 %v1014, 64
  %v1017 = vpop.permute.xlu0 %1016
  %v1019 = vmul.f32 %v999, %v1017
  %1021 = vrot.lane.b32.xlu0 %v1019, 32
  %v1022 = vpop.permute.xlu0 %1021
  %1024 = vst.msk [vmem:[#allocation2 + $0x8] sm:$0xc] %vm579, %v1022
  %v1025 = vrot.slane %v1019, 2
  %1026 = vrot.lane.b32.xlu0 %v1025, 32
  %v1027 = vpop.permute.xlu0 %1026
  %v1028 = vsel %vm185, %v1027, 0
  %1030 = vmatprep.subr.mxu0 0.0
  %1031 = vmatpush1.msra.mxu0 %v353
  %1032 = vmatprep.subr.mxu0 0.0
  %1033 = vmatpush1.msra.mxu0 %v354
  %1034 = vmatprep.subr.mxu0 0.0
  %1035 = vmatpush1.msra.mxu0 %v355
  %1036 = vmatprep.subr.mxu0 0.0
  %1037 = vmatpush1.msra.mxu0 %v356
  %1038 = vmatprep.subr.mxu0 0.0
  %1039 = vmatpush1.msra.mxu0 0.0
  %1040 = vmatprep.subr.mxu0 0.0
  %1041 = vmatpush1.msra.mxu0 0.0
  %1042 = vmatprep.subr.mxu0 0.0
  %1043 = vmatpush1.msra.mxu0 0.0
  %1044 = vmatprep.subr.mxu0 0.0
  %1045 = vmatpush1.msra.mxu0 0.0
  %1046 = vmatprep.subr.mxu0 0.0
  %1047 = vmatpush1.msra.mxu0 0.0
  %1048 = vmatprep.subr.mxu0 0.0
  %1049 = vmatpush1.msra.mxu0 0.0
  %1050 = vmatprep.subr.mxu0 0.0
  %1051 = vmatpush1.msra.mxu0 0.0
  %1052 = vmatprep.subr.mxu0 0.0
  %1053 = vmatpush1.msra.mxu0 0.0
  %1054 = vmatprep.subr.mxu0 0.0
  %1055 = vmatpush1.msra.mxu0 0.0
  %1056 = vmatprep.subr.mxu0 0.0
  %1057 = vmatpush1.msra.mxu0 0.0
  %1058 = vmatprep.subr.mxu0 0.0
  %1059 = vmatpush1.msra.mxu0 0.0
  %1060 = vmatprep.subr.mxu0 0.0
  %1061 = vmatpush1.msra.mxu0 0.0
  %1062 = vmatprep.subr.mxu0 0.0
  %1063 = vmatpush1.msra.mxu0 0.0
  %1064 = vmatprep.subr.mxu0 0.0
  %1065 = vmatpush1.msra.mxu0 0.0
  %1066 = vmatprep.subr.mxu0 0.0
  %1067 = vmatpush1.msra.mxu0 0.0
  %1068 = vmatprep.subr.mxu0 0.0
  %1069 = vmatpush1.msra.mxu0 0.0
  %1070 = vmatprep.subr.mxu0 0.0
  %1071 = vmatpush1.msra.mxu0 0.0
  %1072 = vmatprep.subr.mxu0 0.0
  %1073 = vmatpush1.msra.mxu0 0.0
  %1074 = vmatprep.subr.mxu0 0.0
  %1075 = vmatpush1.msra.mxu0 0.0
  %1076 = vmatprep.subr.mxu0 0.0
  %1077 = vmatpush1.msra.mxu0 0.0
  %1078 = vmatprep.subr.mxu0 0.0
  %1079 = vmatpush1.msra.mxu0 0.0
  %1080 = vmatprep.subr.mxu0 0.0
  %1081 = vmatpush1.msra.mxu0 0.0
  %1082 = vmatprep.subr.mxu0 0.0
  %1083 = vmatpush1.msra.mxu0 0.0
  %1084 = vmatprep.subr.mxu0 0.0
  %1085 = vmatpush1.msra.mxu0 0.0
  %1086 = vmatprep.subr.mxu0 0.0
  %1087 = vmatpush1.msra.mxu0 0.0
  %1088 = vmatprep.subr.mxu0 0.0
  %1089 = vmatpush1.msra.mxu0 0.0
  %1090 = vmatprep.subr.mxu0 0.0
  %1091 = vmatpush1.msra.mxu0 0.0
  %1092 = vmatprep.subr.mxu0 0.0
  %1093 = vmatpush1.msra.mxu0 0.0
  %1094 = vmatprep.mubr.f32.mxu0 0.0
  %1095 = vmatmul.mubr.f32.gmra.mrb[0].mxu0 %v1028
  %v1096 = vpop.f32.mrb[0].mxu0
  %v1097 = vadd.f32 0.0, %v1096
  %v1098 = vpop.f32.mrb[0].mxu0
  %1099 = vdwg.mxu0
  %v1101 = vrot.slane %v1097, 4
  %v1103 = vadd.f32 %v264, %v1101
  %v1104 = vtanh.pop %v1103
  %v1105 = vxor.u32 %v1103, 2147483648
  %v1106 = vmul.f32 %v1105, 1.442695
  %v1107 = vpow.pop %v1106
  %v1108 = vadd.f32 %v1107, 1.0
  %v1109 = vrcp.pop %v1108
  %v1110 = vmul.f32 1.0, %v1109
  %v1111 = vsel %vm435, %v1104, %v1110
  %v1113 = vrot.slane %v1013, 6
  %v1115 = vmul.f32 %v1111, %v1113
  %1117 = vrot.lane.b32.xlu0 %v1111, 64
  %v1118 = vpop.permute.xlu0 %1117
  %v1120 = vmul.f32 %v1111, %v1118
  %1122 = vrot.lane.b32.xlu0 %v1120, 32
  %v1123 = vpop.permute.xlu0 %1122
  %v1125 = vadd.f32 %v1115, %v1123
  %v1126 = vtanh.pop %v1125
  %1128 = vrot.lane.b32.xlu0 %v1126, 64
  %v1129 = vpop.permute.xlu0 %1128
  %v1131 = vmul.f32 %v1111, %v1129
  %1133 = vrot.lane.b32.xlu0 %v1131, 32
  %v1134 = vpop.permute.xlu0 %1133
  %1136 = vst.msk [vmem:[#allocation2 + $0x8] sm:$0x30] %vm692, %v1134
  %v1137 = vrot.slane %v1131, 4
  %1138 = vrot.lane.b32.xlu0 %v1137, 32
  %v1139 = vpop.permute.xlu0 %1138
  %v1140 = vsel %vm185, %v1139, 0
  %1142 = vmatprep.subr.mxu0 0.0
  %1143 = vmatpush1.msra.mxu0 %v353
  %1144 = vmatprep.subr.mxu0 0.0
  %1145 = vmatpush1.msra.mxu0 %v354
  %1146 = vmatprep.subr.mxu0 0.0
  %1147 = vmatpush1.msra.mxu0 %v355
  %1148 = vmatprep.subr.mxu0 0.0
  %1149 = vmatpush1.msra.mxu0 %v356
  %1150 = vmatprep.subr.mxu0 0.0
  %1151 = vmatpush1.msra.mxu0 0.0
  %1152 = vmatprep.subr.mxu0 0.0
  %1153 = vmatpush1.msra.mxu0 0.0
  %1154 = vmatprep.subr.mxu0 0.0
  %1155 = vmatpush1.msra.mxu0 0.0
  %1156 = vmatprep.subr.mxu0 0.0
  %1157 = vmatpush1.msra.mxu0 0.0
  %1158 = vmatprep.subr.mxu0 0.0
  %1159 = vmatpush1.msra.mxu0 0.0
  %1160 = vmatprep.subr.mxu0 0.0
  %1161 = vmatpush1.msra.mxu0 0.0
  %1162 = vmatprep.subr.mxu0 0.0
  %1163 = vmatpush1.msra.mxu0 0.0
  %1164 = vmatprep.subr.mxu0 0.0
  %1165 = vmatpush1.msra.mxu0 0.0
  %1166 = vmatprep.subr.mxu0 0.0
  %1167 = vmatpush1.msra.mxu0 0.0
  %1168 = vmatprep.subr.mxu0 0.0
  %1169 = vmatpush1.msra.mxu0 0.0
  %1170 = vmatprep.subr.mxu0 0.0
  %1171 = vmatpush1.msra.mxu0 0.0
  %1172 = vmatprep.subr.mxu0 0.0
  %1173 = vmatpush1.msra.mxu0 0.0
  %1174 = vmatprep.subr.mxu0 0.0
  %1175 = vmatpush1.msra.mxu0 0.0
  %1176 = vmatprep.subr.mxu0 0.0
  %1177 = vmatpush1.msra.mxu0 0.0
  %1178 = vmatprep.subr.mxu0 0.0
  %1179 = vmatpush1.msra.mxu0 0.0
  %1180 = vmatprep.subr.mxu0 0.0
  %1181 = vmatpush1.msra.mxu0 0.0
  %1182 = vmatprep.subr.mxu0 0.0
  %1183 = vmatpush1.msra.mxu0 0.0
  %1184 = vmatprep.subr.mxu0 0.0
  %1185 = vmatpush1.msra.mxu0 0.0
  %1186 = vmatprep.subr.mxu0 0.0
  %1187 = vmatpush1.msra.mxu0 0.0
  %1188 = vmatprep.subr.mxu0 0.0
  %1189 = vmatpush1.msra.mxu0 0.0
  %1190 = vmatprep.subr.mxu0 0.0
  %1191 = vmatpush1.msra.mxu0 0.0
  %1192 = vmatprep.subr.mxu0 0.0
  %1193 = vmatpush1.msra.mxu0 0.0
  %1194 = vmatprep.subr.mxu0 0.0
  %1195 = vmatpush1.msra.mxu0 0.0
  %1196 = vmatprep.subr.mxu0 0.0
  %1197 = vmatpush1.msra.mxu0 0.0
  %1198 = vmatprep.subr.mxu0 0.0
  %1199 = vmatpush1.msra.mxu0 0.0
  %1200 = vmatprep.subr.mxu0 0.0
  %1201 = vmatpush1.msra.mxu0 0.0
  %1202 = vmatprep.subr.mxu0 0.0
  %1203 = vmatpush1.msra.mxu0 0.0
  %1204 = vmatprep.subr.mxu0 0.0
  %1205 = vmatpush1.msra.mxu0 0.0
  %1206 = vmatprep.mubr.f32.mxu0 0.0
  %1207 = vmatmul.mubr.f32.gmra.mrb[0].mxu0 %v1140
  %v1208 = vpop.f32.mrb[0].mxu0
  %v1209 = vadd.f32 0.0, %v1208
  %v1210 = vpop.f32.mrb[0].mxu0
  %1211 = vdwg.mxu0
  %v1213 = vrot.slane %v1209, 2
  %v1215 = vadd.f32 %v264, %v1213
  %v1216 = vtanh.pop %v1215
  %v1217 = vxor.u32 %v1215, 2147483648
  %v1218 = vmul.f32 %v1217, 1.442695
  %v1219 = vpow.pop %v1218
  %v1220 = vadd.f32 %v1219, 1.0
  %v1221 = vrcp.pop %v1220
  %v1222 = vmul.f32 1.0, %v1221
  %v1223 = vsel %vm435, %v1216, %v1222
  %v1225 = vrot.slane %v1125, 6
  %v1227 = vmul.f32 %v1223, %v1225
  %1229 = vrot.lane.b32.xlu0 %v1223, 64
  %v1230 = vpop.permute.xlu0 %1229
  %v1232 = vmul.f32 %v1223, %v1230
  %1234 = vrot.lane.b32.xlu0 %v1232, 32
  %v1235 = vpop.permute.xlu0 %1234
  %v1237 = vadd.f32 %v1227, %v1235
  %v1238 = vtanh.pop %v1237
  %1240 = vrot.lane.b32.xlu0 %v1238, 64
  %v1241 = vpop.permute.xlu0 %1240
  %v1243 = vmul.f32 %v1223, %v1241
  %1245 = vrot.lane.b32.xlu0 %v1243, 32
  %v1246 = vpop.permute.xlu0 %1245
  %1248 = vst.msk [vmem:[#allocation2 + $0x8] sm:$0xc0] %vm805, %v1246
  %v1249 = vld [vmem:[%s8] sm:$0xff]
  %v1250 = vld [vmem:[%s8 + $0x8] sm:$0xff]
  %v1251 = vld [vmem:[%s8 + $0x10] sm:$0xff]
  %v1252 = vld [vmem:[%s8 + $0x18] sm:$0xff]
  %s1253 = scalar_lea.vmem %s2, 2
  %v1254 = vld [vmem:[%s1253] sm:$0x3]
  %s1255 = scalar_lea.vmem %s3, 2
  %v1256 = vld [vmem:[%s1255] sm:$0x3]
  %v1258 = vsel %vm185, %v1254, 0
  %1260 = vmatprep.subr.mxu0 0.0
  %1261 = vmatpush1.msra.mxu0 %v1249
  %1262 = vmatprep.subr.mxu0 0.0
  %1263 = vmatpush1.msra.mxu0 %v1250
  %1264 = vmatprep.subr.mxu0 0.0
  %1265 = vmatpush1.msra.mxu0 %v1251
  %1266 = vmatprep.subr.mxu0 0.0
  %1267 = vmatpush1.msra.mxu0 %v1252
  %1268 = vmatprep.subr.mxu0 0.0
  %1269 = vmatpush1.msra.mxu0 0.0
  %1270 = vmatprep.subr.mxu0 0.0
  %1271 = vmatpush1.msra.mxu0 0.0
  %1272 = vmatprep.subr.mxu0 0.0
  %1273 = vmatpush1.msra.mxu0 0.0
  %1274 = vmatprep.subr.mxu0 0.0
  %1275 = vmatpush1.msra.mxu0 0.0
  %1276 = vmatprep.subr.mxu0 0.0
  %1277 = vmatpush1.msra.mxu0 0.0
  %1278 = vmatprep.subr.mxu0 0.0
  %1279 = vmatpush1.msra.mxu0 0.0
  %1280 = vmatprep.subr.mxu0 0.0
  %1281 = vmatpush1.msra.mxu0 0.0
  %1282 = vmatprep.subr.mxu0 0.0
  %1283 = vmatpush1.msra.mxu0 0.0
  %1284 = vmatprep.subr.mxu0 0.0
  %1285 = vmatpush1.msra.mxu0 0.0
  %1286 = vmatprep.subr.mxu0 0.0
  %1287 = vmatpush1.msra.mxu0 0.0
  %1288 = vmatprep.subr.mxu0 0.0
  %1289 = vmatpush1.msra.mxu0 0.0
  %1290 = vmatprep.subr.mxu0 0.0
  %1291 = vmatpush1.msra.mxu0 0.0
  %1292 = vmatprep.subr.mxu0 0.0
  %1293 = vmatpush1.msra.mxu0 0.0
  %1294 = vmatprep.subr.mxu0 0.0
  %1295 = vmatpush1.msra.mxu0 0.0
  %1296 = vmatprep.subr.mxu0 0.0
  %1297 = vmatpush1.msra.mxu0 0.0
  %1298 = vmatprep.subr.mxu0 0.0
  %1299 = vmatpush1.msra.mxu0 0.0
  %1300 = vmatprep.subr.mxu0 0.0
  %1301 = vmatpush1.msra.mxu0 0.0
  %1302 = vmatprep.subr.mxu0 0.0
  %1303 = vmatpush1.msra.mxu0 0.0
  %1304 = vmatprep.subr.mxu0 0.0
  %1305 = vmatpush1.msra.mxu0 0.0
  %1306 = vmatprep.subr.mxu0 0.0
  %1307 = vmatpush1.msra.mxu0 0.0
  %1308 = vmatprep.subr.mxu0 0.0
  %1309 = vmatpush1.msra.mxu0 0.0
  %1310 = vmatprep.subr.mxu0 0.0
  %1311 = vmatpush1.msra.mxu0 0.0
  %1312 = vmatprep.subr.mxu0 0.0
  %1313 = vmatpush1.msra.mxu0 0.0
  %1314 = vmatprep.subr.mxu0 0.0
  %1315 = vmatpush1.msra.mxu0 0.0
  %1316 = vmatprep.subr.mxu0 0.0
  %1317 = vmatpush1.msra.mxu0 0.0
  %1318 = vmatprep.subr.mxu0 0.0
  %1319 = vmatpush1.msra.mxu0 0.0
  %1320 = vmatprep.subr.mxu0 0.0
  %1321 = vmatpush1.msra.mxu0 0.0
  %1322 = vmatprep.subr.mxu0 0.0
  %1323 = vmatpush1.msra.mxu0 0.0
  %1324 = vmatprep.mubr.f32.mxu0 0.0
  %1325 = vmatmul.mubr.f32.gmra.mrb[0].mxu0 %v1258
  %v1326 = vpop.f32.mrb[0].mxu0
  %v1327 = vadd.f32 0.0, %v1326
  %v1328 = vpop.f32.mrb[0].mxu0
  %1329 = vdwg.mxu0
  %v1331 = vrot.slane %v1327, 2
  %v1333 = vadd.f32 %v350, %v1331
  %v1334 = vtanh.pop %v1333
  %v1335 = vxor.u32 %v1333, 2147483648
  %v1336 = vmul.f32 %v1335, 1.442695
  %v1337 = vpow.pop %v1336
  %v1338 = vadd.f32 %v1337, 1.0
  %v1339 = vrcp.pop %v1338
  %v1340 = vmul.f32 1.0, %v1339
  %v1341 = vsel %vm435, %v1334, %v1340
  %v1343 = vrot.slane %v1256, 2
  %1344 = vrot.lane.b32.xlu0 %v1343, 32
  %v1345 = vpop.permute.xlu0 %1344
  %v1347 = vmul.f32 %v1341, %v1345
  %1349 = vrot.lane.b32.xlu0 %v1341, 64
  %v1350 = vpop.permute.xlu0 %1349
  %v1352 = vmul.f32 %v1341, %v1350
  %1354 = vrot.lane.b32.xlu0 %v1352, 32
  %v1355 = vpop.permute.xlu0 %1354
  %v1357 = vadd.f32 %v1347, %v1355
  %v1358 = vtanh.pop %v1357
  %1360 = vrot.lane.b32.xlu0 %v1358, 64
  %v1361 = vpop.permute.xlu0 %1360
  %v1363 = vmul.f32 %v1341, %v1361
  %1365 = vrot.lane.b32.xlu0 %v1363, 32
  %v1366 = vpop.permute.xlu0 %1365
  %1368 = vst.msk [vmem:[#allocation3 + $0x8] sm:$0xc0] %vm805, %v1366
  %v1369 = vrot.slane %v1363, 6
  %1370 = vrot.lane.b32.xlu0 %v1369, 32
  %v1371 = vpop.permute.xlu0 %1370
  %v1372 = vsel %vm185, %v1371, 0
  %1374 = vmatprep.subr.mxu0 0.0
  %1375 = vmatpush1.msra.mxu0 %v1249
  %1376 = vmatprep.subr.mxu0 0.0
  %1377 = vmatpush1.msra.mxu0 %v1250
  %1378 = vmatprep.subr.mxu0 0.0
  %1379 = vmatpush1.msra.mxu0 %v1251
  %1380 = vmatprep.subr.mxu0 0.0
  %1381 = vmatpush1.msra.mxu0 %v1252
  %1382 = vmatprep.subr.mxu0 0.0
  %1383 = vmatpush1.msra.mxu0 0.0
  %1384 = vmatprep.subr.mxu0 0.0
  %1385 = vmatpush1.msra.mxu0 0.0
  %1386 = vmatprep.subr.mxu0 0.0
  %1387 = vmatpush1.msra.mxu0 0.0
  %1388 = vmatprep.subr.mxu0 0.0
  %1389 = vmatpush1.msra.mxu0 0.0
  %1390 = vmatprep.subr.mxu0 0.0
  %1391 = vmatpush1.msra.mxu0 0.0
  %1392 = vmatprep.subr.mxu0 0.0
  %1393 = vmatpush1.msra.mxu0 0.0
  %1394 = vmatprep.subr.mxu0 0.0
  %1395 = vmatpush1.msra.mxu0 0.0
  %1396 = vmatprep.subr.mxu0 0.0
  %1397 = vmatpush1.msra.mxu0 0.0
  %1398 = vmatprep.subr.mxu0 0.0
  %1399 = vmatpush1.msra.mxu0 0.0
  %1400 = vmatprep.subr.mxu0 0.0
  %1401 = vmatpush1.msra.mxu0 0.0
  %1402 = vmatprep.subr.mxu0 0.0
  %1403 = vmatpush1.msra.mxu0 0.0
  %1404 = vmatprep.subr.mxu0 0.0
  %1405 = vmatpush1.msra.mxu0 0.0
  %1406 = vmatprep.subr.mxu0 0.0
  %1407 = vmatpush1.msra.mxu0 0.0
  %1408 = vmatprep.subr.mxu0 0.0
  %1409 = vmatpush1.msra.mxu0 0.0
  %1410 = vmatprep.subr.mxu0 0.0
  %1411 = vmatpush1.msra.mxu0 0.0
  %1412 = vmatprep.subr.mxu0 0.0
  %1413 = vmatpush1.msra.mxu0 0.0
  %1414 = vmatprep.subr.mxu0 0.0
  %1415 = vmatpush1.msra.mxu0 0.0
  %1416 = vmatprep.subr.mxu0 0.0
  %1417 = vmatpush1.msra.mxu0 0.0
  %1418 = vmatprep.subr.mxu0 0.0
  %1419 = vmatpush1.msra.mxu0 0.0
  %1420 = vmatprep.subr.mxu0 0.0
  %1421 = vmatpush1.msra.mxu0 0.0
  %1422 = vmatprep.subr.mxu0 0.0
  %1423 = vmatpush1.msra.mxu0 0.0
  %1424 = vmatprep.subr.mxu0 0.0
  %1425 = vmatpush1.msra.mxu0 0.0
  %1426 = vmatprep.subr.mxu0 0.0
  %1427 = vmatpush1.msra.mxu0 0.0
  %1428 = vmatprep.subr.mxu0 0.0
  %1429 = vmatpush1.msra.mxu0 0.0
  %1430 = vmatprep.subr.mxu0 0.0
  %1431 = vmatpush1.msra.mxu0 0.0
  %1432 = vmatprep.subr.mxu0 0.0
  %1433 = vmatpush1.msra.mxu0 0.0
  %1434 = vmatprep.subr.mxu0 0.0
  %1435 = vmatpush1.msra.mxu0 0.0
  %1436 = vmatprep.subr.mxu0 0.0
  %1437 = vmatpush1.msra.mxu0 0.0
  %1438 = vmatprep.mubr.f32.mxu0 0.0
  %1439 = vmatmul.mubr.f32.gmra.mrb[0].mxu0 %v1372
  %v1440 = vpop.f32.mrb[0].mxu0
  %v1441 = vadd.f32 0.0, %v1440
  %v1442 = vpop.f32.mrb[0].mxu0
  %1443 = vdwg.mxu0
  %v1445 = vrot.slane %v1441, 4
  %v1447 = vadd.f32 %v350, %v1445
  %v1448 = vtanh.pop %v1447
  %v1449 = vxor.u32 %v1447, 2147483648
  %v1450 = vmul.f32 %v1449, 1.442695
  %v1451 = vpow.pop %v1450
  %v1452 = vadd.f32 %v1451, 1.0
  %v1453 = vrcp.pop %v1452
  %v1454 = vmul.f32 1.0, %v1453
  %v1455 = vsel %vm435, %v1448, %v1454
  %v1457 = vrot.slane %v1357, 2
  %v1459 = vmul.f32 %v1455, %v1457
  %1461 = vrot.lane.b32.xlu0 %v1455, 64
  %v1462 = vpop.permute.xlu0 %1461
  %v1464 = vmul.f32 %v1455, %v1462
  %1466 = vrot.lane.b32.xlu0 %v1464, 32
  %v1467 = vpop.permute.xlu0 %1466
  %v1469 = vadd.f32 %v1459, %v1467
  %v1470 = vtanh.pop %v1469
  %1472 = vrot.lane.b32.xlu0 %v1470, 64
  %v1473 = vpop.permute.xlu0 %1472
  %v1475 = vmul.f32 %v1455, %v1473
  %1477 = vrot.lane.b32.xlu0 %v1475, 32
  %v1478 = vpop.permute.xlu0 %1477
  %1480 = vst.msk [vmem:[#allocation3 + $0x8] sm:$0x30] %vm692, %v1478
  %v1481 = vrot.slane %v1475, 4
  %1482 = vrot.lane.b32.xlu0 %v1481, 32
  %v1483 = vpop.permute.xlu0 %1482
  %v1484 = vsel %vm185, %v1483, 0
  %1486 = vmatprep.subr.mxu0 0.0
  %1487 = vmatpush1.msra.mxu0 %v1249
  %1488 = vmatprep.subr.mxu0 0.0
  %1489 = vmatpush1.msra.mxu0 %v1250
  %1490 = vmatprep.subr.mxu0 0.0
  %1491 = vmatpush1.msra.mxu0 %v1251
  %1492 = vmatprep.subr.mxu0 0.0
  %1493 = vmatpush1.msra.mxu0 %v1252
  %1494 = vmatprep.subr.mxu0 0.0
  %1495 = vmatpush1.msra.mxu0 0.0
  %1496 = vmatprep.subr.mxu0 0.0
  %1497 = vmatpush1.msra.mxu0 0.0
  %1498 = vmatprep.subr.mxu0 0.0
  %1499 = vmatpush1.msra.mxu0 0.0
  %1500 = vmatprep.subr.mxu0 0.0
  %1501 = vmatpush1.msra.mxu0 0.0
  %1502 = vmatprep.subr.mxu0 0.0
  %1503 = vmatpush1.msra.mxu0 0.0
  %1504 = vmatprep.subr.mxu0 0.0
  %1505 = vmatpush1.msra.mxu0 0.0
  %1506 = vmatprep.subr.mxu0 0.0
  %1507 = vmatpush1.msra.mxu0 0.0
  %1508 = vmatprep.subr.mxu0 0.0
  %1509 = vmatpush1.msra.mxu0 0.0
  %1510 = vmatprep.subr.mxu0 0.0
  %1511 = vmatpush1.msra.mxu0 0.0
  %1512 = vmatprep.subr.mxu0 0.0
  %1513 = vmatpush1.msra.mxu0 0.0
  %1514 = vmatprep.subr.mxu0 0.0
  %1515 = vmatpush1.msra.mxu0 0.0
  %1516 = vmatprep.subr.mxu0 0.0
  %1517 = vmatpush1.msra.mxu0 0.0
  %1518 = vmatprep.subr.mxu0 0.0
  %1519 = vmatpush1.msra.mxu0 0.0
  %1520 = vmatprep.subr.mxu0 0.0
  %1521 = vmatpush1.msra.mxu0 0.0
  %1522 = vmatprep.subr.mxu0 0.0
  %1523 = vmatpush1.msra.mxu0 0.0
  %1524 = vmatprep.subr.mxu0 0.0
  %1525 = vmatpush1.msra.mxu0 0.0
  %1526 = vmatprep.subr.mxu0 0.0
  %1527 = vmatpush1.msra.mxu0 0.0
  %1528 = vmatprep.subr.mxu0 0.0
  %1529 = vmatpush1.msra.mxu0 0.0
  %1530 = vmatprep.subr.mxu0 0.0
  %1531 = vmatpush1.msra.mxu0 0.0
  %1532 = vmatprep.subr.mxu0 0.0
  %1533 = vmatpush1.msra.mxu0 0.0
  %1534 = vmatprep.subr.mxu0 0.0
  %1535 = vmatpush1.msra.mxu0 0.0
  %1536 = vmatprep.subr.mxu0 0.0
  %1537 = vmatpush1.msra.mxu0 0.0
  %1538 = vmatprep.subr.mxu0 0.0
  %1539 = vmatpush1.msra.mxu0 0.0
  %1540 = vmatprep.subr.mxu0 0.0
  %1541 = vmatpush1.msra.mxu0 0.0
  %1542 = vmatprep.subr.mxu0 0.0
  %1543 = vmatpush1.msra.mxu0 0.0
  %1544 = vmatprep.subr.mxu0 0.0
  %1545 = vmatpush1.msra.mxu0 0.0
  %1546 = vmatprep.subr.mxu0 0.0
  %1547 = vmatpush1.msra.mxu0 0.0
  %1548 = vmatprep.subr.mxu0 0.0
  %1549 = vmatpush1.msra.mxu0 0.0
  %1550 = vmatprep.mubr.f32.mxu0 0.0
  %1551 = vmatmul.mubr.f32.gmra.mrb[0].mxu0 %v1484
  %v1552 = vpop.f32.mrb[0].mxu0
  %v1553 = vadd.f32 0.0, %v1552
  %v1554 = vpop.f32.mrb[0].mxu0
  %1555 = vdwg.mxu0
  %v1557 = vrot.slane %v1553, 6
  %v1559 = vadd.f32 %v350, %v1557
  %v1560 = vtanh.pop %v1559
  %v1561 = vxor.u32 %v1559, 2147483648
  %v1562 = vmul.f32 %v1561, 1.442695
  %v1563 = vpow.pop %v1562
  %v1564 = vadd.f32 %v1563, 1.0
  %v1565 = vrcp.pop %v1564
  %v1566 = vmul.f32 1.0, %v1565
  %v1567 = vsel %vm435, %v1560, %v1566
  %v1569 = vrot.slane %v1469, 2
  %v1571 = vmul.f32 %v1567, %v1569
  %1573 = vrot.lane.b32.xlu0 %v1567, 64
  %v1574 = vpop.permute.xlu0 %1573
  %v1576 = vmul.f32 %v1567, %v1574
  %1578 = vrot.lane.b32.xlu0 %v1576, 32
  %v1579 = vpop.permute.xlu0 %1578
  %v1581 = vadd.f32 %v1571, %v1579
  %v1582 = vtanh.pop %v1581
  %1584 = vrot.lane.b32.xlu0 %v1582, 64
  %v1585 = vpop.permute.xlu0 %1584
  %v1587 = vmul.f32 %v1567, %v1585
  %1589 = vrot.lane.b32.xlu0 %v1587, 32
  %v1590 = vpop.permute.xlu0 %1589
  %1592 = vst.msk [vmem:[#allocation3 + $0x8] sm:$0xc] %vm579, %v1590
  %v1593 = vrot.slane %v1587, 2
  %1594 = vrot.lane.b32.xlu0 %v1593, 32
  %v1595 = vpop.permute.xlu0 %1594
  %v1596 = vsel %vm185, %v1595, 0
  %1598 = vmatprep.subr.mxu0 0.0
  %1599 = vmatpush1.msra.mxu0 %v1249
  %1600 = vmatprep.subr.mxu0 0.0
  %1601 = vmatpush1.msra.mxu0 %v1250
  %1602 = vmatprep.subr.mxu0 0.0
  %1603 = vmatpush1.msra.mxu0 %v1251
  %1604 = vmatprep.subr.mxu0 0.0
  %1605 = vmatpush1.msra.mxu0 %v1252
  %1606 = vmatprep.subr.mxu0 0.0
  %1607 = vmatpush1.msra.mxu0 0.0
  %1608 = vmatprep.subr.mxu0 0.0
  %1609 = vmatpush1.msra.mxu0 0.0
  %1610 = vmatprep.subr.mxu0 0.0
  %1611 = vmatpush1.msra.mxu0 0.0
  %1612 = vmatprep.subr.mxu0 0.0
  %1613 = vmatpush1.msra.mxu0 0.0
  %1614 = vmatprep.subr.mxu0 0.0
  %1615 = vmatpush1.msra.mxu0 0.0
  %1616 = vmatprep.subr.mxu0 0.0
  %1617 = vmatpush1.msra.mxu0 0.0
  %1618 = vmatprep.subr.mxu0 0.0
  %1619 = vmatpush1.msra.mxu0 0.0
  %1620 = vmatprep.subr.mxu0 0.0
  %1621 = vmatpush1.msra.mxu0 0.0
  %1622 = vmatprep.subr.mxu0 0.0
  %1623 = vmatpush1.msra.mxu0 0.0
  %1624 = vmatprep.subr.mxu0 0.0
  %1625 = vmatpush1.msra.mxu0 0.0
  %1626 = vmatprep.subr.mxu0 0.0
  %1627 = vmatpush1.msra.mxu0 0.0
  %1628 = vmatprep.subr.mxu0 0.0
  %1629 = vmatpush1.msra.mxu0 0.0
  %1630 = vmatprep.subr.mxu0 0.0
  %1631 = vmatpush1.msra.mxu0 0.0
  %1632 = vmatprep.subr.mxu0 0.0
  %1633 = vmatpush1.msra.mxu0 0.0
  %1634 = vmatprep.subr.mxu0 0.0
  %1635 = vmatpush1.msra.mxu0 0.0
  %1636 = vmatprep.subr.mxu0 0.0
  %1637 = vmatpush1.msra.mxu0 0.0
  %1638 = vmatprep.subr.mxu0 0.0
  %1639 = vmatpush1.msra.mxu0 0.0
  %1640 = vmatprep.subr.mxu0 0.0
  %1641 = vmatpush1.msra.mxu0 0.0
  %1642 = vmatprep.subr.mxu0 0.0
  %1643 = vmatpush1.msra.mxu0 0.0
  %1644 = vmatprep.subr.mxu0 0.0
  %1645 = vmatpush1.msra.mxu0 0.0
  %1646 = vmatprep.subr.mxu0 0.0
  %1647 = vmatpush1.msra.mxu0 0.0
  %1648 = vmatprep.subr.mxu0 0.0
  %1649 = vmatpush1.msra.mxu0 0.0
  %1650 = vmatprep.subr.mxu0 0.0
  %1651 = vmatpush1.msra.mxu0 0.0
  %1652 = vmatprep.subr.mxu0 0.0
  %1653 = vmatpush1.msra.mxu0 0.0
  %1654 = vmatprep.subr.mxu0 0.0
  %1655 = vmatpush1.msra.mxu0 0.0
  %1656 = vmatprep.subr.mxu0 0.0
  %1657 = vmatpush1.msra.mxu0 0.0
  %1658 = vmatprep.subr.mxu0 0.0
  %1659 = vmatpush1.msra.mxu0 0.0
  %1660 = vmatprep.subr.mxu0 0.0
  %1661 = vmatpush1.msra.mxu0 0.0
  %1662 = vmatprep.mubr.f32.mxu0 0.0
  %1663 = vmatmul.mubr.f32.gmra.mrb[0].mxu0 %v1596
  %v1664 = vpop.f32.mrb[0].mxu0
  %v1665 = vadd.f32 0.0, %v1664
  %v1666 = vpop.f32.mrb[0].mxu0
  %1667 = vdwg.mxu0
  %v1668 = vadd.f32 %v350, %v1665
  %v1669 = vtanh.pop %v1668
  %v1670 = vxor.u32 %v1668, 2147483648
  %v1671 = vmul.f32 %v1670, 1.442695
  %v1672 = vpow.pop %v1671
  %v1673 = vadd.f32 %v1672, 1.0
  %v1674 = vrcp.pop %v1673
  %v1675 = vmul.f32 1.0, %v1674
  %v1676 = vsel %vm435, %v1669, %v1675
  %v1678 = vrot.slane %v1581, 2
  %v1680 = vmul.f32 %v1676, %v1678
  %1682 = vrot.lane.b32.xlu0 %v1676, 64
  %v1683 = vpop.permute.xlu0 %1682
  %v1685 = vmul.f32 %v1676, %v1683
  %1687 = vrot.lane.b32.xlu0 %v1685, 32
  %v1688 = vpop.permute.xlu0 %1687
  %v1690 = vadd.f32 %v1680, %v1688
  %v1691 = vtanh.pop %v1690
  %1693 = vrot.lane.b32.xlu0 %v1691, 64
  %v1694 = vpop.permute.xlu0 %1693
  %v1696 = vmul.f32 %v1676, %v1694
  %1698 = vrot.lane.b32.xlu0 %v1696, 32
  %v1699 = vpop.permute.xlu0 %1698
  %1701 = vst.msk [vmem:[#allocation3 + $0x8] sm:$0x3] %vm469, %v1699
  %v1702 = vsel %vm185, %v1699, 0
  %1704 = vmatprep.subr.mxu0 0.0
  %1705 = vmatpush1.msra.mxu0 %v1249
  %1706 = vmatprep.subr.mxu0 0.0
  %1707 = vmatpush1.msra.mxu0 %v1250
  %1708 = vmatprep.subr.mxu0 0.0
  %1709 = vmatpush1.msra.mxu0 %v1251
  %1710 = vmatprep.subr.mxu0 0.0
  %1711 = vmatpush1.msra.mxu0 %v1252
  %1712 = vmatprep.subr.mxu0 0.0
  %1713 = vmatpush1.msra.mxu0 0.0
  %1714 = vmatprep.subr.mxu0 0.0
  %1715 = vmatpush1.msra.mxu0 0.0
  %1716 = vmatprep.subr.mxu0 0.0
  %1717 = vmatpush1.msra.mxu0 0.0
  %1718 = vmatprep.subr.mxu0 0.0
  %1719 = vmatpush1.msra.mxu0 0.0
  %1720 = vmatprep.subr.mxu0 0.0
  %1721 = vmatpush1.msra.mxu0 0.0
  %1722 = vmatprep.subr.mxu0 0.0
  %1723 = vmatpush1.msra.mxu0 0.0
  %1724 = vmatprep.subr.mxu0 0.0
  %1725 = vmatpush1.msra.mxu0 0.0
  %1726 = vmatprep.subr.mxu0 0.0
  %1727 = vmatpush1.msra.mxu0 0.0
  %1728 = vmatprep.subr.mxu0 0.0
  %1729 = vmatpush1.msra.mxu0 0.0
  %1730 = vmatprep.subr.mxu0 0.0
  %1731 = vmatpush1.msra.mxu0 0.0
  %1732 = vmatprep.subr.mxu0 0.0
  %1733 = vmatpush1.msra.mxu0 0.0
  %1734 = vmatprep.subr.mxu0 0.0
  %1735 = vmatpush1.msra.mxu0 0.0
  %1736 = vmatprep.subr.mxu0 0.0
  %1737 = vmatpush1.msra.mxu0 0.0
  %1738 = vmatprep.subr.mxu0 0.0
  %1739 = vmatpush1.msra.mxu0 0.0
  %1740 = vmatprep.subr.mxu0 0.0
  %1741 = vmatpush1.msra.mxu0 0.0
  %1742 = vmatprep.subr.mxu0 0.0
  %1743 = vmatpush1.msra.mxu0 0.0
  %1744 = vmatprep.subr.mxu0 0.0
  %1745 = vmatpush1.msra.mxu0 0.0
  %1746 = vmatprep.subr.mxu0 0.0
  %1747 = vmatpush1.msra.mxu0 0.0
  %1748 = vmatprep.subr.mxu0 0.0
  %1749 = vmatpush1.msra.mxu0 0.0
  %1750 = vmatprep.subr.mxu0 0.0
  %1751 = vmatpush1.msra.mxu0 0.0
  %1752 = vmatprep.subr.mxu0 0.0
  %1753 = vmatpush1.msra.mxu0 0.0
  %1754 = vmatprep.subr.mxu0 0.0
  %1755 = vmatpush1.msra.mxu0 0.0
  %1756 = vmatprep.subr.mxu0 0.0
  %1757 = vmatpush1.msra.mxu0 0.0
  %1758 = vmatprep.subr.mxu0 0.0
  %1759 = vmatpush1.msra.mxu0 0.0
  %1760 = vmatprep.subr.mxu0 0.0
  %1761 = vmatpush1.msra.mxu0 0.0
  %1762 = vmatprep.subr.mxu0 0.0
  %1763 = vmatpush1.msra.mxu0 0.0
  %1764 = vmatprep.subr.mxu0 0.0
  %1765 = vmatpush1.msra.mxu0 0.0
  %1766 = vmatprep.subr.mxu0 0.0
  %1767 = vmatpush1.msra.mxu0 0.0
  %1768 = vmatprep.mubr.f32.mxu0 0.0
  %1769 = vmatmul.mubr.f32.gmra.mrb[0].mxu0 %v1702
  %v1770 = vpop.f32.mrb[0].mxu0
  %v1771 = vadd.f32 0.0, %v1770
  %v1772 = vpop.f32.mrb[0].mxu0
  %1773 = vdwg.mxu0
  %v1775 = vrot.slane %v1771, 2
  %v1777 = vadd.f32 %v345, %v1775
  %v1778 = vtanh.pop %v1777
  %v1779 = vxor.u32 %v1777, 2147483648
  %v1780 = vmul.f32 %v1779, 1.442695
  %v1781 = vpow.pop %v1780
  %v1782 = vadd.f32 %v1781, 1.0
  %v1783 = vrcp.pop %v1782
  %v1784 = vmul.f32 1.0, %v1783
  %v1785 = vsel %vm435, %v1778, %v1784
  %v1787 = vrot.slane %v1690, 2
  %v1789 = vmul.f32 %v1785, %v1787
  %1791 = vrot.lane.b32.xlu0 %v1785, 64
  %v1792 = vpop.permute.xlu0 %1791
  %v1794 = vmul.f32 %v1785, %v1792
  %1796 = vrot.lane.b32.xlu0 %v1794, 32
  %v1797 = vpop.permute.xlu0 %1796
  %v1799 = vadd.f32 %v1789, %v1797
  %v1800 = vtanh.pop %v1799
  %1802 = vrot.lane.b32.xlu0 %v1800, 64
  %v1803 = vpop.permute.xlu0 %1802
  %v1805 = vmul.f32 %v1785, %v1803
  %1807 = vrot.lane.b32.xlu0 %v1805, 32
  %v1808 = vpop.permute.xlu0 %1807
  %1810 = vst.msk [vmem:[#allocation3] sm:$0xc0] %vm805, %v1808
  %v1811 = vrot.slane %v1805, 6
  %1812 = vrot.lane.b32.xlu0 %v1811, 32
  %v1813 = vpop.permute.xlu0 %1812
  %v1814 = vsel %vm185, %v1813, 0
  %1816 = vmatprep.subr.mxu0 0.0
  %1817 = vmatpush1.msra.mxu0 %v1249
  %1818 = vmatprep.subr.mxu0 0.0
  %1819 = vmatpush1.msra.mxu0 %v1250
  %1820 = vmatprep.subr.mxu0 0.0
  %1821 = vmatpush1.msra.mxu0 %v1251
  %1822 = vmatprep.subr.mxu0 0.0
  %1823 = vmatpush1.msra.mxu0 %v1252
  %1824 = vmatprep.subr.mxu0 0.0
  %1825 = vmatpush1.msra.mxu0 0.0
  %1826 = vmatprep.subr.mxu0 0.0
  %1827 = vmatpush1.msra.mxu0 0.0
  %1828 = vmatprep.subr.mxu0 0.0
  %1829 = vmatpush1.msra.mxu0 0.0
  %1830 = vmatprep.subr.mxu0 0.0
  %1831 = vmatpush1.msra.mxu0 0.0
  %1832 = vmatprep.subr.mxu0 0.0
  %1833 = vmatpush1.msra.mxu0 0.0
  %1834 = vmatprep.subr.mxu0 0.0
  %1835 = vmatpush1.msra.mxu0 0.0
  %1836 = vmatprep.subr.mxu0 0.0
  %1837 = vmatpush1.msra.mxu0 0.0
  %1838 = vmatprep.subr.mxu0 0.0
  %1839 = vmatpush1.msra.mxu0 0.0
  %1840 = vmatprep.subr.mxu0 0.0
  %1841 = vmatpush1.msra.mxu0 0.0
  %1842 = vmatprep.subr.mxu0 0.0
  %1843 = vmatpush1.msra.mxu0 0.0
  %1844 = vmatprep.subr.mxu0 0.0
  %1845 = vmatpush1.msra.mxu0 0.0
  %1846 = vmatprep.subr.mxu0 0.0
  %1847 = vmatpush1.msra.mxu0 0.0
  %1848 = vmatprep.subr.mxu0 0.0
  %1849 = vmatpush1.msra.mxu0 0.0
  %1850 = vmatprep.subr.mxu0 0.0
  %1851 = vmatpush1.msra.mxu0 0.0
  %1852 = vmatprep.subr.mxu0 0.0
  %1853 = vmatpush1.msra.mxu0 0.0
  %1854 = vmatprep.subr.mxu0 0.0
  %1855 = vmatpush1.msra.mxu0 0.0
  %1856 = vmatprep.subr.mxu0 0.0
  %1857 = vmatpush1.msra.mxu0 0.0
  %1858 = vmatprep.subr.mxu0 0.0
  %1859 = vmatpush1.msra.mxu0 0.0
  %1860 = vmatprep.subr.mxu0 0.0
  %1861 = vmatpush1.msra.mxu0 0.0
  %1862 = vmatprep.subr.mxu0 0.0
  %1863 = vmatpush1.msra.mxu0 0.0
  %1864 = vmatprep.subr.mxu0 0.0
  %1865 = vmatpush1.msra.mxu0 0.0
  %1866 = vmatprep.subr.mxu0 0.0
  %1867 = vmatpush1.msra.mxu0 0.0
  %1868 = vmatprep.subr.mxu0 0.0
  %1869 = vmatpush1.msra.mxu0 0.0
  %1870 = vmatprep.subr.mxu0 0.0
  %1871 = vmatpush1.msra.mxu0 0.0
  %1872 = vmatprep.subr.mxu0 0.0
  %1873 = vmatpush1.msra.mxu0 0.0
  %1874 = vmatprep.subr.mxu0 0.0
  %1875 = vmatpush1.msra.mxu0 0.0
  %1876 = vmatprep.subr.mxu0 0.0
  %1877 = vmatpush1.msra.mxu0 0.0
  %1878 = vmatprep.subr.mxu0 0.0
  %1879 = vmatpush1.msra.mxu0 0.0
  %1880 = vmatprep.mubr.f32.mxu0 0.0
  %1881 = vmatmul.mubr.f32.gmra.mrb[0].mxu0 %v1814
  %v1882 = vpop.f32.mrb[0].mxu0
  %v1883 = vadd.f32 0.0, %v1882
  %v1884 = vpop.f32.mrb[0].mxu0
  %1885 = vdwg.mxu0
  %v1887 = vrot.slane %v1883, 4
  %v1889 = vadd.f32 %v345, %v1887
  %v1890 = vtanh.pop %v1889
  %v1891 = vxor.u32 %v1889, 2147483648
  %v1892 = vmul.f32 %v1891, 1.442695
  %v1893 = vpow.pop %v1892
  %v1894 = vadd.f32 %v1893, 1.0
  %v1895 = vrcp.pop %v1894
  %v1896 = vmul.f32 1.0, %v1895
  %v1897 = vsel %vm435, %v1890, %v1896
  %v1899 = vrot.slane %v1799, 2
  %v1901 = vmul.f32 %v1897, %v1899
  %1903 = vrot.lane.b32.xlu0 %v1897, 64
  %v1904 = vpop.permute.xlu0 %1903
  %v1906 = vmul.f32 %v1897, %v1904
  %1908 = vrot.lane.b32.xlu0 %v1906, 32
  %v1909 = vpop.permute.xlu0 %1908
  %v1911 = vadd.f32 %v1901, %v1909
  %v1912 = vtanh.pop %v1911
  %1914 = vrot.lane.b32.xlu0 %v1912, 64
  %v1915 = vpop.permute.xlu0 %1914
  %v1917 = vmul.f32 %v1897, %v1915
  %1919 = vrot.lane.b32.xlu0 %v1917, 32
  %v1920 = vpop.permute.xlu0 %1919
  %1922 = vst.msk [vmem:[#allocation3] sm:$0x30] %vm692, %v1920
  %v1923 = vrot.slane %v1917, 4
  %1924 = vrot.lane.b32.xlu0 %v1923, 32
  %v1925 = vpop.permute.xlu0 %1924
  %v1926 = vsel %vm185, %v1925, 0
  %1928 = vmatprep.subr.mxu0 0.0
  %1929 = vmatpush1.msra.mxu0 %v1249
  %1930 = vmatprep.subr.mxu0 0.0
  %1931 = vmatpush1.msra.mxu0 %v1250
  %1932 = vmatprep.subr.mxu0 0.0
  %1933 = vmatpush1.msra.mxu0 %v1251
  %1934 = vmatprep.subr.mxu0 0.0
  %1935 = vmatpush1.msra.mxu0 %v1252
  %1936 = vmatprep.subr.mxu0 0.0
  %1937 = vmatpush1.msra.mxu0 0.0
  %1938 = vmatprep.subr.mxu0 0.0
  %1939 = vmatpush1.msra.mxu0 0.0
  %1940 = vmatprep.subr.mxu0 0.0
  %1941 = vmatpush1.msra.mxu0 0.0
  %1942 = vmatprep.subr.mxu0 0.0
  %1943 = vmatpush1.msra.mxu0 0.0
  %1944 = vmatprep.subr.mxu0 0.0
  %1945 = vmatpush1.msra.mxu0 0.0
  %1946 = vmatprep.subr.mxu0 0.0
  %1947 = vmatpush1.msra.mxu0 0.0
  %1948 = vmatprep.subr.mxu0 0.0
  %1949 = vmatpush1.msra.mxu0 0.0
  %1950 = vmatprep.subr.mxu0 0.0
  %1951 = vmatpush1.msra.mxu0 0.0
  %1952 = vmatprep.subr.mxu0 0.0
  %1953 = vmatpush1.msra.mxu0 0.0
  %1954 = vmatprep.subr.mxu0 0.0
  %1955 = vmatpush1.msra.mxu0 0.0
  %1956 = vmatprep.subr.mxu0 0.0
  %1957 = vmatpush1.msra.mxu0 0.0
  %1958 = vmatprep.subr.mxu0 0.0
  %1959 = vmatpush1.msra.mxu0 0.0
  %1960 = vmatprep.subr.mxu0 0.0
  %1961 = vmatpush1.msra.mxu0 0.0
  %1962 = vmatprep.subr.mxu0 0.0
  %1963 = vmatpush1.msra.mxu0 0.0
  %1964 = vmatprep.subr.mxu0 0.0
  %1965 = vmatpush1.msra.mxu0 0.0
  %1966 = vmatprep.subr.mxu0 0.0
  %1967 = vmatpush1.msra.mxu0 0.0
  %1968 = vmatprep.subr.mxu0 0.0
  %1969 = vmatpush1.msra.mxu0 0.0
  %1970 = vmatprep.subr.mxu0 0.0
  %1971 = vmatpush1.msra.mxu0 0.0
  %1972 = vmatprep.subr.mxu0 0.0
  %1973 = vmatpush1.msra.mxu0 0.0
  %1974 = vmatprep.subr.mxu0 0.0
  %1975 = vmatpush1.msra.mxu0 0.0
  %1976 = vmatprep.subr.mxu0 0.0
  %1977 = vmatpush1.msra.mxu0 0.0
  %1978 = vmatprep.subr.mxu0 0.0
  %1979 = vmatpush1.msra.mxu0 0.0
  %1980 = vmatprep.subr.mxu0 0.0
  %1981 = vmatpush1.msra.mxu0 0.0
  %1982 = vmatprep.subr.mxu0 0.0
  %1983 = vmatpush1.msra.mxu0 0.0
  %1984 = vmatprep.subr.mxu0 0.0
  %1985 = vmatpush1.msra.mxu0 0.0
  %1986 = vmatprep.subr.mxu0 0.0
  %1987 = vmatpush1.msra.mxu0 0.0
  %1988 = vmatprep.subr.mxu0 0.0
  %1989 = vmatpush1.msra.mxu0 0.0
  %1990 = vmatprep.subr.mxu0 0.0
  %1991 = vmatpush1.msra.mxu0 0.0
  %1992 = vmatprep.mubr.f32.mxu0 0.0
  %1993 = vmatmul.mubr.f32.gmra.mrb[0].mxu0 %v1926
  %v1994 = vpop.f32.mrb[0].mxu0
  %v1995 = vadd.f32 0.0, %v1994
  %v1996 = vpop.f32.mrb[0].mxu0
  %1997 = vdwg.mxu0
  %v1999 = vrot.slane %v1995, 6
  %v2001 = vadd.f32 %v345, %v1999
  %v2002 = vtanh.pop %v2001
  %v2003 = vxor.u32 %v2001, 2147483648
  %v2004 = vmul.f32 %v2003, 1.442695
  %v2005 = vpow.pop %v2004
  %v2006 = vadd.f32 %v2005, 1.0
  %v2007 = vrcp.pop %v2006
  %v2008 = vmul.f32 1.0, %v2007
  %v2009 = vsel %vm435, %v2002, %v2008
  %v2011 = vrot.slane %v1911, 2
  %v2013 = vmul.f32 %v2009, %v2011
  %2015 = vrot.lane.b32.xlu0 %v2009, 64
  %v2016 = vpop.permute.xlu0 %2015
  %v2018 = vmul.f32 %v2009, %v2016
  %2020 = vrot.lane.b32.xlu0 %v2018, 32
  %v2021 = vpop.permute.xlu0 %2020
  %v2023 = vadd.f32 %v2013, %v2021
  %v2024 = vtanh.pop %v2023
  %2026 = vrot.lane.b32.xlu0 %v2024, 64
  %v2027 = vpop.permute.xlu0 %2026
  %v2029 = vmul.f32 %v2009, %v2027
  %2031 = vrot.lane.b32.xlu0 %v2029, 32
  %v2032 = vpop.permute.xlu0 %2031
  %2034 = vst.msk [vmem:[#allocation3] sm:$0xc] %vm579, %v2032
  %v2035 = vrot.slane %v2029, 2
  %2036 = vrot.lane.b32.xlu0 %v2035, 32
  %v2037 = vpop.permute.xlu0 %2036
  %v2038 = vsel %vm185, %v2037, 0
  %2040 = vmatprep.subr.mxu0 0.0
  %2041 = vmatpush1.msra.mxu0 %v1249
  %2042 = vmatprep.subr.mxu0 0.0
  %2043 = vmatpush1.msra.mxu0 %v1250
  %2044 = vmatprep.subr.mxu0 0.0
  %2045 = vmatpush1.msra.mxu0 %v1251
  %2046 = vmatprep.subr.mxu0 0.0
  %2047 = vmatpush1.msra.mxu0 %v1252
  %2048 = vmatprep.subr.mxu0 0.0
  %2049 = vmatpush1.msra.mxu0 0.0
  %2050 = vmatprep.subr.mxu0 0.0
  %2051 = vmatpush1.msra.mxu0 0.0
  %2052 = vmatprep.subr.mxu0 0.0
  %2053 = vmatpush1.msra.mxu0 0.0
  %2054 = vmatprep.subr.mxu0 0.0
  %2055 = vmatpush1.msra.mxu0 0.0
  %2056 = vmatprep.subr.mxu0 0.0
  %2057 = vmatpush1.msra.mxu0 0.0
  %2058 = vmatprep.subr.mxu0 0.0
  %2059 = vmatpush1.msra.mxu0 0.0
  %2060 = vmatprep.subr.mxu0 0.0
  %2061 = vmatpush1.msra.mxu0 0.0
  %2062 = vmatprep.subr.mxu0 0.0
  %2063 = vmatpush1.msra.mxu0 0.0
  %2064 = vmatprep.subr.mxu0 0.0
  %2065 = vmatpush1.msra.mxu0 0.0
  %2066 = vmatprep.subr.mxu0 0.0
  %2067 = vmatpush1.msra.mxu0 0.0
  %2068 = vmatprep.subr.mxu0 0.0
  %2069 = vmatpush1.msra.mxu0 0.0
  %2070 = vmatprep.subr.mxu0 0.0
  %2071 = vmatpush1.msra.mxu0 0.0
  %2072 = vmatprep.subr.mxu0 0.0
  %2073 = vmatpush1.msra.mxu0 0.0
  %2074 = vmatprep.subr.mxu0 0.0
  %2075 = vmatpush1.msra.mxu0 0.0
  %2076 = vmatprep.subr.mxu0 0.0
  %2077 = vmatpush1.msra.mxu0 0.0
  %2078 = vmatprep.subr.mxu0 0.0
  %2079 = vmatpush1.msra.mxu0 0.0
  %2080 = vmatprep.subr.mxu0 0.0
  %2081 = vmatpush1.msra.mxu0 0.0
  %2082 = vmatprep.subr.mxu0 0.0
  %2083 = vmatpush1.msra.mxu0 0.0
  %2084 = vmatprep.subr.mxu0 0.0
  %2085 = vmatpush1.msra.mxu0 0.0
  %2086 = vmatprep.subr.mxu0 0.0
  %2087 = vmatpush1.msra.mxu0 0.0
  %2088 = vmatprep.subr.mxu0 0.0
  %2089 = vmatpush1.msra.mxu0 0.0
  %2090 = vmatprep.subr.mxu0 0.0
  %2091 = vmatpush1.msra.mxu0 0.0
  %2092 = vmatprep.subr.mxu0 0.0
  %2093 = vmatpush1.msra.mxu0 0.0
  %2094 = vmatprep.subr.mxu0 0.0
  %2095 = vmatpush1.msra.mxu0 0.0
  %2096 = vmatprep.subr.mxu0 0.0
  %2097 = vmatpush1.msra.mxu0 0.0
  %2098 = vmatprep.subr.mxu0 0.0
  %2099 = vmatpush1.msra.mxu0 0.0
  %2100 = vmatprep.subr.mxu0 0.0
  %2101 = vmatpush1.msra.mxu0 0.0
  %2102 = vmatprep.subr.mxu0 0.0
  %2103 = vmatpush1.msra.mxu0 0.0
  %2104 = vmatprep.mubr.f32.mxu0 0.0
  %2105 = vmatmul.mubr.f32.gmra.mrb[0].mxu0 %v2038
  %v2106 = vpop.f32.mrb[0].mxu0
  %v2107 = vadd.f32 0.0, %v2106
  %v2108 = vpop.f32.mrb[0].mxu0
  %2109 = vdwg.mxu0
  %v2110 = vadd.f32 %v345, %v2107
  %v2111 = vtanh.pop %v2110
  %v2112 = vxor.u32 %v2110, 2147483648
  %v2113 = vmul.f32 %v2112, 1.442695
  %v2114 = vpow.pop %v2113
  %v2115 = vadd.f32 %v2114, 1.0
  %v2116 = vrcp.pop %v2115
  %v2117 = vmul.f32 1.0, %v2116
  %v2118 = vsel %vm435, %v2111, %v2117
  %v2120 = vrot.slane %v2023, 2
  %v2122 = vmul.f32 %v2118, %v2120
  %2124 = vrot.lane.b32.xlu0 %v2118, 64
  %v2125 = vpop.permute.xlu0 %2124
  %v2127 = vmul.f32 %v2118, %v2125
  %2129 = vrot.lane.b32.xlu0 %v2127, 32
  %v2130 = vpop.permute.xlu0 %2129
  %v2132 = vadd.f32 %v2122, %v2130
  %v2133 = vtanh.pop %v2132
  %2135 = vrot.lane.b32.xlu0 %v2133, 64
  %v2136 = vpop.permute.xlu0 %2135
  %v2138 = vmul.f32 %v2118, %v2136
  %2140 = vrot.lane.b32.xlu0 %v2138, 32
  %v2141 = vpop.permute.xlu0 %2140
  %2143 = vst.msk [vmem:[#allocation3] sm:$0x3] %vm469, %v2141
  %v2144 = vld [vmem:[#allocation2] sm:$0xff]
  %v2145 = vld [vmem:[#allocation2 + $0x8] sm:$0xff]
  %v2146 = vld [vmem:[#allocation3] sm:$0xff]
  %v2147 = vld [vmem:[#allocation3 + $0x8] sm:$0xff]
  %v2148 = vld [vmem:[%s10] sm:$0xff]
  %v2149 = vld [vmem:[%s10 + $0x8] sm:$0xff]
  %v2150 = vld [vmem:[%s10 + $0x10] sm:$0xff]
  %v2151 = vld [vmem:[%s10 + $0x18] sm:$0xff]
  %v2152 = vld [vmem:[%s10 + $0x20] sm:$0xff]
  %v2153 = vld [vmem:[%s10 + $0x28] sm:$0xff]
  %v2154 = vld [vmem:[%s10 + $0x30] sm:$0xff]
  %v2155 = vld [vmem:[%s10 + $0x38] sm:$0xff]
  %v2156 = vld [vmem:[%s13] sm:$0xff]
  %v2157 = vld [vmem:[%s13 + $0x8] sm:$0xff]
  %v2158 = vld [vmem:[%s13 + $0x10] sm:$0xff]
  %v2159 = vld [vmem:[%s13 + $0x18] sm:$0xff]
  %v2160 = vld [vmem:[%s13 + $0x20] sm:$0xff]
  %v2161 = vld [vmem:[%s13 + $0x28] sm:$0xff]
  %v2162 = vld [vmem:[%s13 + $0x30] sm:$0xff]
  %v2163 = vld [vmem:[%s13 + $0x38] sm:$0xff]
  %v2165 = vsel %vm185, %v2146, 0
  %v2168 = vsel %vm185, %v2147, 0
  %2170 = vmatprep.subr.mxu0 0.0
  %2171 = vmatpush1.msra.mxu0 %v2152
  %2172 = vmatprep.subr.mxu0 0.0
  %2173 = vmatpush1.msra.mxu0 %v2153
  %2174 = vmatprep.subr.mxu0 0.0
  %2175 = vmatpush1.msra.mxu0 %v2154
  %2176 = vmatprep.subr.mxu0 0.0
  %2177 = vmatpush1.msra.mxu0 %v2155
  %2178 = vmatprep.subr.mxu0 0.0
  %2179 = vmatpush1.msra.mxu0 0.0
  %2180 = vmatprep.subr.mxu0 0.0
  %2181 = vmatpush1.msra.mxu0 0.0
  %2182 = vmatprep.subr.mxu0 0.0
  %2183 = vmatpush1.msra.mxu0 0.0
  %2184 = vmatprep.subr.mxu0 0.0
  %2185 = vmatpush1.msra.mxu0 0.0
  %2186 = vmatprep.subr.mxu0 0.0
  %2187 = vmatpush1.msra.mxu0 0.0
  %2188 = vmatprep.subr.mxu0 0.0
  %2189 = vmatpush1.msra.mxu0 0.0
  %2190 = vmatprep.subr.mxu0 0.0
  %2191 = vmatpush1.msra.mxu0 0.0
  %2192 = vmatprep.subr.mxu0 0.0
  %2193 = vmatpush1.msra.mxu0 0.0
  %2194 = vmatprep.subr.mxu0 0.0
  %2195 = vmatpush1.msra.mxu0 0.0
  %2196 = vmatprep.subr.mxu0 0.0
  %2197 = vmatpush1.msra.mxu0 0.0
  %2198 = vmatprep.subr.mxu0 0.0
  %2199 = vmatpush1.msra.mxu0 0.0
  %2200 = vmatprep.subr.mxu0 0.0
  %2201 = vmatpush1.msra.mxu0 0.0
  %2202 = vmatprep.subr.mxu0 0.0
  %2203 = vmatpush1.msra.mxu0 0.0
  %2204 = vmatprep.subr.mxu0 0.0
  %2205 = vmatpush1.msra.mxu0 0.0
  %2206 = vmatprep.subr.mxu0 0.0
  %2207 = vmatpush1.msra.mxu0 0.0
  %2208 = vmatprep.subr.mxu0 0.0
  %2209 = vmatpush1.msra.mxu0 0.0
  %2210 = vmatprep.subr.mxu0 0.0
  %2211 = vmatpush1.msra.mxu0 0.0
  %2212 = vmatprep.subr.mxu0 0.0
  %2213 = vmatpush1.msra.mxu0 0.0
  %2214 = vmatprep.subr.mxu0 0.0
  %2215 = vmatpush1.msra.mxu0 0.0
  %2216 = vmatprep.subr.mxu0 0.0
  %2217 = vmatpush1.msra.mxu0 0.0
  %2218 = vmatprep.subr.mxu0 0.0
  %2219 = vmatpush1.msra.mxu0 0.0
  %2220 = vmatprep.subr.mxu0 0.0
  %2221 = vmatpush1.msra.mxu0 0.0
  %2222 = vmatprep.subr.mxu0 0.0
  %2223 = vmatpush1.msra.mxu0 0.0
  %2224 = vmatprep.subr.mxu0 0.0
  %2225 = vmatpush1.msra.mxu0 0.0
  %2226 = vmatprep.subr.mxu0 0.0
  %2227 = vmatpush1.msra.mxu0 0.0
  %2228 = vmatprep.subr.mxu0 0.0
  %2229 = vmatpush1.msra.mxu0 0.0
  %2230 = vmatprep.subr.mxu0 0.0
  %2231 = vmatpush1.msra.mxu0 0.0
  %2232 = vmatprep.subr.mxu0 0.0
  %2233 = vmatpush1.msra.mxu0 0.0
  %2234 = vmatprep.mubr.f32.mxu0 0.0
  %2235 = vmatmul.mubr.f32.gmra.mrb[0].mxu0 %v2165
  %v2236 = vpop.f32.mrb[0].mxu0
  %v2237 = vadd.f32 0.0, %v2236
  %v2238 = vpop.f32.mrb[0].mxu0
  %2239 = vmatprep.mubr.f32.mxu0 0.0
  %2240 = vmatmul.mubr.f32.gmra.mrb[0].mxu0 %v2168
  %v2241 = vpop.f32.mrb[0].mxu0
  %v2242 = vadd.f32 0.0, %v2241
  %v2243 = vpop.f32.mrb[0].mxu0
  %2244 = vdwg.mxu0
  %v2246 = vsel %vm185, %v2144, 0
  %v2249 = vsel %vm185, %v2145, 0
  %2251 = vmatprep.subr.mxu0 0.0
  %2252 = vmatpush1.msra.mxu0 %v2148
  %2253 = vmatprep.subr.mxu0 0.0
  %2254 = vmatpush1.msra.mxu0 %v2149
  %2255 = vmatprep.subr.mxu0 0.0
  %2256 = vmatpush1.msra.mxu0 %v2150
  %2257 = vmatprep.subr.mxu0 0.0
  %2258 = vmatpush1.msra.mxu0 %v2151
  %2259 = vmatprep.subr.mxu0 0.0
  %2260 = vmatpush1.msra.mxu0 0.0
  %2261 = vmatprep.subr.mxu0 0.0
  %2262 = vmatpush1.msra.mxu0 0.0
  %2263 = vmatprep.subr.mxu0 0.0
  %2264 = vmatpush1.msra.mxu0 0.0
  %2265 = vmatprep.subr.mxu0 0.0
  %2266 = vmatpush1.msra.mxu0 0.0
  %2267 = vmatprep.subr.mxu0 0.0
  %2268 = vmatpush1.msra.mxu0 0.0
  %2269 = vmatprep.subr.mxu0 0.0
  %2270 = vmatpush1.msra.mxu0 0.0
  %2271 = vmatprep.subr.mxu0 0.0
  %2272 = vmatpush1.msra.mxu0 0.0
  %2273 = vmatprep.subr.mxu0 0.0
  %2274 = vmatpush1.msra.mxu0 0.0
  %2275 = vmatprep.subr.mxu0 0.0
  %2276 = vmatpush1.msra.mxu0 0.0
  %2277 = vmatprep.subr.mxu0 0.0
  %2278 = vmatpush1.msra.mxu0 0.0
  %2279 = vmatprep.subr.mxu0 0.0
  %2280 = vmatpush1.msra.mxu0 0.0
  %2281 = vmatprep.subr.mxu0 0.0
  %2282 = vmatpush1.msra.mxu0 0.0
  %2283 = vmatprep.subr.mxu0 0.0
  %2284 = vmatpush1.msra.mxu0 0.0
  %2285 = vmatprep.subr.mxu0 0.0
  %2286 = vmatpush1.msra.mxu0 0.0
  %2287 = vmatprep.subr.mxu0 0.0
  %2288 = vmatpush1.msra.mxu0 0.0
  %2289 = vmatprep.subr.mxu0 0.0
  %2290 = vmatpush1.msra.mxu0 0.0
  %2291 = vmatprep.subr.mxu0 0.0
  %2292 = vmatpush1.msra.mxu0 0.0
  %2293 = vmatprep.subr.mxu0 0.0
  %2294 = vmatpush1.msra.mxu0 0.0
  %2295 = vmatprep.subr.mxu0 0.0
  %2296 = vmatpush1.msra.mxu0 0.0
  %2297 = vmatprep.subr.mxu0 0.0
  %2298 = vmatpush1.msra.mxu0 0.0
  %2299 = vmatprep.subr.mxu0 0.0
  %2300 = vmatpush1.msra.mxu0 0.0
  %2301 = vmatprep.subr.mxu0 0.0
  %2302 = vmatpush1.msra.mxu0 0.0
  %2303 = vmatprep.subr.mxu0 0.0
  %2304 = vmatpush1.msra.mxu0 0.0
  %2305 = vmatprep.subr.mxu0 0.0
  %2306 = vmatpush1.msra.mxu0 0.0
  %2307 = vmatprep.subr.mxu0 0.0
  %2308 = vmatpush1.msra.mxu0 0.0
  %2309 = vmatprep.subr.mxu0 0.0
  %2310 = vmatpush1.msra.mxu0 0.0
  %2311 = vmatprep.subr.mxu0 0.0
  %2312 = vmatpush1.msra.mxu0 0.0
  %2313 = vmatprep.subr.mxu0 0.0
  %2314 = vmatpush1.msra.mxu0 0.0
  %2315 = vmatprep.mubr.f32.mxu0 0.0
  %2316 = vmatmul.mubr.f32.gmra.mrb[0].mxu0 %v2246
  %v2317 = vpop.f32.mrb[0].mxu0
  %v2318 = vadd.f32 %v2237, %v2317
  %v2319 = vpop.f32.mrb[0].mxu0
  %2320 = vmatprep.mubr.f32.mxu0 0.0
  %2321 = vmatmul.mubr.f32.gmra.mrb[0].mxu0 %v2249
  %v2322 = vpop.f32.mrb[0].mxu0
  %v2323 = vadd.f32 %v2242, %v2322
  %v2324 = vpop.f32.mrb[0].mxu0
  %2325 = vdwg.mxu0
  %v2326 = vld [vmem:[%s12] sm:$0x1]
  %v2328 = vlaneseq
  %v2329 = vshrl.u32 %v2328, 7
  %v2330 = vsub.s32 0, %v2329
  %v2331 = vrot.slane %v2326, %v2330
  %v2333 = vadd.f32 %v2318, %v2331
  %v2334 = vadd.f32 %v2323, %v2331
  %2335 = vmatprep.subr.mxu0 0.0
  %2336 = vmatpush1.msra.mxu0 %v2160
  %2337 = vmatprep.subr.mxu0 0.0
  %2338 = vmatpush1.msra.mxu0 %v2161
  %2339 = vmatprep.subr.mxu0 0.0
  %2340 = vmatpush1.msra.mxu0 %v2162
  %2341 = vmatprep.subr.mxu0 0.0
  %2342 = vmatpush1.msra.mxu0 %v2163
  %2343 = vmatprep.subr.mxu0 0.0
  %2344 = vmatpush1.msra.mxu0 0.0
  %2345 = vmatprep.subr.mxu0 0.0
  %2346 = vmatpush1.msra.mxu0 0.0
  %2347 = vmatprep.subr.mxu0 0.0
  %2348 = vmatpush1.msra.mxu0 0.0
  %2349 = vmatprep.subr.mxu0 0.0
  %2350 = vmatpush1.msra.mxu0 0.0
  %2351 = vmatprep.subr.mxu0 0.0
  %2352 = vmatpush1.msra.mxu0 0.0
  %2353 = vmatprep.subr.mxu0 0.0
  %2354 = vmatpush1.msra.mxu0 0.0
  %2355 = vmatprep.subr.mxu0 0.0
  %2356 = vmatpush1.msra.mxu0 0.0
  %2357 = vmatprep.subr.mxu0 0.0
  %2358 = vmatpush1.msra.mxu0 0.0
  %2359 = vmatprep.subr.mxu0 0.0
  %2360 = vmatpush1.msra.mxu0 0.0
  %2361 = vmatprep.subr.mxu0 0.0
  %2362 = vmatpush1.msra.mxu0 0.0
  %2363 = vmatprep.subr.mxu0 0.0
  %2364 = vmatpush1.msra.mxu0 0.0
  %2365 = vmatprep.subr.mxu0 0.0
  %2366 = vmatpush1.msra.mxu0 0.0
  %2367 = vmatprep.subr.mxu0 0.0
  %2368 = vmatpush1.msra.mxu0 0.0
  %2369 = vmatprep.subr.mxu0 0.0
  %2370 = vmatpush1.msra.mxu0 0.0
  %2371 = vmatprep.subr.mxu0 0.0
  %2372 = vmatpush1.msra.mxu0 0.0
  %2373 = vmatprep.subr.mxu0 0.0
  %2374 = vmatpush1.msra.mxu0 0.0
  %2375 = vmatprep.subr.mxu0 0.0
  %2376 = vmatpush1.msra.mxu0 0.0
  %2377 = vmatprep.subr.mxu0 0.0
  %2378 = vmatpush1.msra.mxu0 0.0
  %2379 = vmatprep.subr.mxu0 0.0
  %2380 = vmatpush1.msra.mxu0 0.0
  %2381 = vmatprep.subr.mxu0 0.0
  %2382 = vmatpush1.msra.mxu0 0.0
  %2383 = vmatprep.subr.mxu0 0.0
  %2384 = vmatpush1.msra.mxu0 0.0
  %2385 = vmatprep.subr.mxu0 0.0
  %2386 = vmatpush1.msra.mxu0 0.0
  %2387 = vmatprep.subr.mxu0 0.0
  %2388 = vmatpush1.msra.mxu0 0.0
  %2389 = vmatprep.subr.mxu0 0.0
  %2390 = vmatpush1.msra.mxu0 0.0
  %2391 = vmatprep.subr.mxu0 0.0
  %2392 = vmatpush1.msra.mxu0 0.0
  %2393 = vmatprep.subr.mxu0 0.0
  %2394 = vmatpush1.msra.mxu0 0.0
  %2395 = vmatprep.subr.mxu0 0.0
  %2396 = vmatpush1.msra.mxu0 0.0
  %2397 = vmatprep.subr.mxu0 0.0
  %2398 = vmatpush1.msra.mxu0 0.0
  %2399 = vmatprep.mubr.f32.mxu0 0.0
  %2400 = vmatmul.mubr.f32.gmra.mrb[0].mxu0 %v2165
  %v2401 = vpop.f32.mrb[0].mxu0
  %v2402 = vadd.f32 0.0, %v2401
  %v2403 = vpop.f32.mrb[0].mxu0
  %2404 = vmatprep.mubr.f32.mxu0 0.0
  %2405 = vmatmul.mubr.f32.gmra.mrb[0].mxu0 %v2168
  %v2406 = vpop.f32.mrb[0].mxu0
  %v2407 = vadd.f32 0.0, %v2406
  %v2408 = vpop.f32.mrb[0].mxu0
  %2409 = vdwg.mxu0
  %2410 = vmatprep.subr.mxu0 0.0
  %2411 = vmatpush1.msra.mxu0 %v2156
  %2412 = vmatprep.subr.mxu0 0.0
  %2413 = vmatpush1.msra.mxu0 %v2157
  %2414 = vmatprep.subr.mxu0 0.0
  %2415 = vmatpush1.msra.mxu0 %v2158
  %2416 = vmatprep.subr.mxu0 0.0
  %2417 = vmatpush1.msra.mxu0 %v2159
  %2418 = vmatprep.subr.mxu0 0.0
  %2419 = vmatpush1.msra.mxu0 0.0
  %2420 = vmatprep.subr.mxu0 0.0
  %2421 = vmatpush1.msra.mxu0 0.0
  %2422 = vmatprep.subr.mxu0 0.0
  %2423 = vmatpush1.msra.mxu0 0.0
  %2424 = vmatprep.subr.mxu0 0.0
  %2425 = vmatpush1.msra.mxu0 0.0
  %2426 = vmatprep.subr.mxu0 0.0
  %2427 = vmatpush1.msra.mxu0 0.0
  %2428 = vmatprep.subr.mxu0 0.0
  %2429 = vmatpush1.msra.mxu0 0.0
  %2430 = vmatprep.subr.mxu0 0.0
  %2431 = vmatpush1.msra.mxu0 0.0
  %2432 = vmatprep.subr.mxu0 0.0
  %2433 = vmatpush1.msra.mxu0 0.0
  %2434 = vmatprep.subr.mxu0 0.0
  %2435 = vmatpush1.msra.mxu0 0.0
  %2436 = vmatprep.subr.mxu0 0.0
  %2437 = vmatpush1.msra.mxu0 0.0
  %2438 = vmatprep.subr.mxu0 0.0
  %2439 = vmatpush1.msra.mxu0 0.0
  %2440 = vmatprep.subr.mxu0 0.0
  %2441 = vmatpush1.msra.mxu0 0.0
  %2442 = vmatprep.subr.mxu0 0.0
  %2443 = vmatpush1.msra.mxu0 0.0
  %2444 = vmatprep.subr.mxu0 0.0
  %2445 = vmatpush1.msra.mxu0 0.0
  %2446 = vmatprep.subr.mxu0 0.0
  %2447 = vmatpush1.msra.mxu0 0.0
  %2448 = vmatprep.subr.mxu0 0.0
  %2449 = vmatpush1.msra.mxu0 0.0
  %2450 = vmatprep.subr.mxu0 0.0
  %2451 = vmatpush1.msra.mxu0 0.0
  %2452 = vmatprep.subr.mxu0 0.0
  %2453 = vmatpush1.msra.mxu0 0.0
  %2454 = vmatprep.subr.mxu0 0.0
  %2455 = vmatpush1.msra.mxu0 0.0
  %2456 = vmatprep.subr.mxu0 0.0
  %2457 = vmatpush1.msra.mxu0 0.0
  %2458 = vmatprep.subr.mxu0 0.0
  %2459 = vmatpush1.msra.mxu0 0.0
  %2460 = vmatprep.subr.mxu0 0.0
  %2461 = vmatpush1.msra.mxu0 0.0
  %2462 = vmatprep.subr.mxu0 0.0
  %2463 = vmatpush1.msra.mxu0 0.0
  %2464 = vmatprep.subr.mxu0 0.0
  %2465 = vmatpush1.msra.mxu0 0.0
  %2466 = vmatprep.subr.mxu0 0.0
  %2467 = vmatpush1.msra.mxu0 0.0
  %2468 = vmatprep.subr.mxu0 0.0
  %2469 = vmatpush1.msra.mxu0 0.0
  %2470 = vmatprep.subr.mxu0 0.0
  %2471 = vmatpush1.msra.mxu0 0.0
  %2472 = vmatprep.subr.mxu0 0.0
  %2473 = vmatpush1.msra.mxu0 0.0
  %2474 = vmatprep.mubr.f32.mxu0 0.0
  %2475 = vmatmul.mubr.f32.gmra.mrb[0].mxu0 %v2246
  %v2476 = vpop.f32.mrb[0].mxu0
  %v2477 = vadd.f32 %v2402, %v2476
  %v2478 = vpop.f32.mrb[0].mxu0
  %2479 = vmatprep.mubr.f32.mxu0 0.0
  %2480 = vmatmul.mubr.f32.gmra.mrb[0].mxu0 %v2249
  %v2481 = vpop.f32.mrb[0].mxu0
  %v2482 = vadd.f32 %v2407, %v2481
  %v2483 = vpop.f32.mrb[0].mxu0
  %2484 = vdwg.mxu0
  %v2485 = vld [vmem:[%s15] sm:$0x1]
  %v2487 = vlaneseq
  %v2488 = vshrl.u32 %v2487, 7
  %v2489 = vsub.s32 0, %v2488
  %v2490 = vrot.slane %v2485, %v2489
  %v2492 = vadd.f32 %v2477, %v2490
  %v2493 = vadd.f32 %v2482, %v2490
  %v2494 = vld [vmem:[%s11] sm:$0xff]
  %v2495 = vld [vmem:[%s11 + $0x8] sm:$0xff]
  %v2496 = vld [vmem:[%s11 + $0x10] sm:$0xff]
  %v2497 = vld [vmem:[%s11 + $0x18] sm:$0xff]
  %s2498 = scalar_lea.vmem %s2, 4
  %v2499 = vld [vmem:[%s2498] sm:$0x3]
  %s2500 = scalar_lea.vmem %s3, 4
  %v2501 = vld [vmem:[%s2500] sm:$0x3]
  %v2503 = vsel %vm185, %v2499, 0
  %2505 = vmatprep.subr.mxu0 0.0
  %2506 = vmatpush1.msra.mxu0 %v2494
  %2507 = vmatprep.subr.mxu0 0.0
  %2508 = vmatpush1.msra.mxu0 %v2495
  %2509 = vmatprep.subr.mxu0 0.0
  %2510 = vmatpush1.msra.mxu0 %v2496
  %2511 = vmatprep.subr.mxu0 0.0
  %2512 = vmatpush1.msra.mxu0 %v2497
  %2513 = vmatprep.subr.mxu0 0.0
  %2514 = vmatpush1.msra.mxu0 0.0
  %2515 = vmatprep.subr.mxu0 0.0
  %2516 = vmatpush1.msra.mxu0 0.0
  %2517 = vmatprep.subr.mxu0 0.0
  %2518 = vmatpush1.msra.mxu0 0.0
  %2519 = vmatprep.subr.mxu0 0.0
  %2520 = vmatpush1.msra.mxu0 0.0
  %2521 = vmatprep.subr.mxu0 0.0
  %2522 = vmatpush1.msra.mxu0 0.0
  %2523 = vmatprep.subr.mxu0 0.0
  %2524 = vmatpush1.msra.mxu0 0.0
  %2525 = vmatprep.subr.mxu0 0.0
  %2526 = vmatpush1.msra.mxu0 0.0
  %2527 = vmatprep.subr.mxu0 0.0
  %2528 = vmatpush1.msra.mxu0 0.0
  %2529 = vmatprep.subr.mxu0 0.0
  %2530 = vmatpush1.msra.mxu0 0.0
  %2531 = vmatprep.subr.mxu0 0.0
  %2532 = vmatpush1.msra.mxu0 0.0
  %2533 = vmatprep.subr.mxu0 0.0
  %2534 = vmatpush1.msra.mxu0 0.0
  %2535 = vmatprep.subr.mxu0 0.0
  %2536 = vmatpush1.msra.mxu0 0.0
  %2537 = vmatprep.subr.mxu0 0.0
  %2538 = vmatpush1.msra.mxu0 0.0
  %2539 = vmatprep.subr.mxu0 0.0
  %2540 = vmatpush1.msra.mxu0 0.0
  %2541 = vmatprep.subr.mxu0 0.0
  %2542 = vmatpush1.msra.mxu0 0.0
  %2543 = vmatprep.subr.mxu0 0.0
  %2544 = vmatpush1.msra.mxu0 0.0
  %2545 = vmatprep.subr.mxu0 0.0
  %2546 = vmatpush1.msra.mxu0 0.0
  %2547 = vmatprep.subr.mxu0 0.0
  %2548 = vmatpush1.msra.mxu0 0.0
  %2549 = vmatprep.subr.mxu0 0.0
  %2550 = vmatpush1.msra.mxu0 0.0
  %2551 = vmatprep.subr.mxu0 0.0
  %2552 = vmatpush1.msra.mxu0 0.0
  %2553 = vmatprep.subr.mxu0 0.0
  %2554 = vmatpush1.msra.mxu0 0.0
  %2555 = vmatprep.subr.mxu0 0.0
  %2556 = vmatpush1.msra.mxu0 0.0
  %2557 = vmatprep.subr.mxu0 0.0
  %2558 = vmatpush1.msra.mxu0 0.0
  %2559 = vmatprep.subr.mxu0 0.0
  %2560 = vmatpush1.msra.mxu0 0.0
  %2561 = vmatprep.subr.mxu0 0.0
  %2562 = vmatpush1.msra.mxu0 0.0
  %2563 = vmatprep.subr.mxu0 0.0
  %2564 = vmatpush1.msra.mxu0 0.0
  %2565 = vmatprep.subr.mxu0 0.0
  %2566 = vmatpush1.msra.mxu0 0.0
  %2567 = vmatprep.subr.mxu0 0.0
  %2568 = vmatpush1.msra.mxu0 0.0
  %2569 = vmatprep.mubr.f32.mxu0 0.0
  %2570 = vmatmul.mubr.f32.gmra.mrb[0].mxu0 %v2503
  %v2571 = vpop.f32.mrb[0].mxu0
  %v2572 = vadd.f32 0.0, %v2571
  %v2573 = vpop.f32.mrb[0].mxu0
  %2574 = vdwg.mxu0
  %v2575 = vadd.f32 %v2333, %v2572
  %v2576 = vtanh.pop %v2575
  %v2577 = vxor.u32 %v2575, 2147483648
  %v2578 = vmul.f32 %v2577, 1.442695
  %v2579 = vpow.pop %v2578
  %v2580 = vadd.f32 %v2579, 1.0
  %v2581 = vrcp.pop %v2580
  %v2582 = vmul.f32 1.0, %v2581
  %v2583 = vsel %vm435, %v2576, %v2582
  %2585 = vrot.lane.b32.xlu0 %v2501, 32
  %v2586 = vpop.permute.xlu0 %2585
  %v2588 = vmul.f32 %v2583, %v2586
  %2590 = vrot.lane.b32.xlu0 %v2583, 64
  %v2591 = vpop.permute.xlu0 %2590
  %v2593 = vmul.f32 %v2583, %v2591
  %2595 = vrot.lane.b32.xlu0 %v2593, 32
  %v2596 = vpop.permute.xlu0 %2595
  %v2598 = vadd.f32 %v2588, %v2596
  %v2599 = vtanh.pop %v2598
  %2601 = vrot.lane.b32.xlu0 %v2599, 64
  %v2602 = vpop.permute.xlu0 %2601
  %v2604 = vmul.f32 %v2583, %v2602
  %2606 = vrot.lane.b32.xlu0 %v2604, 32
  %v2607 = vpop.permute.xlu0 %2606
  %2609 = vst.msk [vmem:[#allocation4] sm:$0x3] %vm469, %v2607
  %v2610 = vsel %vm185, %v2607, 0
  %2612 = vmatprep.subr.mxu0 0.0
  %2613 = vmatpush1.msra.mxu0 %v2494
  %2614 = vmatprep.subr.mxu0 0.0
  %2615 = vmatpush1.msra.mxu0 %v2495
  %2616 = vmatprep.subr.mxu0 0.0
  %2617 = vmatpush1.msra.mxu0 %v2496
  %2618 = vmatprep.subr.mxu0 0.0
  %2619 = vmatpush1.msra.mxu0 %v2497
  %2620 = vmatprep.subr.mxu0 0.0
  %2621 = vmatpush1.msra.mxu0 0.0
  %2622 = vmatprep.subr.mxu0 0.0
  %2623 = vmatpush1.msra.mxu0 0.0
  %2624 = vmatprep.subr.mxu0 0.0
  %2625 = vmatpush1.msra.mxu0 0.0
  %2626 = vmatprep.subr.mxu0 0.0
  %2627 = vmatpush1.msra.mxu0 0.0
  %2628 = vmatprep.subr.mxu0 0.0
  %2629 = vmatpush1.msra.mxu0 0.0
  %2630 = vmatprep.subr.mxu0 0.0
  %2631 = vmatpush1.msra.mxu0 0.0
  %2632 = vmatprep.subr.mxu0 0.0
  %2633 = vmatpush1.msra.mxu0 0.0
  %2634 = vmatprep.subr.mxu0 0.0
  %2635 = vmatpush1.msra.mxu0 0.0
  %2636 = vmatprep.subr.mxu0 0.0
  %2637 = vmatpush1.msra.mxu0 0.0
  %2638 = vmatprep.subr.mxu0 0.0
  %2639 = vmatpush1.msra.mxu0 0.0
  %2640 = vmatprep.subr.mxu0 0.0
  %2641 = vmatpush1.msra.mxu0 0.0
  %2642 = vmatprep.subr.mxu0 0.0
  %2643 = vmatpush1.msra.mxu0 0.0
  %2644 = vmatprep.subr.mxu0 0.0
  %2645 = vmatpush1.msra.mxu0 0.0
  %2646 = vmatprep.subr.mxu0 0.0
  %2647 = vmatpush1.msra.mxu0 0.0
  %2648 = vmatprep.subr.mxu0 0.0
  %2649 = vmatpush1.msra.mxu0 0.0
  %2650 = vmatprep.subr.mxu0 0.0
  %2651 = vmatpush1.msra.mxu0 0.0
  %2652 = vmatprep.subr.mxu0 0.0
  %2653 = vmatpush1.msra.mxu0 0.0
  %2654 = vmatprep.subr.mxu0 0.0
  %2655 = vmatpush1.msra.mxu0 0.0
  %2656 = vmatprep.subr.mxu0 0.0
  %2657 = vmatpush1.msra.mxu0 0.0
  %2658 = vmatprep.subr.mxu0 0.0
  %2659 = vmatpush1.msra.mxu0 0.0
  %2660 = vmatprep.subr.mxu0 0.0
  %2661 = vmatpush1.msra.mxu0 0.0
  %2662 = vmatprep.subr.mxu0 0.0
  %2663 = vmatpush1.msra.mxu0 0.0
  %2664 = vmatprep.subr.mxu0 0.0
  %2665 = vmatpush1.msra.mxu0 0.0
  %2666 = vmatprep.subr.mxu0 0.0
  %2667 = vmatpush1.msra.mxu0 0.0
  %2668 = vmatprep.subr.mxu0 0.0
  %2669 = vmatpush1.msra.mxu0 0.0
  %2670 = vmatprep.subr.mxu0 0.0
  %2671 = vmatpush1.msra.mxu0 0.0
  %2672 = vmatprep.subr.mxu0 0.0
  %2673 = vmatpush1.msra.mxu0 0.0
  %2674 = vmatprep.subr.mxu0 0.0
  %2675 = vmatpush1.msra.mxu0 0.0
  %2676 = vmatprep.mubr.f32.mxu0 0.0
  %2677 = vmatmul.mubr.f32.gmra.mrb[0].mxu0 %v2610
  %v2678 = vpop.f32.mrb[0].mxu0
  %v2679 = vadd.f32 0.0, %v2678
  %v2680 = vpop.f32.mrb[0].mxu0
  %2681 = vdwg.mxu0
  %v2683 = vrot.slane %v2679, 6
  %v2685 = vadd.f32 %v2333, %v2683
  %v2686 = vtanh.pop %v2685
  %v2687 = vxor.u32 %v2685, 2147483648
  %v2688 = vmul.f32 %v2687, 1.442695
  %v2689 = vpow.pop %v2688
  %v2690 = vadd.f32 %v2689, 1.0
  %v2691 = vrcp.pop %v2690
  %v2692 = vmul.f32 1.0, %v2691
  %v2693 = vsel %vm435, %v2686, %v2692
  %v2695 = vrot.slane %v2598, 6
  %v2697 = vmul.f32 %v2693, %v2695
  %2699 = vrot.lane.b32.xlu0 %v2693, 64
  %v2700 = vpop.permute.xlu0 %2699
  %v2702 = vmul.f32 %v2693, %v2700
  %2704 = vrot.lane.b32.xlu0 %v2702, 32
  %v2705 = vpop.permute.xlu0 %2704
  %v2707 = vadd.f32 %v2697, %v2705
  %v2708 = vtanh.pop %v2707
  %2710 = vrot.lane.b32.xlu0 %v2708, 64
  %v2711 = vpop.permute.xlu0 %2710
  %v2713 = vmul.f32 %v2693, %v2711
  %2715 = vrot.lane.b32.xlu0 %v2713, 32
  %v2716 = vpop.permute.xlu0 %2715
  %2718 = vst.msk [vmem:[#allocation4] sm:$0xc] %vm579, %v2716
  %v2719 = vrot.slane %v2713, 2
  %2720 = vrot.lane.b32.xlu0 %v2719, 32
  %v2721 = vpop.permute.xlu0 %2720
  %v2722 = vsel %vm185, %v2721, 0
  %2724 = vmatprep.subr.mxu0 0.0
  %2725 = vmatpush1.msra.mxu0 %v2494
  %2726 = vmatprep.subr.mxu0 0.0
  %2727 = vmatpush1.msra.mxu0 %v2495
  %2728 = vmatprep.subr.mxu0 0.0
  %2729 = vmatpush1.msra.mxu0 %v2496
  %2730 = vmatprep.subr.mxu0 0.0
  %2731 = vmatpush1.msra.mxu0 %v2497
  %2732 = vmatprep.subr.mxu0 0.0
  %2733 = vmatpush1.msra.mxu0 0.0
  %2734 = vmatprep.subr.mxu0 0.0
  %2735 = vmatpush1.msra.mxu0 0.0
  %2736 = vmatprep.subr.mxu0 0.0
  %2737 = vmatpush1.msra.mxu0 0.0
  %2738 = vmatprep.subr.mxu0 0.0
  %2739 = vmatpush1.msra.mxu0 0.0
  %2740 = vmatprep.subr.mxu0 0.0
  %2741 = vmatpush1.msra.mxu0 0.0
  %2742 = vmatprep.subr.mxu0 0.0
  %2743 = vmatpush1.msra.mxu0 0.0
  %2744 = vmatprep.subr.mxu0 0.0
  %2745 = vmatpush1.msra.mxu0 0.0
  %2746 = vmatprep.subr.mxu0 0.0
  %2747 = vmatpush1.msra.mxu0 0.0
  %2748 = vmatprep.subr.mxu0 0.0
  %2749 = vmatpush1.msra.mxu0 0.0
  %2750 = vmatprep.subr.mxu0 0.0
  %2751 = vmatpush1.msra.mxu0 0.0
  %2752 = vmatprep.subr.mxu0 0.0
  %2753 = vmatpush1.msra.mxu0 0.0
  %2754 = vmatprep.subr.mxu0 0.0
  %2755 = vmatpush1.msra.mxu0 0.0
  %2756 = vmatprep.subr.mxu0 0.0
  %2757 = vmatpush1.msra.mxu0 0.0
  %2758 = vmatprep.subr.mxu0 0.0
  %2759 = vmatpush1.msra.mxu0 0.0
  %2760 = vmatprep.subr.mxu0 0.0
  %2761 = vmatpush1.msra.mxu0 0.0
  %2762 = vmatprep.subr.mxu0 0.0
  %2763 = vmatpush1.msra.mxu0 0.0
  %2764 = vmatprep.subr.mxu0 0.0
  %2765 = vmatpush1.msra.mxu0 0.0
  %2766 = vmatprep.subr.mxu0 0.0
  %2767 = vmatpush1.msra.mxu0 0.0
  %2768 = vmatprep.subr.mxu0 0.0
  %2769 = vmatpush1.msra.mxu0 0.0
  %2770 = vmatprep.subr.mxu0 0.0
  %2771 = vmatpush1.msra.mxu0 0.0
  %2772 = vmatprep.subr.mxu0 0.0
  %2773 = vmatpush1.msra.mxu0 0.0
  %2774 = vmatprep.subr.mxu0 0.0
  %2775 = vmatpush1.msra.mxu0 0.0
  %2776 = vmatprep.subr.mxu0 0.0
  %2777 = vmatpush1.msra.mxu0 0.0
  %2778 = vmatprep.subr.mxu0 0.0
  %2779 = vmatpush1.msra.mxu0 0.0
  %2780 = vmatprep.subr.mxu0 0.0
  %2781 = vmatpush1.msra.mxu0 0.0
  %2782 = vmatprep.subr.mxu0 0.0
  %2783 = vmatpush1.msra.mxu0 0.0
  %2784 = vmatprep.subr.mxu0 0.0
  %2785 = vmatpush1.msra.mxu0 0.0
  %2786 = vmatprep.subr.mxu0 0.0
  %2787 = vmatpush1.msra.mxu0 0.0
  %2788 = vmatprep.mubr.f32.mxu0 0.0
  %2789 = vmatmul.mubr.f32.gmra.mrb[0].mxu0 %v2722
  %v2790 = vpop.f32.mrb[0].mxu0
  %v2791 = vadd.f32 0.0, %v2790
  %v2792 = vpop.f32.mrb[0].mxu0
  %2793 = vdwg.mxu0
  %v2795 = vrot.slane %v2791, 4
  %v2797 = vadd.f32 %v2333, %v2795
  %v2798 = vtanh.pop %v2797
  %v2799 = vxor.u32 %v2797, 2147483648
  %v2800 = vmul.f32 %v2799, 1.442695
  %v2801 = vpow.pop %v2800
  %v2802 = vadd.f32 %v2801, 1.0
  %v2803 = vrcp.pop %v2802
  %v2804 = vmul.f32 1.0, %v2803
  %v2805 = vsel %vm435, %v2798, %v2804
  %v2807 = vrot.slane %v2707, 6
  %v2809 = vmul.f32 %v2805, %v2807
  %2811 = vrot.lane.b32.xlu0 %v2805, 64
  %v2812 = vpop.permute.xlu0 %2811
  %v2814 = vmul.f32 %v2805, %v2812
  %2816 = vrot.lane.b32.xlu0 %v2814, 32
  %v2817 = vpop.permute.xlu0 %2816
  %v2819 = vadd.f32 %v2809, %v2817
  %v2820 = vtanh.pop %v2819
  %2822 = vrot.lane.b32.xlu0 %v2820, 64
  %v2823 = vpop.permute.xlu0 %2822
  %v2825 = vmul.f32 %v2805, %v2823
  %2827 = vrot.lane.b32.xlu0 %v2825, 32
  %v2828 = vpop.permute.xlu0 %2827
  %2830 = vst.msk [vmem:[#allocation4] sm:$0x30] %vm692, %v2828
  %v2831 = vrot.slane %v2825, 4
  %2832 = vrot.lane.b32.xlu0 %v2831, 32
  %v2833 = vpop.permute.xlu0 %2832
  %v2834 = vsel %vm185, %v2833, 0
  %2836 = vmatprep.subr.mxu0 0.0
  %2837 = vmatpush1.msra.mxu0 %v2494
  %2838 = vmatprep.subr.mxu0 0.0
  %2839 = vmatpush1.msra.mxu0 %v2495
  %2840 = vmatprep.subr.mxu0 0.0
  %2841 = vmatpush1.msra.mxu0 %v2496
  %2842 = vmatprep.subr.mxu0 0.0
  %2843 = vmatpush1.msra.mxu0 %v2497
  %2844 = vmatprep.subr.mxu0 0.0
  %2845 = vmatpush1.msra.mxu0 0.0
  %2846 = vmatprep.subr.mxu0 0.0
  %2847 = vmatpush1.msra.mxu0 0.0
  %2848 = vmatprep.subr.mxu0 0.0
  %2849 = vmatpush1.msra.mxu0 0.0
  %2850 = vmatprep.subr.mxu0 0.0
  %2851 = vmatpush1.msra.mxu0 0.0
  %2852 = vmatprep.subr.mxu0 0.0
  %2853 = vmatpush1.msra.mxu0 0.0
  %2854 = vmatprep.subr.mxu0 0.0
  %2855 = vmatpush1.msra.mxu0 0.0
  %2856 = vmatprep.subr.mxu0 0.0
  %2857 = vmatpush1.msra.mxu0 0.0
  %2858 = vmatprep.subr.mxu0 0.0
  %2859 = vmatpush1.msra.mxu0 0.0
  %2860 = vmatprep.subr.mxu0 0.0
  %2861 = vmatpush1.msra.mxu0 0.0
  %2862 = vmatprep.subr.mxu0 0.0
  %2863 = vmatpush1.msra.mxu0 0.0
  %2864 = vmatprep.subr.mxu0 0.0
  %2865 = vmatpush1.msra.mxu0 0.0
  %2866 = vmatprep.subr.mxu0 0.0
  %2867 = vmatpush1.msra.mxu0 0.0
  %2868 = vmatprep.subr.mxu0 0.0
  %2869 = vmatpush1.msra.mxu0 0.0
  %2870 = vmatprep.subr.mxu0 0.0
  %2871 = vmatpush1.msra.mxu0 0.0
  %2872 = vmatprep.subr.mxu0 0.0
  %2873 = vmatpush1.msra.mxu0 0.0
  %2874 = vmatprep.subr.mxu0 0.0
  %2875 = vmatpush1.msra.mxu0 0.0
  %2876 = vmatprep.subr.mxu0 0.0
  %2877 = vmatpush1.msra.mxu0 0.0
  %2878 = vmatprep.subr.mxu0 0.0
  %2879 = vmatpush1.msra.mxu0 0.0
  %2880 = vmatprep.subr.mxu0 0.0
  %2881 = vmatpush1.msra.mxu0 0.0
  %2882 = vmatprep.subr.mxu0 0.0
  %2883 = vmatpush1.msra.mxu0 0.0
  %2884 = vmatprep.subr.mxu0 0.0
  %2885 = vmatpush1.msra.mxu0 0.0
  %2886 = vmatprep.subr.mxu0 0.0
  %2887 = vmatpush1.msra.mxu0 0.0
  %2888 = vmatprep.subr.mxu0 0.0
  %2889 = vmatpush1.msra.mxu0 0.0
  %2890 = vmatprep.subr.mxu0 0.0
  %2891 = vmatpush1.msra.mxu0 0.0
  %2892 = vmatprep.subr.mxu0 0.0
  %2893 = vmatpush1.msra.mxu0 0.0
  %2894 = vmatprep.subr.mxu0 0.0
  %2895 = vmatpush1.msra.mxu0 0.0
  %2896 = vmatprep.subr.mxu0 0.0
  %2897 = vmatpush1.msra.mxu0 0.0
  %2898 = vmatprep.subr.mxu0 0.0
  %2899 = vmatpush1.msra.mxu0 0.0
  %2900 = vmatprep.mubr.f32.mxu0 0.0
  %2901 = vmatmul.mubr.f32.gmra.mrb[0].mxu0 %v2834
  %v2902 = vpop.f32.mrb[0].mxu0
  %v2903 = vadd.f32 0.0, %v2902
  %v2904 = vpop.f32.mrb[0].mxu0
  %2905 = vdwg.mxu0
  %v2907 = vrot.slane %v2903, 2
  %v2909 = vadd.f32 %v2333, %v2907
  %v2910 = vtanh.pop %v2909
  %v2911 = vxor.u32 %v2909, 2147483648
  %v2912 = vmul.f32 %v2911, 1.442695
  %v2913 = vpow.pop %v2912
  %v2914 = vadd.f32 %v2913, 1.0
  %v2915 = vrcp.pop %v2914
  %v2916 = vmul.f32 1.0, %v2915
  %v2917 = vsel %vm435, %v2910, %v2916
  %v2919 = vrot.slane %v2819, 6
  %v2921 = vmul.f32 %v2917, %v2919
  %2923 = vrot.lane.b32.xlu0 %v2917, 64
  %v2924 = vpop.permute.xlu0 %2923
  %v2926 = vmul.f32 %v2917, %v2924
  %2928 = vrot.lane.b32.xlu0 %v2926, 32
  %v2929 = vpop.permute.xlu0 %2928
  %v2931 = vadd.f32 %v2921, %v2929
  %v2932 = vtanh.pop %v2931
  %2934 = vrot.lane.b32.xlu0 %v2932, 64
  %v2935 = vpop.permute.xlu0 %2934
  %v2937 = vmul.f32 %v2917, %v2935
  %2939 = vrot.lane.b32.xlu0 %v2937, 32
  %v2940 = vpop.permute.xlu0 %2939
  %2942 = vst.msk [vmem:[#allocation4] sm:$0xc0] %vm805, %v2940
  %v2943 = vrot.slane %v2937, 6
  %2944 = vrot.lane.b32.xlu0 %v2943, 32
  %v2945 = vpop.permute.xlu0 %2944
  %v2946 = vsel %vm185, %v2945, 0
  %2948 = vmatprep.subr.mxu0 0.0
  %2949 = vmatpush1.msra.mxu0 %v2494
  %2950 = vmatprep.subr.mxu0 0.0
  %2951 = vmatpush1.msra.mxu0 %v2495
  %2952 = vmatprep.subr.mxu0 0.0
  %2953 = vmatpush1.msra.mxu0 %v2496
  %2954 = vmatprep.subr.mxu0 0.0
  %2955 = vmatpush1.msra.mxu0 %v2497
  %2956 = vmatprep.subr.mxu0 0.0
  %2957 = vmatpush1.msra.mxu0 0.0
  %2958 = vmatprep.subr.mxu0 0.0
  %2959 = vmatpush1.msra.mxu0 0.0
  %2960 = vmatprep.subr.mxu0 0.0
  %2961 = vmatpush1.msra.mxu0 0.0
  %2962 = vmatprep.subr.mxu0 0.0
  %2963 = vmatpush1.msra.mxu0 0.0
  %2964 = vmatprep.subr.mxu0 0.0
  %2965 = vmatpush1.msra.mxu0 0.0
  %2966 = vmatprep.subr.mxu0 0.0
  %2967 = vmatpush1.msra.mxu0 0.0
  %2968 = vmatprep.subr.mxu0 0.0
  %2969 = vmatpush1.msra.mxu0 0.0
  %2970 = vmatprep.subr.mxu0 0.0
  %2971 = vmatpush1.msra.mxu0 0.0
  %2972 = vmatprep.subr.mxu0 0.0
  %2973 = vmatpush1.msra.mxu0 0.0
  %2974 = vmatprep.subr.mxu0 0.0
  %2975 = vmatpush1.msra.mxu0 0.0
  %2976 = vmatprep.subr.mxu0 0.0
  %2977 = vmatpush1.msra.mxu0 0.0
  %2978 = vmatprep.subr.mxu0 0.0
  %2979 = vmatpush1.msra.mxu0 0.0
  %2980 = vmatprep.subr.mxu0 0.0
  %2981 = vmatpush1.msra.mxu0 0.0
  %2982 = vmatprep.subr.mxu0 0.0
  %2983 = vmatpush1.msra.mxu0 0.0
  %2984 = vmatprep.subr.mxu0 0.0
  %2985 = vmatpush1.msra.mxu0 0.0
  %2986 = vmatprep.subr.mxu0 0.0
  %2987 = vmatpush1.msra.mxu0 0.0
  %2988 = vmatprep.subr.mxu0 0.0
  %2989 = vmatpush1.msra.mxu0 0.0
  %2990 = vmatprep.subr.mxu0 0.0
  %2991 = vmatpush1.msra.mxu0 0.0
  %2992 = vmatprep.subr.mxu0 0.0
  %2993 = vmatpush1.msra.mxu0 0.0
  %2994 = vmatprep.subr.mxu0 0.0
  %2995 = vmatpush1.msra.mxu0 0.0
  %2996 = vmatprep.subr.mxu0 0.0
  %2997 = vmatpush1.msra.mxu0 0.0
  %2998 = vmatprep.subr.mxu0 0.0
  %2999 = vmatpush1.msra.mxu0 0.0
  %3000 = vmatprep.subr.mxu0 0.0
  %3001 = vmatpush1.msra.mxu0 0.0
  %3002 = vmatprep.subr.mxu0 0.0
  %3003 = vmatpush1.msra.mxu0 0.0
  %3004 = vmatprep.subr.mxu0 0.0
  %3005 = vmatpush1.msra.mxu0 0.0
  %3006 = vmatprep.subr.mxu0 0.0
  %3007 = vmatpush1.msra.mxu0 0.0
  %3008 = vmatprep.subr.mxu0 0.0
  %3009 = vmatpush1.msra.mxu0 0.0
  %3010 = vmatprep.subr.mxu0 0.0
  %3011 = vmatpush1.msra.mxu0 0.0
  %3012 = vmatprep.mubr.f32.mxu0 0.0
  %3013 = vmatmul.mubr.f32.gmra.mrb[0].mxu0 %v2946
  %v3014 = vpop.f32.mrb[0].mxu0
  %v3015 = vadd.f32 0.0, %v3014
  %v3016 = vpop.f32.mrb[0].mxu0
  %3017 = vdwg.mxu0
  %v3018 = vadd.f32 %v2334, %v3015
  %v3019 = vtanh.pop %v3018
  %v3020 = vxor.u32 %v3018, 2147483648
  %v3021 = vmul.f32 %v3020, 1.442695
  %v3022 = vpow.pop %v3021
  %v3023 = vadd.f32 %v3022, 1.0
  %v3024 = vrcp.pop %v3023
  %v3025 = vmul.f32 1.0, %v3024
  %v3026 = vsel %vm435, %v3019, %v3025
  %v3028 = vrot.slane %v2931, 6
  %v3030 = vmul.f32 %v3026, %v3028
  %3032 = vrot.lane.b32.xlu0 %v3026, 64
  %v3033 = vpop.permute.xlu0 %3032
  %v3035 = vmul.f32 %v3026, %v3033
  %3037 = vrot.lane.b32.xlu0 %v3035, 32
  %v3038 = vpop.permute.xlu0 %3037
  %v3040 = vadd.f32 %v3030, %v3038
  %v3041 = vtanh.pop %v3040
  %3043 = vrot.lane.b32.xlu0 %v3041, 64
  %v3044 = vpop.permute.xlu0 %3043
  %v3046 = vmul.f32 %v3026, %v3044
  %3048 = vrot.lane.b32.xlu0 %v3046, 32
  %v3049 = vpop.permute.xlu0 %3048
  %3051 = vst.msk [vmem:[#allocation4 + $0x8] sm:$0x3] %vm469, %v3049
  %v3052 = vsel %vm185, %v3049, 0
  %3054 = vmatprep.subr.mxu0 0.0
  %3055 = vmatpush1.msra.mxu0 %v2494
  %3056 = vmatprep.subr.mxu0 0.0
  %3057 = vmatpush1.msra.mxu0 %v2495
  %3058 = vmatprep.subr.mxu0 0.0
  %3059 = vmatpush1.msra.mxu0 %v2496
  %3060 = vmatprep.subr.mxu0 0.0
  %3061 = vmatpush1.msra.mxu0 %v2497
  %3062 = vmatprep.subr.mxu0 0.0
  %3063 = vmatpush1.msra.mxu0 0.0
  %3064 = vmatprep.subr.mxu0 0.0
  %3065 = vmatpush1.msra.mxu0 0.0
  %3066 = vmatprep.subr.mxu0 0.0
  %3067 = vmatpush1.msra.mxu0 0.0
  %3068 = vmatprep.subr.mxu0 0.0
  %3069 = vmatpush1.msra.mxu0 0.0
  %3070 = vmatprep.subr.mxu0 0.0
  %3071 = vmatpush1.msra.mxu0 0.0
  %3072 = vmatprep.subr.mxu0 0.0
  %3073 = vmatpush1.msra.mxu0 0.0
  %3074 = vmatprep.subr.mxu0 0.0
  %3075 = vmatpush1.msra.mxu0 0.0
  %3076 = vmatprep.subr.mxu0 0.0
  %3077 = vmatpush1.msra.mxu0 0.0
  %3078 = vmatprep.subr.mxu0 0.0
  %3079 = vmatpush1.msra.mxu0 0.0
  %3080 = vmatprep.subr.mxu0 0.0
  %3081 = vmatpush1.msra.mxu0 0.0
  %3082 = vmatprep.subr.mxu0 0.0
  %3083 = vmatpush1.msra.mxu0 0.0
  %3084 = vmatprep.subr.mxu0 0.0
  %3085 = vmatpush1.msra.mxu0 0.0
  %3086 = vmatprep.subr.mxu0 0.0
  %3087 = vmatpush1.msra.mxu0 0.0
  %3088 = vmatprep.subr.mxu0 0.0
  %3089 = vmatpush1.msra.mxu0 0.0
  %3090 = vmatprep.subr.mxu0 0.0
  %3091 = vmatpush1.msra.mxu0 0.0
  %3092 = vmatprep.subr.mxu0 0.0
  %3093 = vmatpush1.msra.mxu0 0.0
  %3094 = vmatprep.subr.mxu0 0.0
  %3095 = vmatpush1.msra.mxu0 0.0
  %3096 = vmatprep.subr.mxu0 0.0
  %3097 = vmatpush1.msra.mxu0 0.0
  %3098 = vmatprep.subr.mxu0 0.0
  %3099 = vmatpush1.msra.mxu0 0.0
  %3100 = vmatprep.subr.mxu0 0.0
  %3101 = vmatpush1.msra.mxu0 0.0
  %3102 = vmatprep.subr.mxu0 0.0
  %3103 = vmatpush1.msra.mxu0 0.0
  %3104 = vmatprep.subr.mxu0 0.0
  %3105 = vmatpush1.msra.mxu0 0.0
  %3106 = vmatprep.subr.mxu0 0.0
  %3107 = vmatpush1.msra.mxu0 0.0
  %3108 = vmatprep.subr.mxu0 0.0
  %3109 = vmatpush1.msra.mxu0 0.0
  %3110 = vmatprep.subr.mxu0 0.0
  %3111 = vmatpush1.msra.mxu0 0.0
  %3112 = vmatprep.subr.mxu0 0.0
  %3113 = vmatpush1.msra.mxu0 0.0
  %3114 = vmatprep.subr.mxu0 0.0
  %3115 = vmatpush1.msra.mxu0 0.0
  %3116 = vmatprep.subr.mxu0 0.0
  %3117 = vmatpush1.msra.mxu0 0.0
  %3118 = vmatprep.mubr.f32.mxu0 0.0
  %3119 = vmatmul.mubr.f32.gmra.mrb[0].mxu0 %v3052
  %v3120 = vpop.f32.mrb[0].mxu0
  %v3121 = vadd.f32 0.0, %v3120
  %v3122 = vpop.f32.mrb[0].mxu0
  %3123 = vdwg.mxu0
  %v3125 = vrot.slane %v3121, 6
  %v3127 = vadd.f32 %v2334, %v3125
  %v3128 = vtanh.pop %v3127
  %v3129 = vxor.u32 %v3127, 2147483648
  %v3130 = vmul.f32 %v3129, 1.442695
  %v3131 = vpow.pop %v3130
  %v3132 = vadd.f32 %v3131, 1.0
  %v3133 = vrcp.pop %v3132
  %v3134 = vmul.f32 1.0, %v3133
  %v3135 = vsel %vm435, %v3128, %v3134
  %v3137 = vrot.slane %v3040, 6
  %v3139 = vmul.f32 %v3135, %v3137
  %3141 = vrot.lane.b32.xlu0 %v3135, 64
  %v3142 = vpop.permute.xlu0 %3141
  %v3144 = vmul.f32 %v3135, %v3142
  %3146 = vrot.lane.b32.xlu0 %v3144, 32
  %v3147 = vpop.permute.xlu0 %3146
  %v3149 = vadd.f32 %v3139, %v3147
  %v3150 = vtanh.pop %v3149
  %3152 = vrot.lane.b32.xlu0 %v3150, 64
  %v3153 = vpop.permute.xlu0 %3152
  %v3155 = vmul.f32 %v3135, %v3153
  %3157 = vrot.lane.b32.xlu0 %v3155, 32
  %v3158 = vpop.permute.xlu0 %3157
  %3160 = vst.msk [vmem:[#allocation4 + $0x8] sm:$0xc] %vm579, %v3158
  %v3161 = vrot.slane %v3155, 2
  %3162 = vrot.lane.b32.xlu0 %v3161, 32
  %v3163 = vpop.permute.xlu0 %3162
  %v3164 = vsel %vm185, %v3163, 0
  %3166 = vmatprep.subr.mxu0 0.0
  %3167 = vmatpush1.msra.mxu0 %v2494
  %3168 = vmatprep.subr.mxu0 0.0
  %3169 = vmatpush1.msra.mxu0 %v2495
  %3170 = vmatprep.subr.mxu0 0.0
  %3171 = vmatpush1.msra.mxu0 %v2496
  %3172 = vmatprep.subr.mxu0 0.0
  %3173 = vmatpush1.msra.mxu0 %v2497
  %3174 = vmatprep.subr.mxu0 0.0
  %3175 = vmatpush1.msra.mxu0 0.0
  %3176 = vmatprep.subr.mxu0 0.0
  %3177 = vmatpush1.msra.mxu0 0.0
  %3178 = vmatprep.subr.mxu0 0.0
  %3179 = vmatpush1.msra.mxu0 0.0
  %3180 = vmatprep.subr.mxu0 0.0
  %3181 = vmatpush1.msra.mxu0 0.0
  %3182 = vmatprep.subr.mxu0 0.0
  %3183 = vmatpush1.msra.mxu0 0.0
  %3184 = vmatprep.subr.mxu0 0.0
  %3185 = vmatpush1.msra.mxu0 0.0
  %3186 = vmatprep.subr.mxu0 0.0
  %3187 = vmatpush1.msra.mxu0 0.0
  %3188 = vmatprep.subr.mxu0 0.0
  %3189 = vmatpush1.msra.mxu0 0.0
  %3190 = vmatprep.subr.mxu0 0.0
  %3191 = vmatpush1.msra.mxu0 0.0
  %3192 = vmatprep.subr.mxu0 0.0
  %3193 = vmatpush1.msra.mxu0 0.0
  %3194 = vmatprep.subr.mxu0 0.0
  %3195 = vmatpush1.msra.mxu0 0.0
  %3196 = vmatprep.subr.mxu0 0.0
  %3197 = vmatpush1.msra.mxu0 0.0
  %3198 = vmatprep.subr.mxu0 0.0
  %3199 = vmatpush1.msra.mxu0 0.0
  %3200 = vmatprep.subr.mxu0 0.0
  %3201 = vmatpush1.msra.mxu0 0.0
  %3202 = vmatprep.subr.mxu0 0.0
  %3203 = vmatpush1.msra.mxu0 0.0
  %3204 = vmatprep.subr.mxu0 0.0
  %3205 = vmatpush1.msra.mxu0 0.0
  %3206 = vmatprep.subr.mxu0 0.0
  %3207 = vmatpush1.msra.mxu0 0.0
  %3208 = vmatprep.subr.mxu0 0.0
  %3209 = vmatpush1.msra.mxu0 0.0
  %3210 = vmatprep.subr.mxu0 0.0
  %3211 = vmatpush1.msra.mxu0 0.0
  %3212 = vmatprep.subr.mxu0 0.0
  %3213 = vmatpush1.msra.mxu0 0.0
  %3214 = vmatprep.subr.mxu0 0.0
  %3215 = vmatpush1.msra.mxu0 0.0
  %3216 = vmatprep.subr.mxu0 0.0
  %3217 = vmatpush1.msra.mxu0 0.0
  %3218 = vmatprep.subr.mxu0 0.0
  %3219 = vmatpush1.msra.mxu0 0.0
  %3220 = vmatprep.subr.mxu0 0.0
  %3221 = vmatpush1.msra.mxu0 0.0
  %3222 = vmatprep.subr.mxu0 0.0
  %3223 = vmatpush1.msra.mxu0 0.0
  %3224 = vmatprep.subr.mxu0 0.0
  %3225 = vmatpush1.msra.mxu0 0.0
  %3226 = vmatprep.subr.mxu0 0.0
  %3227 = vmatpush1.msra.mxu0 0.0
  %3228 = vmatprep.subr.mxu0 0.0
  %3229 = vmatpush1.msra.mxu0 0.0
  %3230 = vmatprep.mubr.f32.mxu0 0.0
  %3231 = vmatmul.mubr.f32.gmra.mrb[0].mxu0 %v3164
  %v3232 = vpop.f32.mrb[0].mxu0
  %v3233 = vadd.f32 0.0, %v3232
  %v3234 = vpop.f32.mrb[0].mxu0
  %3235 = vdwg.mxu0
  %v3237 = vrot.slane %v3233, 4
  %v3239 = vadd.f32 %v2334, %v3237
  %v3240 = vtanh.pop %v3239
  %v3241 = vxor.u32 %v3239, 2147483648
  %v3242 = vmul.f32 %v3241, 1.442695
  %v3243 = vpow.pop %v3242
  %v3244 = vadd.f32 %v3243, 1.0
  %v3245 = vrcp.pop %v3244
  %v3246 = vmul.f32 1.0, %v3245
  %v3247 = vsel %vm435, %v3240, %v3246
  %v3249 = vrot.slane %v3149, 6
  %v3251 = vmul.f32 %v3247, %v3249
  %3253 = vrot.lane.b32.xlu0 %v3247, 64
  %v3254 = vpop.permute.xlu0 %3253
  %v3256 = vmul.f32 %v3247, %v3254
  %3258 = vrot.lane.b32.xlu0 %v3256, 32
  %v3259 = vpop.permute.xlu0 %3258
  %v3261 = vadd.f32 %v3251, %v3259
  %v3262 = vtanh.pop %v3261
  %3264 = vrot.lane.b32.xlu0 %v3262, 64
  %v3265 = vpop.permute.xlu0 %3264
  %v3267 = vmul.f32 %v3247, %v3265
  %3269 = vrot.lane.b32.xlu0 %v3267, 32
  %v3270 = vpop.permute.xlu0 %3269
  %3272 = vst.msk [vmem:[#allocation4 + $0x8] sm:$0x30] %vm692, %v3270
  %v3273 = vrot.slane %v3267, 4
  %3274 = vrot.lane.b32.xlu0 %v3273, 32
  %v3275 = vpop.permute.xlu0 %3274
  %v3276 = vsel %vm185, %v3275, 0
  %3278 = vmatprep.subr.mxu0 0.0
  %3279 = vmatpush1.msra.mxu0 %v2494
  %3280 = vmatprep.subr.mxu0 0.0
  %3281 = vmatpush1.msra.mxu0 %v2495
  %3282 = vmatprep.subr.mxu0 0.0
  %3283 = vmatpush1.msra.mxu0 %v2496
  %3284 = vmatprep.subr.mxu0 0.0
  %3285 = vmatpush1.msra.mxu0 %v2497
  %3286 = vmatprep.subr.mxu0 0.0
  %3287 = vmatpush1.msra.mxu0 0.0
  %3288 = vmatprep.subr.mxu0 0.0
  %3289 = vmatpush1.msra.mxu0 0.0
  %3290 = vmatprep.subr.mxu0 0.0
  %3291 = vmatpush1.msra.mxu0 0.0
  %3292 = vmatprep.subr.mxu0 0.0
  %3293 = vmatpush1.msra.mxu0 0.0
  %3294 = vmatprep.subr.mxu0 0.0
  %3295 = vmatpush1.msra.mxu0 0.0
  %3296 = vmatprep.subr.mxu0 0.0
  %3297 = vmatpush1.msra.mxu0 0.0
  %3298 = vmatprep.subr.mxu0 0.0
  %3299 = vmatpush1.msra.mxu0 0.0
  %3300 = vmatprep.subr.mxu0 0.0
  %3301 = vmatpush1.msra.mxu0 0.0
  %3302 = vmatprep.subr.mxu0 0.0
  %3303 = vmatpush1.msra.mxu0 0.0
  %3304 = vmatprep.subr.mxu0 0.0
  %3305 = vmatpush1.msra.mxu0 0.0
  %3306 = vmatprep.subr.mxu0 0.0
  %3307 = vmatpush1.msra.mxu0 0.0
  %3308 = vmatprep.subr.mxu0 0.0
  %3309 = vmatpush1.msra.mxu0 0.0
  %3310 = vmatprep.subr.mxu0 0.0
  %3311 = vmatpush1.msra.mxu0 0.0
  %3312 = vmatprep.subr.mxu0 0.0
  %3313 = vmatpush1.msra.mxu0 0.0
  %3314 = vmatprep.subr.mxu0 0.0
  %3315 = vmatpush1.msra.mxu0 0.0
  %3316 = vmatprep.subr.mxu0 0.0
  %3317 = vmatpush1.msra.mxu0 0.0
  %3318 = vmatprep.subr.mxu0 0.0
  %3319 = vmatpush1.msra.mxu0 0.0
  %3320 = vmatprep.subr.mxu0 0.0
  %3321 = vmatpush1.msra.mxu0 0.0
  %3322 = vmatprep.subr.mxu0 0.0
  %3323 = vmatpush1.msra.mxu0 0.0
  %3324 = vmatprep.subr.mxu0 0.0
  %3325 = vmatpush1.msra.mxu0 0.0
  %3326 = vmatprep.subr.mxu0 0.0
  %3327 = vmatpush1.msra.mxu0 0.0
  %3328 = vmatprep.subr.mxu0 0.0
  %3329 = vmatpush1.msra.mxu0 0.0
  %3330 = vmatprep.subr.mxu0 0.0
  %3331 = vmatpush1.msra.mxu0 0.0
  %3332 = vmatprep.subr.mxu0 0.0
  %3333 = vmatpush1.msra.mxu0 0.0
  %3334 = vmatprep.subr.mxu0 0.0
  %3335 = vmatpush1.msra.mxu0 0.0
  %3336 = vmatprep.subr.mxu0 0.0
  %3337 = vmatpush1.msra.mxu0 0.0
  %3338 = vmatprep.subr.mxu0 0.0
  %3339 = vmatpush1.msra.mxu0 0.0
  %3340 = vmatprep.subr.mxu0 0.0
  %3341 = vmatpush1.msra.mxu0 0.0
  %3342 = vmatprep.mubr.f32.mxu0 0.0
  %3343 = vmatmul.mubr.f32.gmra.mrb[0].mxu0 %v3276
  %v3344 = vpop.f32.mrb[0].mxu0
  %v3345 = vadd.f32 0.0, %v3344
  %v3346 = vpop.f32.mrb[0].mxu0
  %3347 = vdwg.mxu0
  %v3349 = vrot.slane %v3345, 2
  %v3351 = vadd.f32 %v2334, %v3349
  %v3352 = vtanh.pop %v3351
  %v3353 = vxor.u32 %v3351, 2147483648
  %v3354 = vmul.f32 %v3353, 1.442695
  %v3355 = vpow.pop %v3354
  %v3356 = vadd.f32 %v3355, 1.0
  %v3357 = vrcp.pop %v3356
  %v3358 = vmul.f32 1.0, %v3357
  %v3359 = vsel %vm435, %v3352, %v3358
  %v3361 = vrot.slane %v3261, 6
  %v3363 = vmul.f32 %v3359, %v3361
  %3365 = vrot.lane.b32.xlu0 %v3359, 64
  %v3366 = vpop.permute.xlu0 %3365
  %v3368 = vmul.f32 %v3359, %v3366
  %3370 = vrot.lane.b32.xlu0 %v3368, 32
  %v3371 = vpop.permute.xlu0 %3370
  %v3373 = vadd.f32 %v3363, %v3371
  %v3374 = vtanh.pop %v3373
  %3376 = vrot.lane.b32.xlu0 %v3374, 64
  %v3377 = vpop.permute.xlu0 %3376
  %v3379 = vmul.f32 %v3359, %v3377
  %3381 = vrot.lane.b32.xlu0 %v3379, 32
  %v3382 = vpop.permute.xlu0 %3381
  %3384 = vst.msk [vmem:[#allocation4 + $0x8] sm:$0xc0] %vm805, %v3382
  %v3385 = vld [vmem:[%s14] sm:$0xff]
  %v3386 = vld [vmem:[%s14 + $0x8] sm:$0xff]
  %v3387 = vld [vmem:[%s14 + $0x10] sm:$0xff]
  %v3388 = vld [vmem:[%s14 + $0x18] sm:$0xff]
  %s3389 = scalar_lea.vmem %s2, 6
  %v3390 = vld [vmem:[%s3389] sm:$0x3]
  %s3391 = scalar_lea.vmem %s3, 6
  %v3392 = vld [vmem:[%s3391] sm:$0x3]
  %v3394 = vsel %vm185, %v3390, 0
  %3396 = vmatprep.subr.mxu0 0.0
  %3397 = vmatpush1.msra.mxu0 %v3385
  %3398 = vmatprep.subr.mxu0 0.0
  %3399 = vmatpush1.msra.mxu0 %v3386
  %3400 = vmatprep.subr.mxu0 0.0
  %3401 = vmatpush1.msra.mxu0 %v3387
  %3402 = vmatprep.subr.mxu0 0.0
  %3403 = vmatpush1.msra.mxu0 %v3388
  %3404 = vmatprep.subr.mxu0 0.0
  %3405 = vmatpush1.msra.mxu0 0.0
  %3406 = vmatprep.subr.mxu0 0.0
  %3407 = vmatpush1.msra.mxu0 0.0
  %3408 = vmatprep.subr.mxu0 0.0
  %3409 = vmatpush1.msra.mxu0 0.0
  %3410 = vmatprep.subr.mxu0 0.0
  %3411 = vmatpush1.msra.mxu0 0.0
  %3412 = vmatprep.subr.mxu0 0.0
  %3413 = vmatpush1.msra.mxu0 0.0
  %3414 = vmatprep.subr.mxu0 0.0
  %3415 = vmatpush1.msra.mxu0 0.0
  %3416 = vmatprep.subr.mxu0 0.0
  %3417 = vmatpush1.msra.mxu0 0.0
  %3418 = vmatprep.subr.mxu0 0.0
  %3419 = vmatpush1.msra.mxu0 0.0
  %3420 = vmatprep.subr.mxu0 0.0
  %3421 = vmatpush1.msra.mxu0 0.0
  %3422 = vmatprep.subr.mxu0 0.0
  %3423 = vmatpush1.msra.mxu0 0.0
  %3424 = vmatprep.subr.mxu0 0.0
  %3425 = vmatpush1.msra.mxu0 0.0
  %3426 = vmatprep.subr.mxu0 0.0
  %3427 = vmatpush1.msra.mxu0 0.0
  %3428 = vmatprep.subr.mxu0 0.0
  %3429 = vmatpush1.msra.mxu0 0.0
  %3430 = vmatprep.subr.mxu0 0.0
  %3431 = vmatpush1.msra.mxu0 0.0
  %3432 = vmatprep.subr.mxu0 0.0
  %3433 = vmatpush1.msra.mxu0 0.0
  %3434 = vmatprep.subr.mxu0 0.0
  %3435 = vmatpush1.msra.mxu0 0.0
  %3436 = vmatprep.subr.mxu0 0.0
  %3437 = vmatpush1.msra.mxu0 0.0
  %3438 = vmatprep.subr.mxu0 0.0
  %3439 = vmatpush1.msra.mxu0 0.0
  %3440 = vmatprep.subr.mxu0 0.0
  %3441 = vmatpush1.msra.mxu0 0.0
  %3442 = vmatprep.subr.mxu0 0.0
  %3443 = vmatpush1.msra.mxu0 0.0
  %3444 = vmatprep.subr.mxu0 0.0
  %3445 = vmatpush1.msra.mxu0 0.0
  %3446 = vmatprep.subr.mxu0 0.0
  %3447 = vmatpush1.msra.mxu0 0.0
  %3448 = vmatprep.subr.mxu0 0.0
  %3449 = vmatpush1.msra.mxu0 0.0
  %3450 = vmatprep.subr.mxu0 0.0
  %3451 = vmatpush1.msra.mxu0 0.0
  %3452 = vmatprep.subr.mxu0 0.0
  %3453 = vmatpush1.msra.mxu0 0.0
  %3454 = vmatprep.subr.mxu0 0.0
  %3455 = vmatpush1.msra.mxu0 0.0
  %3456 = vmatprep.subr.mxu0 0.0
  %3457 = vmatpush1.msra.mxu0 0.0
  %3458 = vmatprep.subr.mxu0 0.0
  %3459 = vmatpush1.msra.mxu0 0.0
  %3460 = vmatprep.mubr.f32.mxu0 0.0
  %3461 = vmatmul.mubr.f32.gmra.mrb[0].mxu0 %v3394
  %v3462 = vpop.f32.mrb[0].mxu0
  %v3463 = vadd.f32 0.0, %v3462
  %v3464 = vpop.f32.mrb[0].mxu0
  %3465 = vdwg.mxu0
  %v3467 = vrot.slane %v3463, 2
  %v3469 = vadd.f32 %v2493, %v3467
  %v3470 = vtanh.pop %v3469
  %v3471 = vxor.u32 %v3469, 2147483648
  %v3472 = vmul.f32 %v3471, 1.442695
  %v3473 = vpow.pop %v3472
  %v3474 = vadd.f32 %v3473, 1.0
  %v3475 = vrcp.pop %v3474
  %v3476 = vmul.f32 1.0, %v3475
  %v3477 = vsel %vm435, %v3470, %v3476
  %v3479 = vrot.slane %v3392, 2
  %3480 = vrot.lane.b32.xlu0 %v3479, 32
  %v3481 = vpop.permute.xlu0 %3480
  %v3483 = vmul.f32 %v3477, %v3481
  %3485 = vrot.lane.b32.xlu0 %v3477, 64
  %v3486 = vpop.permute.xlu0 %3485
  %v3488 = vmul.f32 %v3477, %v3486
  %3490 = vrot.lane.b32.xlu0 %v3488, 32
  %v3491 = vpop.permute.xlu0 %3490
  %v3493 = vadd.f32 %v3483, %v3491
  %v3494 = vtanh.pop %v3493
  %3496 = vrot.lane.b32.xlu0 %v3494, 64
  %v3497 = vpop.permute.xlu0 %3496
  %v3499 = vmul.f32 %v3477, %v3497
  %3501 = vrot.lane.b32.xlu0 %v3499, 32
  %v3502 = vpop.permute.xlu0 %3501
  %3504 = vst.msk [vmem:[#allocation5 + $0x8] sm:$0xc0] %vm805, %v3502
  %v3505 = vrot.slane %v3499, 6
  %3506 = vrot.lane.b32.xlu0 %v3505, 32
  %v3507 = vpop.permute.xlu0 %3506
  %v3508 = vsel %vm185, %v3507, 0
  %3510 = vmatprep.subr.mxu0 0.0
  %3511 = vmatpush1.msra.mxu0 %v3385
  %3512 = vmatprep.subr.mxu0 0.0
  %3513 = vmatpush1.msra.mxu0 %v3386
  %3514 = vmatprep.subr.mxu0 0.0
  %3515 = vmatpush1.msra.mxu0 %v3387
  %3516 = vmatprep.subr.mxu0 0.0
  %3517 = vmatpush1.msra.mxu0 %v3388
  %3518 = vmatprep.subr.mxu0 0.0
  %3519 = vmatpush1.msra.mxu0 0.0
  %3520 = vmatprep.subr.mxu0 0.0
  %3521 = vmatpush1.msra.mxu0 0.0
  %3522 = vmatprep.subr.mxu0 0.0
  %3523 = vmatpush1.msra.mxu0 0.0
  %3524 = vmatprep.subr.mxu0 0.0
  %3525 = vmatpush1.msra.mxu0 0.0
  %3526 = vmatprep.subr.mxu0 0.0
  %3527 = vmatpush1.msra.mxu0 0.0
  %3528 = vmatprep.subr.mxu0 0.0
  %3529 = vmatpush1.msra.mxu0 0.0
  %3530 = vmatprep.subr.mxu0 0.0
  %3531 = vmatpush1.msra.mxu0 0.0
  %3532 = vmatprep.subr.mxu0 0.0
  %3533 = vmatpush1.msra.mxu0 0.0
  %3534 = vmatprep.subr.mxu0 0.0
  %3535 = vmatpush1.msra.mxu0 0.0
  %3536 = vmatprep.subr.mxu0 0.0
  %3537 = vmatpush1.msra.mxu0 0.0
  %3538 = vmatprep.subr.mxu0 0.0
  %3539 = vmatpush1.msra.mxu0 0.0
  %3540 = vmatprep.subr.mxu0 0.0
  %3541 = vmatpush1.msra.mxu0 0.0
  %3542 = vmatprep.subr.mxu0 0.0
  %3543 = vmatpush1.msra.mxu0 0.0
  %3544 = vmatprep.subr.mxu0 0.0
  %3545 = vmatpush1.msra.mxu0 0.0
  %3546 = vmatprep.subr.mxu0 0.0
  %3547 = vmatpush1.msra.mxu0 0.0
  %3548 = vmatprep.subr.mxu0 0.0
  %3549 = vmatpush1.msra.mxu0 0.0
  %3550 = vmatprep.subr.mxu0 0.0
  %3551 = vmatpush1.msra.mxu0 0.0
  %3552 = vmatprep.subr.mxu0 0.0
  %3553 = vmatpush1.msra.mxu0 0.0
  %3554 = vmatprep.subr.mxu0 0.0
  %3555 = vmatpush1.msra.mxu0 0.0
  %3556 = vmatprep.subr.mxu0 0.0
  %3557 = vmatpush1.msra.mxu0 0.0
  %3558 = vmatprep.subr.mxu0 0.0
  %3559 = vmatpush1.msra.mxu0 0.0
  %3560 = vmatprep.subr.mxu0 0.0
  %3561 = vmatpush1.msra.mxu0 0.0
  %3562 = vmatprep.subr.mxu0 0.0
  %3563 = vmatpush1.msra.mxu0 0.0
  %3564 = vmatprep.subr.mxu0 0.0
  %3565 = vmatpush1.msra.mxu0 0.0
  %3566 = vmatprep.subr.mxu0 0.0
  %3567 = vmatpush1.msra.mxu0 0.0
  %3568 = vmatprep.subr.mxu0 0.0
  %3569 = vmatpush1.msra.mxu0 0.0
  %3570 = vmatprep.subr.mxu0 0.0
  %3571 = vmatpush1.msra.mxu0 0.0
  %3572 = vmatprep.subr.mxu0 0.0
  %3573 = vmatpush1.msra.mxu0 0.0
  %3574 = vmatprep.mubr.f32.mxu0 0.0
  %3575 = vmatmul.mubr.f32.gmra.mrb[0].mxu0 %v3508
  %v3576 = vpop.f32.mrb[0].mxu0
  %v3577 = vadd.f32 0.0, %v3576
  %v3578 = vpop.f32.mrb[0].mxu0
  %3579 = vdwg.mxu0
  %v3581 = vrot.slane %v3577, 4
  %v3583 = vadd.f32 %v2493, %v3581
  %v3584 = vtanh.pop %v3583
  %v3585 = vxor.u32 %v3583, 2147483648
  %v3586 = vmul.f32 %v3585, 1.442695
  %v3587 = vpow.pop %v3586
  %v3588 = vadd.f32 %v3587, 1.0
  %v3589 = vrcp.pop %v3588
  %v3590 = vmul.f32 1.0, %v3589
  %v3591 = vsel %vm435, %v3584, %v3590
  %v3593 = vrot.slane %v3493, 2
  %v3595 = vmul.f32 %v3591, %v3593
  %3597 = vrot.lane.b32.xlu0 %v3591, 64
  %v3598 = vpop.permute.xlu0 %3597
  %v3600 = vmul.f32 %v3591, %v3598
  %3602 = vrot.lane.b32.xlu0 %v3600, 32
  %v3603 = vpop.permute.xlu0 %3602
  %v3605 = vadd.f32 %v3595, %v3603
  %v3606 = vtanh.pop %v3605
  %3608 = vrot.lane.b32.xlu0 %v3606, 64
  %v3609 = vpop.permute.xlu0 %3608
  %v3611 = vmul.f32 %v3591, %v3609
  %3613 = vrot.lane.b32.xlu0 %v3611, 32
  %v3614 = vpop.permute.xlu0 %3613
  %3616 = vst.msk [vmem:[#allocation5 + $0x8] sm:$0x30] %vm692, %v3614
  %v3617 = vrot.slane %v3611, 4
  %3618 = vrot.lane.b32.xlu0 %v3617, 32
  %v3619 = vpop.permute.xlu0 %3618
  %v3620 = vsel %vm185, %v3619, 0
  %3622 = vmatprep.subr.mxu0 0.0
  %3623 = vmatpush1.msra.mxu0 %v3385
  %3624 = vmatprep.subr.mxu0 0.0
  %3625 = vmatpush1.msra.mxu0 %v3386
  %3626 = vmatprep.subr.mxu0 0.0
  %3627 = vmatpush1.msra.mxu0 %v3387
  %3628 = vmatprep.subr.mxu0 0.0
  %3629 = vmatpush1.msra.mxu0 %v3388
  %3630 = vmatprep.subr.mxu0 0.0
  %3631 = vmatpush1.msra.mxu0 0.0
  %3632 = vmatprep.subr.mxu0 0.0
  %3633 = vmatpush1.msra.mxu0 0.0
  %3634 = vmatprep.subr.mxu0 0.0
  %3635 = vmatpush1.msra.mxu0 0.0
  %3636 = vmatprep.subr.mxu0 0.0
  %3637 = vmatpush1.msra.mxu0 0.0
  %3638 = vmatprep.subr.mxu0 0.0
  %3639 = vmatpush1.msra.mxu0 0.0
  %3640 = vmatprep.subr.mxu0 0.0
  %3641 = vmatpush1.msra.mxu0 0.0
  %3642 = vmatprep.subr.mxu0 0.0
  %3643 = vmatpush1.msra.mxu0 0.0
  %3644 = vmatprep.subr.mxu0 0.0
  %3645 = vmatpush1.msra.mxu0 0.0
  %3646 = vmatprep.subr.mxu0 0.0
  %3647 = vmatpush1.msra.mxu0 0.0
  %3648 = vmatprep.subr.mxu0 0.0
  %3649 = vmatpush1.msra.mxu0 0.0
  %3650 = vmatprep.subr.mxu0 0.0
  %3651 = vmatpush1.msra.mxu0 0.0
  %3652 = vmatprep.subr.mxu0 0.0
  %3653 = vmatpush1.msra.mxu0 0.0
  %3654 = vmatprep.subr.mxu0 0.0
  %3655 = vmatpush1.msra.mxu0 0.0
  %3656 = vmatprep.subr.mxu0 0.0
  %3657 = vmatpush1.msra.mxu0 0.0
  %3658 = vmatprep.subr.mxu0 0.0
  %3659 = vmatpush1.msra.mxu0 0.0
  %3660 = vmatprep.subr.mxu0 0.0
  %3661 = vmatpush1.msra.mxu0 0.0
  %3662 = vmatprep.subr.mxu0 0.0
  %3663 = vmatpush1.msra.mxu0 0.0
  %3664 = vmatprep.subr.mxu0 0.0
  %3665 = vmatpush1.msra.mxu0 0.0
  %3666 = vmatprep.subr.mxu0 0.0
  %3667 = vmatpush1.msra.mxu0 0.0
  %3668 = vmatprep.subr.mxu0 0.0
  %3669 = vmatpush1.msra.mxu0 0.0
  %3670 = vmatprep.subr.mxu0 0.0
  %3671 = vmatpush1.msra.mxu0 0.0
  %3672 = vmatprep.subr.mxu0 0.0
  %3673 = vmatpush1.msra.mxu0 0.0
  %3674 = vmatprep.subr.mxu0 0.0
  %3675 = vmatpush1.msra.mxu0 0.0
  %3676 = vmatprep.subr.mxu0 0.0
  %3677 = vmatpush1.msra.mxu0 0.0
  %3678 = vmatprep.subr.mxu0 0.0
  %3679 = vmatpush1.msra.mxu0 0.0
  %3680 = vmatprep.subr.mxu0 0.0
  %3681 = vmatpush1.msra.mxu0 0.0
  %3682 = vmatprep.subr.mxu0 0.0
  %3683 = vmatpush1.msra.mxu0 0.0
  %3684 = vmatprep.subr.mxu0 0.0
  %3685 = vmatpush1.msra.mxu0 0.0
  %3686 = vmatprep.mubr.f32.mxu0 0.0
  %3687 = vmatmul.mubr.f32.gmra.mrb[0].mxu0 %v3620
  %v3688 = vpop.f32.mrb[0].mxu0
  %v3689 = vadd.f32 0.0, %v3688
  %v3690 = vpop.f32.mrb[0].mxu0
  %3691 = vdwg.mxu0
  %v3693 = vrot.slane %v3689, 6
  %v3695 = vadd.f32 %v2493, %v3693
  %v3696 = vtanh.pop %v3695
  %v3697 = vxor.u32 %v3695, 2147483648
  %v3698 = vmul.f32 %v3697, 1.442695
  %v3699 = vpow.pop %v3698
  %v3700 = vadd.f32 %v3699, 1.0
  %v3701 = vrcp.pop %v3700
  %v3702 = vmul.f32 1.0, %v3701
  %v3703 = vsel %vm435, %v3696, %v3702
  %v3705 = vrot.slane %v3605, 2
  %v3707 = vmul.f32 %v3703, %v3705
  %3709 = vrot.lane.b32.xlu0 %v3703, 64
  %v3710 = vpop.permute.xlu0 %3709
  %v3712 = vmul.f32 %v3703, %v3710
  %3714 = vrot.lane.b32.xlu0 %v3712, 32
  %v3715 = vpop.permute.xlu0 %3714
  %v3717 = vadd.f32 %v3707, %v3715
  %v3718 = vtanh.pop %v3717
  %3720 = vrot.lane.b32.xlu0 %v3718, 64
  %v3721 = vpop.permute.xlu0 %3720
  %v3723 = vmul.f32 %v3703, %v3721
  %3725 = vrot.lane.b32.xlu0 %v3723, 32
  %v3726 = vpop.permute.xlu0 %3725
  %3728 = vst.msk [vmem:[#allocation5 + $0x8] sm:$0xc] %vm579, %v3726
  %v3729 = vrot.slane %v3723, 2
  %3730 = vrot.lane.b32.xlu0 %v3729, 32
  %v3731 = vpop.permute.xlu0 %3730
  %v3732 = vsel %vm185, %v3731, 0
  %3734 = vmatprep.subr.mxu0 0.0
  %3735 = vmatpush1.msra.mxu0 %v3385
  %3736 = vmatprep.subr.mxu0 0.0
  %3737 = vmatpush1.msra.mxu0 %v3386
  %3738 = vmatprep.subr.mxu0 0.0
  %3739 = vmatpush1.msra.mxu0 %v3387
  %3740 = vmatprep.subr.mxu0 0.0
  %3741 = vmatpush1.msra.mxu0 %v3388
  %3742 = vmatprep.subr.mxu0 0.0
  %3743 = vmatpush1.msra.mxu0 0.0
  %3744 = vmatprep.subr.mxu0 0.0
  %3745 = vmatpush1.msra.mxu0 0.0
  %3746 = vmatprep.subr.mxu0 0.0
  %3747 = vmatpush1.msra.mxu0 0.0
  %3748 = vmatprep.subr.mxu0 0.0
  %3749 = vmatpush1.msra.mxu0 0.0
  %3750 = vmatprep.subr.mxu0 0.0
  %3751 = vmatpush1.msra.mxu0 0.0
  %3752 = vmatprep.subr.mxu0 0.0
  %3753 = vmatpush1.msra.mxu0 0.0
  %3754 = vmatprep.subr.mxu0 0.0
  %3755 = vmatpush1.msra.mxu0 0.0
  %3756 = vmatprep.subr.mxu0 0.0
  %3757 = vmatpush1.msra.mxu0 0.0
  %3758 = vmatprep.subr.mxu0 0.0
  %3759 = vmatpush1.msra.mxu0 0.0
  %3760 = vmatprep.subr.mxu0 0.0
  %3761 = vmatpush1.msra.mxu0 0.0
  %3762 = vmatprep.subr.mxu0 0.0
  %3763 = vmatpush1.msra.mxu0 0.0
  %3764 = vmatprep.subr.mxu0 0.0
  %3765 = vmatpush1.msra.mxu0 0.0
  %3766 = vmatprep.subr.mxu0 0.0
  %3767 = vmatpush1.msra.mxu0 0.0
  %3768 = vmatprep.subr.mxu0 0.0
  %3769 = vmatpush1.msra.mxu0 0.0
  %3770 = vmatprep.subr.mxu0 0.0
  %3771 = vmatpush1.msra.mxu0 0.0
  %3772 = vmatprep.subr.mxu0 0.0
  %3773 = vmatpush1.msra.mxu0 0.0
  %3774 = vmatprep.subr.mxu0 0.0
  %3775 = vmatpush1.msra.mxu0 0.0
  %3776 = vmatprep.subr.mxu0 0.0
  %3777 = vmatpush1.msra.mxu0 0.0
  %3778 = vmatprep.subr.mxu0 0.0
  %3779 = vmatpush1.msra.mxu0 0.0
  %3780 = vmatprep.subr.mxu0 0.0
  %3781 = vmatpush1.msra.mxu0 0.0
  %3782 = vmatprep.subr.mxu0 0.0
  %3783 = vmatpush1.msra.mxu0 0.0
  %3784 = vmatprep.subr.mxu0 0.0
  %3785 = vmatpush1.msra.mxu0 0.0
  %3786 = vmatprep.subr.mxu0 0.0
  %3787 = vmatpush1.msra.mxu0 0.0
  %3788 = vmatprep.subr.mxu0 0.0
  %3789 = vmatpush1.msra.mxu0 0.0
  %3790 = vmatprep.subr.mxu0 0.0
  %3791 = vmatpush1.msra.mxu0 0.0
  %3792 = vmatprep.subr.mxu0 0.0
  %3793 = vmatpush1.msra.mxu0 0.0
  %3794 = vmatprep.subr.mxu0 0.0
  %3795 = vmatpush1.msra.mxu0 0.0
  %3796 = vmatprep.subr.mxu0 0.0
  %3797 = vmatpush1.msra.mxu0 0.0
  %3798 = vmatprep.mubr.f32.mxu0 0.0
  %3799 = vmatmul.mubr.f32.gmra.mrb[0].mxu0 %v3732
  %v3800 = vpop.f32.mrb[0].mxu0
  %v3801 = vadd.f32 0.0, %v3800
  %v3802 = vpop.f32.mrb[0].mxu0
  %3803 = vdwg.mxu0
  %v3804 = vadd.f32 %v2493, %v3801
  %v3805 = vtanh.pop %v3804
  %v3806 = vxor.u32 %v3804, 2147483648
  %v3807 = vmul.f32 %v3806, 1.442695
  %v3808 = vpow.pop %v3807
  %v3809 = vadd.f32 %v3808, 1.0
  %v3810 = vrcp.pop %v3809
  %v3811 = vmul.f32 1.0, %v3810
  %v3812 = vsel %vm435, %v3805, %v3811
  %v3814 = vrot.slane %v3717, 2
  %v3816 = vmul.f32 %v3812, %v3814
  %3818 = vrot.lane.b32.xlu0 %v3812, 64
  %v3819 = vpop.permute.xlu0 %3818
  %v3821 = vmul.f32 %v3812, %v3819
  %3823 = vrot.lane.b32.xlu0 %v3821, 32
  %v3824 = vpop.permute.xlu0 %3823
  %v3826 = vadd.f32 %v3816, %v3824
  %v3827 = vtanh.pop %v3826
  %3829 = vrot.lane.b32.xlu0 %v3827, 64
  %v3830 = vpop.permute.xlu0 %3829
  %v3832 = vmul.f32 %v3812, %v3830
  %3834 = vrot.lane.b32.xlu0 %v3832, 32
  %v3835 = vpop.permute.xlu0 %3834
  %3837 = vst.msk [vmem:[#allocation5 + $0x8] sm:$0x3] %vm469, %v3835
  %v3838 = vsel %vm185, %v3835, 0
  %3840 = vmatprep.subr.mxu0 0.0
  %3841 = vmatpush1.msra.mxu0 %v3385
  %3842 = vmatprep.subr.mxu0 0.0
  %3843 = vmatpush1.msra.mxu0 %v3386
  %3844 = vmatprep.subr.mxu0 0.0
  %3845 = vmatpush1.msra.mxu0 %v3387
  %3846 = vmatprep.subr.mxu0 0.0
  %3847 = vmatpush1.msra.mxu0 %v3388
  %3848 = vmatprep.subr.mxu0 0.0
  %3849 = vmatpush1.msra.mxu0 0.0
  %3850 = vmatprep.subr.mxu0 0.0
  %3851 = vmatpush1.msra.mxu0 0.0
  %3852 = vmatprep.subr.mxu0 0.0
  %3853 = vmatpush1.msra.mxu0 0.0
  %3854 = vmatprep.subr.mxu0 0.0
  %3855 = vmatpush1.msra.mxu0 0.0
  %3856 = vmatprep.subr.mxu0 0.0
  %3857 = vmatpush1.msra.mxu0 0.0
  %3858 = vmatprep.subr.mxu0 0.0
  %3859 = vmatpush1.msra.mxu0 0.0
  %3860 = vmatprep.subr.mxu0 0.0
  %3861 = vmatpush1.msra.mxu0 0.0
  %3862 = vmatprep.subr.mxu0 0.0
  %3863 = vmatpush1.msra.mxu0 0.0
  %3864 = vmatprep.subr.mxu0 0.0
  %3865 = vmatpush1.msra.mxu0 0.0
  %3866 = vmatprep.subr.mxu0 0.0
  %3867 = vmatpush1.msra.mxu0 0.0
  %3868 = vmatprep.subr.mxu0 0.0
  %3869 = vmatpush1.msra.mxu0 0.0
  %3870 = vmatprep.subr.mxu0 0.0
  %3871 = vmatpush1.msra.mxu0 0.0
  %3872 = vmatprep.subr.mxu0 0.0
  %3873 = vmatpush1.msra.mxu0 0.0
  %3874 = vmatprep.subr.mxu0 0.0
  %3875 = vmatpush1.msra.mxu0 0.0
  %3876 = vmatprep.subr.mxu0 0.0
  %3877 = vmatpush1.msra.mxu0 0.0
  %3878 = vmatprep.subr.mxu0 0.0
  %3879 = vmatpush1.msra.mxu0 0.0
  %3880 = vmatprep.subr.mxu0 0.0
  %3881 = vmatpush1.msra.mxu0 0.0
  %3882 = vmatprep.subr.mxu0 0.0
  %3883 = vmatpush1.msra.mxu0 0.0
  %3884 = vmatprep.subr.mxu0 0.0
  %3885 = vmatpush1.msra.mxu0 0.0
  %3886 = vmatprep.subr.mxu0 0.0
  %3887 = vmatpush1.msra.mxu0 0.0
  %3888 = vmatprep.subr.mxu0 0.0
  %3889 = vmatpush1.msra.mxu0 0.0
  %3890 = vmatprep.subr.mxu0 0.0
  %3891 = vmatpush1.msra.mxu0 0.0
  %3892 = vmatprep.subr.mxu0 0.0
  %3893 = vmatpush1.msra.mxu0 0.0
  %3894 = vmatprep.subr.mxu0 0.0
  %3895 = vmatpush1.msra.mxu0 0.0
  %3896 = vmatprep.subr.mxu0 0.0
  %3897 = vmatpush1.msra.mxu0 0.0
  %3898 = vmatprep.subr.mxu0 0.0
  %3899 = vmatpush1.msra.mxu0 0.0
  %3900 = vmatprep.subr.mxu0 0.0
  %3901 = vmatpush1.msra.mxu0 0.0
  %3902 = vmatprep.subr.mxu0 0.0
  %3903 = vmatpush1.msra.mxu0 0.0
  %3904 = vmatprep.mubr.f32.mxu0 0.0
  %3905 = vmatmul.mubr.f32.gmra.mrb[0].mxu0 %v3838
  %v3906 = vpop.f32.mrb[0].mxu0
  %v3907 = vadd.f32 0.0, %v3906
  %v3908 = vpop.f32.mrb[0].mxu0
  %3909 = vdwg.mxu0
  %v3911 = vrot.slane %v3907, 2
  %v3913 = vadd.f32 %v2492, %v3911
  %v3914 = vtanh.pop %v3913
  %v3915 = vxor.u32 %v3913, 2147483648
  %v3916 = vmul.f32 %v3915, 1.442695
  %v3917 = vpow.pop %v3916
  %v3918 = vadd.f32 %v3917, 1.0
  %v3919 = vrcp.pop %v3918
  %v3920 = vmul.f32 1.0, %v3919
  %v3921 = vsel %vm435, %v3914, %v3920
  %v3923 = vrot.slane %v3826, 2
  %v3925 = vmul.f32 %v3921, %v3923
  %3927 = vrot.lane.b32.xlu0 %v3921, 64
  %v3928 = vpop.permute.xlu0 %3927
  %v3930 = vmul.f32 %v3921, %v3928
  %3932 = vrot.lane.b32.xlu0 %v3930, 32
  %v3933 = vpop.permute.xlu0 %3932
  %v3935 = vadd.f32 %v3925, %v3933
  %v3936 = vtanh.pop %v3935
  %3938 = vrot.lane.b32.xlu0 %v3936, 64
  %v3939 = vpop.permute.xlu0 %3938
  %v3941 = vmul.f32 %v3921, %v3939
  %3943 = vrot.lane.b32.xlu0 %v3941, 32
  %v3944 = vpop.permute.xlu0 %3943
  %3946 = vst.msk [vmem:[#allocation5] sm:$0xc0] %vm805, %v3944
  %v3947 = vrot.slane %v3941, 6
  %3948 = vrot.lane.b32.xlu0 %v3947, 32
  %v3949 = vpop.permute.xlu0 %3948
  %v3950 = vsel %vm185, %v3949, 0
  %3952 = vmatprep.subr.mxu0 0.0
  %3953 = vmatpush1.msra.mxu0 %v3385
  %3954 = vmatprep.subr.mxu0 0.0
  %3955 = vmatpush1.msra.mxu0 %v3386
  %3956 = vmatprep.subr.mxu0 0.0
  %3957 = vmatpush1.msra.mxu0 %v3387
  %3958 = vmatprep.subr.mxu0 0.0
  %3959 = vmatpush1.msra.mxu0 %v3388
  %3960 = vmatprep.subr.mxu0 0.0
  %3961 = vmatpush1.msra.mxu0 0.0
  %3962 = vmatprep.subr.mxu0 0.0
  %3963 = vmatpush1.msra.mxu0 0.0
  %3964 = vmatprep.subr.mxu0 0.0
  %3965 = vmatpush1.msra.mxu0 0.0
  %3966 = vmatprep.subr.mxu0 0.0
  %3967 = vmatpush1.msra.mxu0 0.0
  %3968 = vmatprep.subr.mxu0 0.0
  %3969 = vmatpush1.msra.mxu0 0.0
  %3970 = vmatprep.subr.mxu0 0.0
  %3971 = vmatpush1.msra.mxu0 0.0
  %3972 = vmatprep.subr.mxu0 0.0
  %3973 = vmatpush1.msra.mxu0 0.0
  %3974 = vmatprep.subr.mxu0 0.0
  %3975 = vmatpush1.msra.mxu0 0.0
  %3976 = vmatprep.subr.mxu0 0.0
  %3977 = vmatpush1.msra.mxu0 0.0
  %3978 = vmatprep.subr.mxu0 0.0
  %3979 = vmatpush1.msra.mxu0 0.0
  %3980 = vmatprep.subr.mxu0 0.0
  %3981 = vmatpush1.msra.mxu0 0.0
  %3982 = vmatprep.subr.mxu0 0.0
  %3983 = vmatpush1.msra.mxu0 0.0
  %3984 = vmatprep.subr.mxu0 0.0
  %3985 = vmatpush1.msra.mxu0 0.0
  %3986 = vmatprep.subr.mxu0 0.0
  %3987 = vmatpush1.msra.mxu0 0.0
  %3988 = vmatprep.subr.mxu0 0.0
  %3989 = vmatpush1.msra.mxu0 0.0
  %3990 = vmatprep.subr.mxu0 0.0
  %3991 = vmatpush1.msra.mxu0 0.0
  %3992 = vmatprep.subr.mxu0 0.0
  %3993 = vmatpush1.msra.mxu0 0.0
  %3994 = vmatprep.subr.mxu0 0.0
  %3995 = vmatpush1.msra.mxu0 0.0
  %3996 = vmatprep.subr.mxu0 0.0
  %3997 = vmatpush1.msra.mxu0 0.0
  %3998 = vmatprep.subr.mxu0 0.0
  %3999 = vmatpush1.msra.mxu0 0.0
  %4000 = vmatprep.subr.mxu0 0.0
  %4001 = vmatpush1.msra.mxu0 0.0
  %4002 = vmatprep.subr.mxu0 0.0
  %4003 = vmatpush1.msra.mxu0 0.0
  %4004 = vmatprep.subr.mxu0 0.0
  %4005 = vmatpush1.msra.mxu0 0.0
  %4006 = vmatprep.subr.mxu0 0.0
  %4007 = vmatpush1.msra.mxu0 0.0
  %4008 = vmatprep.subr.mxu0 0.0
  %4009 = vmatpush1.msra.mxu0 0.0
  %4010 = vmatprep.subr.mxu0 0.0
  %4011 = vmatpush1.msra.mxu0 0.0
  %4012 = vmatprep.subr.mxu0 0.0
  %4013 = vmatpush1.msra.mxu0 0.0
  %4014 = vmatprep.subr.mxu0 0.0
  %4015 = vmatpush1.msra.mxu0 0.0
  %4016 = vmatprep.mubr.f32.mxu0 0.0
  %4017 = vmatmul.mubr.f32.gmra.mrb[0].mxu0 %v3950
  %v4018 = vpop.f32.mrb[0].mxu0
  %v4019 = vadd.f32 0.0, %v4018
  %v4020 = vpop.f32.mrb[0].mxu0
  %4021 = vdwg.mxu0
  %v4023 = vrot.slane %v4019, 4
  %v4025 = vadd.f32 %v2492, %v4023
  %v4026 = vtanh.pop %v4025
  %v4027 = vxor.u32 %v4025, 2147483648
  %v4028 = vmul.f32 %v4027, 1.442695
  %v4029 = vpow.pop %v4028
  %v4030 = vadd.f32 %v4029, 1.0
  %v4031 = vrcp.pop %v4030
  %v4032 = vmul.f32 1.0, %v4031
  %v4033 = vsel %vm435, %v4026, %v4032
  %v4035 = vrot.slane %v3935, 2
  %v4037 = vmul.f32 %v4033, %v4035
  %4039 = vrot.lane.b32.xlu0 %v4033, 64
  %v4040 = vpop.permute.xlu0 %4039
  %v4042 = vmul.f32 %v4033, %v4040
  %4044 = vrot.lane.b32.xlu0 %v4042, 32
  %v4045 = vpop.permute.xlu0 %4044
  %v4047 = vadd.f32 %v4037, %v4045
  %v4048 = vtanh.pop %v4047
  %4050 = vrot.lane.b32.xlu0 %v4048, 64
  %v4051 = vpop.permute.xlu0 %4050
  %v4053 = vmul.f32 %v4033, %v4051
  %4055 = vrot.lane.b32.xlu0 %v4053, 32
  %v4056 = vpop.permute.xlu0 %4055
  %4058 = vst.msk [vmem:[#allocation5] sm:$0x30] %vm692, %v4056
  %v4059 = vrot.slane %v4053, 4
  %4060 = vrot.lane.b32.xlu0 %v4059, 32
  %v4061 = vpop.permute.xlu0 %4060
  %v4062 = vsel %vm185, %v4061, 0
  %4064 = vmatprep.subr.mxu0 0.0
  %4065 = vmatpush1.msra.mxu0 %v3385
  %4066 = vmatprep.subr.mxu0 0.0
  %4067 = vmatpush1.msra.mxu0 %v3386
  %4068 = vmatprep.subr.mxu0 0.0
  %4069 = vmatpush1.msra.mxu0 %v3387
  %4070 = vmatprep.subr.mxu0 0.0
  %4071 = vmatpush1.msra.mxu0 %v3388
  %4072 = vmatprep.subr.mxu0 0.0
  %4073 = vmatpush1.msra.mxu0 0.0
  %4074 = vmatprep.subr.mxu0 0.0
  %4075 = vmatpush1.msra.mxu0 0.0
  %4076 = vmatprep.subr.mxu0 0.0
  %4077 = vmatpush1.msra.mxu0 0.0
  %4078 = vmatprep.subr.mxu0 0.0
  %4079 = vmatpush1.msra.mxu0 0.0
  %4080 = vmatprep.subr.mxu0 0.0
  %4081 = vmatpush1.msra.mxu0 0.0
  %4082 = vmatprep.subr.mxu0 0.0
  %4083 = vmatpush1.msra.mxu0 0.0
  %4084 = vmatprep.subr.mxu0 0.0
  %4085 = vmatpush1.msra.mxu0 0.0
  %4086 = vmatprep.subr.mxu0 0.0
  %4087 = vmatpush1.msra.mxu0 0.0
  %4088 = vmatprep.subr.mxu0 0.0
  %4089 = vmatpush1.msra.mxu0 0.0
  %4090 = vmatprep.subr.mxu0 0.0
  %4091 = vmatpush1.msra.mxu0 0.0
  %4092 = vmatprep.subr.mxu0 0.0
  %4093 = vmatpush1.msra.mxu0 0.0
  %4094 = vmatprep.subr.mxu0 0.0
  %4095 = vmatpush1.msra.mxu0 0.0
  %4096 = vmatprep.subr.mxu0 0.0
  %4097 = vmatpush1.msra.mxu0 0.0
  %4098 = vmatprep.subr.mxu0 0.0
  %4099 = vmatpush1.msra.mxu0 0.0
  %4100 = vmatprep.subr.mxu0 0.0
  %4101 = vmatpush1.msra.mxu0 0.0
  %4102 = vmatprep.subr.mxu0 0.0
  %4103 = vmatpush1.msra.mxu0 0.0
  %4104 = vmatprep.subr.mxu0 0.0
  %4105 = vmatpush1.msra.mxu0 0.0
  %4106 = vmatprep.subr.mxu0 0.0
  %4107 = vmatpush1.msra.mxu0 0.0
  %4108 = vmatprep.subr.mxu0 0.0
  %4109 = vmatpush1.msra.mxu0 0.0
  %4110 = vmatprep.subr.mxu0 0.0
  %4111 = vmatpush1.msra.mxu0 0.0
  %4112 = vmatprep.subr.mxu0 0.0
  %4113 = vmatpush1.msra.mxu0 0.0
  %4114 = vmatprep.subr.mxu0 0.0
  %4115 = vmatpush1.msra.mxu0 0.0
  %4116 = vmatprep.subr.mxu0 0.0
  %4117 = vmatpush1.msra.mxu0 0.0
  %4118 = vmatprep.subr.mxu0 0.0
  %4119 = vmatpush1.msra.mxu0 0.0
  %4120 = vmatprep.subr.mxu0 0.0
  %4121 = vmatpush1.msra.mxu0 0.0
  %4122 = vmatprep.subr.mxu0 0.0
  %4123 = vmatpush1.msra.mxu0 0.0
  %4124 = vmatprep.subr.mxu0 0.0
  %4125 = vmatpush1.msra.mxu0 0.0
  %4126 = vmatprep.subr.mxu0 0.0
  %4127 = vmatpush1.msra.mxu0 0.0
  %4128 = vmatprep.mubr.f32.mxu0 0.0
  %4129 = vmatmul.mubr.f32.gmra.mrb[0].mxu0 %v4062
  %v4130 = vpop.f32.mrb[0].mxu0
  %v4131 = vadd.f32 0.0, %v4130
  %v4132 = vpop.f32.mrb[0].mxu0
  %4133 = vdwg.mxu0
  %v4135 = vrot.slane %v4131, 6
  %v4137 = vadd.f32 %v2492, %v4135
  %v4138 = vtanh.pop %v4137
  %v4139 = vxor.u32 %v4137, 2147483648
  %v4140 = vmul.f32 %v4139, 1.442695
  %v4141 = vpow.pop %v4140
  %v4142 = vadd.f32 %v4141, 1.0
  %v4143 = vrcp.pop %v4142
  %v4144 = vmul.f32 1.0, %v4143
  %v4145 = vsel %vm435, %v4138, %v4144
  %v4147 = vrot.slane %v4047, 2
  %v4149 = vmul.f32 %v4145, %v4147
  %4151 = vrot.lane.b32.xlu0 %v4145, 64
  %v4152 = vpop.permute.xlu0 %4151
  %v4154 = vmul.f32 %v4145, %v4152
  %4156 = vrot.lane.b32.xlu0 %v4154, 32
  %v4157 = vpop.permute.xlu0 %4156
  %v4159 = vadd.f32 %v4149, %v4157
  %v4160 = vtanh.pop %v4159
  %4162 = vrot.lane.b32.xlu0 %v4160, 64
  %v4163 = vpop.permute.xlu0 %4162
  %v4165 = vmul.f32 %v4145, %v4163
  %4167 = vrot.lane.b32.xlu0 %v4165, 32
  %v4168 = vpop.permute.xlu0 %4167
  %4170 = vst.msk [vmem:[#allocation5] sm:$0xc] %vm579, %v4168
  %v4171 = vrot.slane %v4165, 2
  %4172 = vrot.lane.b32.xlu0 %v4171, 32
  %v4173 = vpop.permute.xlu0 %4172
  %v4174 = vsel %vm185, %v4173, 0
  %4176 = vmatprep.subr.mxu0 0.0
  %4177 = vmatpush1.msra.mxu0 %v3385
  %4178 = vmatprep.subr.mxu0 0.0
  %4179 = vmatpush1.msra.mxu0 %v3386
  %4180 = vmatprep.subr.mxu0 0.0
  %4181 = vmatpush1.msra.mxu0 %v3387
  %4182 = vmatprep.subr.mxu0 0.0
  %4183 = vmatpush1.msra.mxu0 %v3388
  %4184 = vmatprep.subr.mxu0 0.0
  %4185 = vmatpush1.msra.mxu0 0.0
  %4186 = vmatprep.subr.mxu0 0.0
  %4187 = vmatpush1.msra.mxu0 0.0
  %4188 = vmatprep.subr.mxu0 0.0
  %4189 = vmatpush1.msra.mxu0 0.0
  %4190 = vmatprep.subr.mxu0 0.0
  %4191 = vmatpush1.msra.mxu0 0.0
  %4192 = vmatprep.subr.mxu0 0.0
  %4193 = vmatpush1.msra.mxu0 0.0
  %4194 = vmatprep.subr.mxu0 0.0
  %4195 = vmatpush1.msra.mxu0 0.0
  %4196 = vmatprep.subr.mxu0 0.0
  %4197 = vmatpush1.msra.mxu0 0.0
  %4198 = vmatprep.subr.mxu0 0.0
  %4199 = vmatpush1.msra.mxu0 0.0
  %4200 = vmatprep.subr.mxu0 0.0
  %4201 = vmatpush1.msra.mxu0 0.0
  %4202 = vmatprep.subr.mxu0 0.0
  %4203 = vmatpush1.msra.mxu0 0.0
  %4204 = vmatprep.subr.mxu0 0.0
  %4205 = vmatpush1.msra.mxu0 0.0
  %4206 = vmatprep.subr.mxu0 0.0
  %4207 = vmatpush1.msra.mxu0 0.0
  %4208 = vmatprep.subr.mxu0 0.0
  %4209 = vmatpush1.msra.mxu0 0.0
  %4210 = vmatprep.subr.mxu0 0.0
  %4211 = vmatpush1.msra.mxu0 0.0
  %4212 = vmatprep.subr.mxu0 0.0
  %4213 = vmatpush1.msra.mxu0 0.0
  %4214 = vmatprep.subr.mxu0 0.0
  %4215 = vmatpush1.msra.mxu0 0.0
  %4216 = vmatprep.subr.mxu0 0.0
  %4217 = vmatpush1.msra.mxu0 0.0
  %4218 = vmatprep.subr.mxu0 0.0
  %4219 = vmatpush1.msra.mxu0 0.0
  %4220 = vmatprep.subr.mxu0 0.0
  %4221 = vmatpush1.msra.mxu0 0.0
  %4222 = vmatprep.subr.mxu0 0.0
  %4223 = vmatpush1.msra.mxu0 0.0
  %4224 = vmatprep.subr.mxu0 0.0
  %4225 = vmatpush1.msra.mxu0 0.0
  %4226 = vmatprep.subr.mxu0 0.0
  %4227 = vmatpush1.msra.mxu0 0.0
  %4228 = vmatprep.subr.mxu0 0.0
  %4229 = vmatpush1.msra.mxu0 0.0
  %4230 = vmatprep.subr.mxu0 0.0
  %4231 = vmatpush1.msra.mxu0 0.0
  %4232 = vmatprep.subr.mxu0 0.0
  %4233 = vmatpush1.msra.mxu0 0.0
  %4234 = vmatprep.subr.mxu0 0.0
  %4235 = vmatpush1.msra.mxu0 0.0
  %4236 = vmatprep.subr.mxu0 0.0
  %4237 = vmatpush1.msra.mxu0 0.0
  %4238 = vmatprep.subr.mxu0 0.0
  %4239 = vmatpush1.msra.mxu0 0.0
  %4240 = vmatprep.mubr.f32.mxu0 0.0
  %4241 = vmatmul.mubr.f32.gmra.mrb[0].mxu0 %v4174
  %v4242 = vpop.f32.mrb[0].mxu0
  %v4243 = vadd.f32 0.0, %v4242
  %v4244 = vpop.f32.mrb[0].mxu0
  %4245 = vdwg.mxu0
  %v4246 = vadd.f32 %v2492, %v4243
  %v4247 = vtanh.pop %v4246
  %v4248 = vxor.u32 %v4246, 2147483648
  %v4249 = vmul.f32 %v4248, 1.442695
  %v4250 = vpow.pop %v4249
  %v4251 = vadd.f32 %v4250, 1.0
  %v4252 = vrcp.pop %v4251
  %v4253 = vmul.f32 1.0, %v4252
  %v4254 = vsel %vm435, %v4247, %v4253
  %v4256 = vrot.slane %v4159, 2
  %v4258 = vmul.f32 %v4254, %v4256
  %4260 = vrot.lane.b32.xlu0 %v4254, 64
  %v4261 = vpop.permute.xlu0 %4260
  %v4263 = vmul.f32 %v4254, %v4261
  %4265 = vrot.lane.b32.xlu0 %v4263, 32
  %v4266 = vpop.permute.xlu0 %4265
  %v4268 = vadd.f32 %v4258, %v4266
  %v4269 = vtanh.pop %v4268
  %4271 = vrot.lane.b32.xlu0 %v4269, 64
  %v4272 = vpop.permute.xlu0 %4271
  %v4274 = vmul.f32 %v4254, %v4272
  %4276 = vrot.lane.b32.xlu0 %v4274, 32
  %v4277 = vpop.permute.xlu0 %4276
  %4279 = vst.msk [vmem:[#allocation5] sm:$0x3] %vm469, %v4277
  %v4280 = vld [vmem:[#allocation4] sm:$0x3]
  %v4281 = vld [vmem:[#allocation5] sm:$0x3]
  %v4282 = vld [vmem:[#allocation4 + $0xe] sm:$0x3]
  %v4283 = vld [vmem:[#allocation5 + $0xe] sm:$0x3]
  %v4284 = vld [vmem:[%s16] sm:$0xff]
  %v4285 = vld [vmem:[%s16 + $0x8] sm:$0xff]
  %v4286 = vld [vmem:[%s16 + $0x10] sm:$0xff]
  %v4287 = vld [vmem:[%s16 + $0x18] sm:$0xff]
  %v4288 = vld [vmem:[%s16 + $0x20] sm:$0xff]
  %v4289 = vld [vmem:[%s16 + $0x28] sm:$0xff]
  %v4290 = vld [vmem:[%s16 + $0x30] sm:$0xff]
  %v4291 = vld [vmem:[%s16 + $0x38] sm:$0xff]
  %v4292 = vld [vmem:[%s16 + $0x40] sm:$0xff]
  %v4293 = vld [vmem:[%s16 + $0x48] sm:$0xff]
  %v4294 = vld [vmem:[%s16 + $0x50] sm:$0xff]
  %v4295 = vld [vmem:[%s16 + $0x58] sm:$0xff]
  %v4296 = vld [vmem:[%s16 + $0x60] sm:$0xff]
  %v4297 = vld [vmem:[%s16 + $0x68] sm:$0xff]
  %v4298 = vld [vmem:[%s16 + $0x70] sm:$0xff]
  %v4299 = vld [vmem:[%s16 + $0x78] sm:$0xff]
  %v4301 = vsel %vm185, %v4281, 0
  %4303 = vmatprep.subr.mxu0 0.0
  %4304 = vmatpush1.msra.mxu0 %v4288
  %4305 = vmatprep.subr.mxu0 0.0
  %4306 = vmatpush1.msra.mxu0 %v4289
  %4307 = vmatprep.subr.mxu0 0.0
  %4308 = vmatpush1.msra.mxu0 %v4290
  %4309 = vmatprep.subr.mxu0 0.0
  %4310 = vmatpush1.msra.mxu0 %v4291
  %4311 = vmatprep.subr.mxu0 0.0
  %4312 = vmatpush1.msra.mxu0 0.0
  %4313 = vmatprep.subr.mxu0 0.0
  %4314 = vmatpush1.msra.mxu0 0.0
  %4315 = vmatprep.subr.mxu0 0.0
  %4316 = vmatpush1.msra.mxu0 0.0
  %4317 = vmatprep.subr.mxu0 0.0
  %4318 = vmatpush1.msra.mxu0 0.0
  %4319 = vmatprep.subr.mxu0 0.0
  %4320 = vmatpush1.msra.mxu0 0.0
  %4321 = vmatprep.subr.mxu0 0.0
  %4322 = vmatpush1.msra.mxu0 0.0
  %4323 = vmatprep.subr.mxu0 0.0
  %4324 = vmatpush1.msra.mxu0 0.0
  %4325 = vmatprep.subr.mxu0 0.0
  %4326 = vmatpush1.msra.mxu0 0.0
  %4327 = vmatprep.subr.mxu0 0.0
  %4328 = vmatpush1.msra.mxu0 0.0
  %4329 = vmatprep.subr.mxu0 0.0
  %4330 = vmatpush1.msra.mxu0 0.0
  %4331 = vmatprep.subr.mxu0 0.0
  %4332 = vmatpush1.msra.mxu0 0.0
  %4333 = vmatprep.subr.mxu0 0.0
  %4334 = vmatpush1.msra.mxu0 0.0
  %4335 = vmatprep.subr.mxu0 0.0
  %4336 = vmatpush1.msra.mxu0 0.0
  %4337 = vmatprep.subr.mxu0 0.0
  %4338 = vmatpush1.msra.mxu0 0.0
  %4339 = vmatprep.subr.mxu0 0.0
  %4340 = vmatpush1.msra.mxu0 0.0
  %4341 = vmatprep.subr.mxu0 0.0
  %4342 = vmatpush1.msra.mxu0 0.0
  %4343 = vmatprep.subr.mxu0 0.0
  %4344 = vmatpush1.msra.mxu0 0.0
  %4345 = vmatprep.subr.mxu0 0.0
  %4346 = vmatpush1.msra.mxu0 0.0
  %4347 = vmatprep.subr.mxu0 0.0
  %4348 = vmatpush1.msra.mxu0 0.0
  %4349 = vmatprep.subr.mxu0 0.0
  %4350 = vmatpush1.msra.mxu0 0.0
  %4351 = vmatprep.subr.mxu0 0.0
  %4352 = vmatpush1.msra.mxu0 0.0
  %4353 = vmatprep.subr.mxu0 0.0
  %4354 = vmatpush1.msra.mxu0 0.0
  %4355 = vmatprep.subr.mxu0 0.0
  %4356 = vmatpush1.msra.mxu0 0.0
  %4357 = vmatprep.subr.mxu0 0.0
  %4358 = vmatpush1.msra.mxu0 0.0
  %4359 = vmatprep.subr.mxu0 0.0
  %4360 = vmatpush1.msra.mxu0 0.0
  %4361 = vmatprep.subr.mxu0 0.0
  %4362 = vmatpush1.msra.mxu0 0.0
  %4363 = vmatprep.subr.mxu0 0.0
  %4364 = vmatpush1.msra.mxu0 0.0
  %4365 = vmatprep.subr.mxu0 0.0
  %4366 = vmatpush1.msra.mxu0 0.0
  %4367 = vmatprep.mubr.f32.mxu0 0.0
  %4368 = vmatmul.mubr.f32.gmra.mrb[0].mxu0 %v4301
  %v4369 = vpop.f32.mrb[0].mxu0
  %v4370 = vadd.f32 0.0, %v4369
  %v4371 = vpop.f32.mrb[0].mxu0
  %4372 = vdwg.mxu0
  %v4374 = vsel %vm185, %v4280, 0
  %4376 = vmatprep.subr.mxu0 0.0
  %4377 = vmatpush1.msra.mxu0 %v4284
  %4378 = vmatprep.subr.mxu0 0.0
  %4379 = vmatpush1.msra.mxu0 %v4285
  %4380 = vmatprep.subr.mxu0 0.0
  %4381 = vmatpush1.msra.mxu0 %v4286
  %4382 = vmatprep.subr.mxu0 0.0
  %4383 = vmatpush1.msra.mxu0 %v4287
  %4384 = vmatprep.subr.mxu0 0.0
  %4385 = vmatpush1.msra.mxu0 0.0
  %4386 = vmatprep.subr.mxu0 0.0
  %4387 = vmatpush1.msra.mxu0 0.0
  %4388 = vmatprep.subr.mxu0 0.0
  %4389 = vmatpush1.msra.mxu0 0.0
  %4390 = vmatprep.subr.mxu0 0.0
  %4391 = vmatpush1.msra.mxu0 0.0
  %4392 = vmatprep.subr.mxu0 0.0
  %4393 = vmatpush1.msra.mxu0 0.0
  %4394 = vmatprep.subr.mxu0 0.0
  %4395 = vmatpush1.msra.mxu0 0.0
  %4396 = vmatprep.subr.mxu0 0.0
  %4397 = vmatpush1.msra.mxu0 0.0
  %4398 = vmatprep.subr.mxu0 0.0
  %4399 = vmatpush1.msra.mxu0 0.0
  %4400 = vmatprep.subr.mxu0 0.0
  %4401 = vmatpush1.msra.mxu0 0.0
  %4402 = vmatprep.subr.mxu0 0.0
  %4403 = vmatpush1.msra.mxu0 0.0
  %4404 = vmatprep.subr.mxu0 0.0
  %4405 = vmatpush1.msra.mxu0 0.0
  %4406 = vmatprep.subr.mxu0 0.0
  %4407 = vmatpush1.msra.mxu0 0.0
  %4408 = vmatprep.subr.mxu0 0.0
  %4409 = vmatpush1.msra.mxu0 0.0
  %4410 = vmatprep.subr.mxu0 0.0
  %4411 = vmatpush1.msra.mxu0 0.0
  %4412 = vmatprep.subr.mxu0 0.0
  %4413 = vmatpush1.msra.mxu0 0.0
  %4414 = vmatprep.subr.mxu0 0.0
  %4415 = vmatpush1.msra.mxu0 0.0
  %4416 = vmatprep.subr.mxu0 0.0
  %4417 = vmatpush1.msra.mxu0 0.0
  %4418 = vmatprep.subr.mxu0 0.0
  %4419 = vmatpush1.msra.mxu0 0.0
  %4420 = vmatprep.subr.mxu0 0.0
  %4421 = vmatpush1.msra.mxu0 0.0
  %4422 = vmatprep.subr.mxu0 0.0
  %4423 = vmatpush1.msra.mxu0 0.0
  %4424 = vmatprep.subr.mxu0 0.0
  %4425 = vmatpush1.msra.mxu0 0.0
  %4426 = vmatprep.subr.mxu0 0.0
  %4427 = vmatpush1.msra.mxu0 0.0
  %4428 = vmatprep.subr.mxu0 0.0
  %4429 = vmatpush1.msra.mxu0 0.0
  %4430 = vmatprep.subr.mxu0 0.0
  %4431 = vmatpush1.msra.mxu0 0.0
  %4432 = vmatprep.subr.mxu0 0.0
  %4433 = vmatpush1.msra.mxu0 0.0
  %4434 = vmatprep.subr.mxu0 0.0
  %4435 = vmatpush1.msra.mxu0 0.0
  %4436 = vmatprep.subr.mxu0 0.0
  %4437 = vmatpush1.msra.mxu0 0.0
  %4438 = vmatprep.subr.mxu0 0.0
  %4439 = vmatpush1.msra.mxu0 0.0
  %4440 = vmatprep.mubr.f32.mxu0 0.0
  %4441 = vmatmul.mubr.f32.gmra.mrb[0].mxu0 %v4374
  %v4442 = vpop.f32.mrb[0].mxu0
  %v4443 = vadd.f32 %v4370, %v4442
  %v4444 = vpop.f32.mrb[0].mxu0
  %4445 = vdwg.mxu0
  %v4447 = vsel %vm185, %v4282, 0
  %4449 = vmatprep.subr.mxu0 0.0
  %4450 = vmatpush1.msra.mxu0 %v4292
  %4451 = vmatprep.subr.mxu0 0.0
  %4452 = vmatpush1.msra.mxu0 %v4293
  %4453 = vmatprep.subr.mxu0 0.0
  %4454 = vmatpush1.msra.mxu0 %v4294
  %4455 = vmatprep.subr.mxu0 0.0
  %4456 = vmatpush1.msra.mxu0 %v4295
  %4457 = vmatprep.subr.mxu0 0.0
  %4458 = vmatpush1.msra.mxu0 0.0
  %4459 = vmatprep.subr.mxu0 0.0
  %4460 = vmatpush1.msra.mxu0 0.0
  %4461 = vmatprep.subr.mxu0 0.0
  %4462 = vmatpush1.msra.mxu0 0.0
  %4463 = vmatprep.subr.mxu0 0.0
  %4464 = vmatpush1.msra.mxu0 0.0
  %4465 = vmatprep.subr.mxu0 0.0
  %4466 = vmatpush1.msra.mxu0 0.0
  %4467 = vmatprep.subr.mxu0 0.0
  %4468 = vmatpush1.msra.mxu0 0.0
  %4469 = vmatprep.subr.mxu0 0.0
  %4470 = vmatpush1.msra.mxu0 0.0
  %4471 = vmatprep.subr.mxu0 0.0
  %4472 = vmatpush1.msra.mxu0 0.0
  %4473 = vmatprep.subr.mxu0 0.0
  %4474 = vmatpush1.msra.mxu0 0.0
  %4475 = vmatprep.subr.mxu0 0.0
  %4476 = vmatpush1.msra.mxu0 0.0
  %4477 = vmatprep.subr.mxu0 0.0
  %4478 = vmatpush1.msra.mxu0 0.0
  %4479 = vmatprep.subr.mxu0 0.0
  %4480 = vmatpush1.msra.mxu0 0.0
  %4481 = vmatprep.subr.mxu0 0.0
  %4482 = vmatpush1.msra.mxu0 0.0
  %4483 = vmatprep.subr.mxu0 0.0
  %4484 = vmatpush1.msra.mxu0 0.0
  %4485 = vmatprep.subr.mxu0 0.0
  %4486 = vmatpush1.msra.mxu0 0.0
  %4487 = vmatprep.subr.mxu0 0.0
  %4488 = vmatpush1.msra.mxu0 0.0
  %4489 = vmatprep.subr.mxu0 0.0
  %4490 = vmatpush1.msra.mxu0 0.0
  %4491 = vmatprep.subr.mxu0 0.0
  %4492 = vmatpush1.msra.mxu0 0.0
  %4493 = vmatprep.subr.mxu0 0.0
  %4494 = vmatpush1.msra.mxu0 0.0
  %4495 = vmatprep.subr.mxu0 0.0
  %4496 = vmatpush1.msra.mxu0 0.0
  %4497 = vmatprep.subr.mxu0 0.0
  %4498 = vmatpush1.msra.mxu0 0.0
  %4499 = vmatprep.subr.mxu0 0.0
  %4500 = vmatpush1.msra.mxu0 0.0
  %4501 = vmatprep.subr.mxu0 0.0
  %4502 = vmatpush1.msra.mxu0 0.0
  %4503 = vmatprep.subr.mxu0 0.0
  %4504 = vmatpush1.msra.mxu0 0.0
  %4505 = vmatprep.subr.mxu0 0.0
  %4506 = vmatpush1.msra.mxu0 0.0
  %4507 = vmatprep.subr.mxu0 0.0
  %4508 = vmatpush1.msra.mxu0 0.0
  %4509 = vmatprep.subr.mxu0 0.0
  %4510 = vmatpush1.msra.mxu0 0.0
  %4511 = vmatprep.subr.mxu0 0.0
  %4512 = vmatpush1.msra.mxu0 0.0
  %4513 = vmatprep.mubr.f32.mxu0 0.0
  %4514 = vmatmul.mubr.f32.gmra.mrb[0].mxu0 %v4447
  %v4515 = vpop.f32.mrb[0].mxu0
  %v4516 = vadd.f32 0.0, %v4515
  %v4517 = vpop.f32.mrb[0].mxu0
  %4518 = vdwg.mxu0
  %v4519 = vadd.f32 %v4443, %v4516
  %v4521 = vsel %vm185, %v4283, 0
  %4523 = vmatprep.subr.mxu0 0.0
  %4524 = vmatpush1.msra.mxu0 %v4296
  %4525 = vmatprep.subr.mxu0 0.0
  %4526 = vmatpush1.msra.mxu0 %v4297
  %4527 = vmatprep.subr.mxu0 0.0
  %4528 = vmatpush1.msra.mxu0 %v4298
  %4529 = vmatprep.subr.mxu0 0.0
  %4530 = vmatpush1.msra.mxu0 %v4299
  %4531 = vmatprep.subr.mxu0 0.0
  %4532 = vmatpush1.msra.mxu0 0.0
  %4533 = vmatprep.subr.mxu0 0.0
  %4534 = vmatpush1.msra.mxu0 0.0
  %4535 = vmatprep.subr.mxu0 0.0
  %4536 = vmatpush1.msra.mxu0 0.0
  %4537 = vmatprep.subr.mxu0 0.0
  %4538 = vmatpush1.msra.mxu0 0.0
  %4539 = vmatprep.subr.mxu0 0.0
  %4540 = vmatpush1.msra.mxu0 0.0
  %4541 = vmatprep.subr.mxu0 0.0
  %4542 = vmatpush1.msra.mxu0 0.0
  %4543 = vmatprep.subr.mxu0 0.0
  %4544 = vmatpush1.msra.mxu0 0.0
  %4545 = vmatprep.subr.mxu0 0.0
  %4546 = vmatpush1.msra.mxu0 0.0
  %4547 = vmatprep.subr.mxu0 0.0
  %4548 = vmatpush1.msra.mxu0 0.0
  %4549 = vmatprep.subr.mxu0 0.0
  %4550 = vmatpush1.msra.mxu0 0.0
  %4551 = vmatprep.subr.mxu0 0.0
  %4552 = vmatpush1.msra.mxu0 0.0
  %4553 = vmatprep.subr.mxu0 0.0
  %4554 = vmatpush1.msra.mxu0 0.0
  %4555 = vmatprep.subr.mxu0 0.0
  %4556 = vmatpush1.msra.mxu0 0.0
  %4557 = vmatprep.subr.mxu0 0.0
  %4558 = vmatpush1.msra.mxu0 0.0
  %4559 = vmatprep.subr.mxu0 0.0
  %4560 = vmatpush1.msra.mxu0 0.0
  %4561 = vmatprep.subr.mxu0 0.0
  %4562 = vmatpush1.msra.mxu0 0.0
  %4563 = vmatprep.subr.mxu0 0.0
  %4564 = vmatpush1.msra.mxu0 0.0
  %4565 = vmatprep.subr.mxu0 0.0
  %4566 = vmatpush1.msra.mxu0 0.0
  %4567 = vmatprep.subr.mxu0 0.0
  %4568 = vmatpush1.msra.mxu0 0.0
  %4569 = vmatprep.subr.mxu0 0.0
  %4570 = vmatpush1.msra.mxu0 0.0
  %4571 = vmatprep.subr.mxu0 0.0
  %4572 = vmatpush1.msra.mxu0 0.0
  %4573 = vmatprep.subr.mxu0 0.0
  %4574 = vmatpush1.msra.mxu0 0.0
  %4575 = vmatprep.subr.mxu0 0.0
  %4576 = vmatpush1.msra.mxu0 0.0
  %4577 = vmatprep.subr.mxu0 0.0
  %4578 = vmatpush1.msra.mxu0 0.0
  %4579 = vmatprep.subr.mxu0 0.0
  %4580 = vmatpush1.msra.mxu0 0.0
  %4581 = vmatprep.subr.mxu0 0.0
  %4582 = vmatpush1.msra.mxu0 0.0
  %4583 = vmatprep.subr.mxu0 0.0
  %4584 = vmatpush1.msra.mxu0 0.0
  %4585 = vmatprep.subr.mxu0 0.0
  %4586 = vmatpush1.msra.mxu0 0.0
  %4587 = vmatprep.mubr.f32.mxu0 0.0
  %4588 = vmatmul.mubr.f32.gmra.mrb[0].mxu0 %v4521
  %v4589 = vpop.f32.mrb[0].mxu0
  %v4590 = vadd.f32 0.0, %v4589
  %v4591 = vpop.f32.mrb[0].mxu0
  %4592 = vdwg.mxu0
  %v4593 = vadd.f32 %v4519, %v4590
  %v4594 = vld [vmem:[%s17] sm:$0x1]
  %v4596 = vlaneseq
  %v4597 = vshrl.u32 %v4596, 7
  %v4598 = vsub.s32 0, %v4597
  %v4599 = vrot.slane %v4594, %v4598
  %v4601 = vadd.f32 %v4593, %v4599
  %v4602 = vmax.f32 %v4601, 0.0
  %v4603 = vld [vmem:[%s18] sm:$0xff]
  %v4604 = vld [vmem:[%s18 + $0x8] sm:$0xff]
  %v4605 = vld [vmem:[%s18 + $0x10] sm:$0xff]
  %v4606 = vld [vmem:[%s18 + $0x18] sm:$0xff]
  %v4607 = vld [vmem:[%s18 + $0x20] sm:$0xff]
  %v4608 = vld [vmem:[%s18 + $0x28] sm:$0xff]
  %v4609 = vld [vmem:[%s18 + $0x30] sm:$0xff]
  %v4610 = vld [vmem:[%s18 + $0x38] sm:$0xff]
  %v4611 = vld [vmem:[%s19] sm:$0x1]
  %v4613 = vlaneseq
  %v4614 = vshrl.u32 %v4613, 7
  %v4615 = vsub.s32 0, %v4614
  %v4616 = vrot.slane %v4611, %v4615
  %vm4618 = vcmask 523264
  %v4620 = vsel %vm4618, %v4602, 0
  %4622 = vmatprep.subr.mxu0 0.0
  %4623 = vmatpush1.msra.mxu0 %v4603
  %4624 = vmatprep.subr.mxu0 0.0
  %4625 = vmatpush1.msra.mxu0 %v4604
  %4626 = vmatprep.subr.mxu0 0.0
  %4627 = vmatpush1.msra.mxu0 %v4605
  %4628 = vmatprep.subr.mxu0 0.0
  %4629 = vmatpush1.msra.mxu0 %v4606
  %4630 = vmatprep.subr.mxu0 0.0
  %4631 = vmatpush1.msra.mxu0 %v4607
  %4632 = vmatprep.subr.mxu0 0.0
  %4633 = vmatpush1.msra.mxu0 %v4608
  %4634 = vmatprep.subr.mxu0 0.0
  %4635 = vmatpush1.msra.mxu0 %v4609
  %4636 = vmatprep.subr.mxu0 0.0
  %4637 = vmatpush1.msra.mxu0 %v4610
  %4638 = vmatprep.subr.mxu0 0.0
  %4639 = vmatpush1.msra.mxu0 0.0
  %4640 = vmatprep.subr.mxu0 0.0
  %4641 = vmatpush1.msra.mxu0 0.0
  %4642 = vmatprep.subr.mxu0 0.0
  %4643 = vmatpush1.msra.mxu0 0.0
  %4644 = vmatprep.subr.mxu0 0.0
  %4645 = vmatpush1.msra.mxu0 0.0
  %4646 = vmatprep.subr.mxu0 0.0
  %4647 = vmatpush1.msra.mxu0 0.0
  %4648 = vmatprep.subr.mxu0 0.0
  %4649 = vmatpush1.msra.mxu0 0.0
  %4650 = vmatprep.subr.mxu0 0.0
  %4651 = vmatpush1.msra.mxu0 0.0
  %4652 = vmatprep.subr.mxu0 0.0
  %4653 = vmatpush1.msra.mxu0 0.0
  %4654 = vmatprep.subr.mxu0 0.0
  %4655 = vmatpush1.msra.mxu0 0.0
  %4656 = vmatprep.subr.mxu0 0.0
  %4657 = vmatpush1.msra.mxu0 0.0
  %4658 = vmatprep.subr.mxu0 0.0
  %4659 = vmatpush1.msra.mxu0 0.0
  %4660 = vmatprep.subr.mxu0 0.0
  %4661 = vmatpush1.msra.mxu0 0.0
  %4662 = vmatprep.subr.mxu0 0.0
  %4663 = vmatpush1.msra.mxu0 0.0
  %4664 = vmatprep.subr.mxu0 0.0
  %4665 = vmatpush1.msra.mxu0 0.0
  %4666 = vmatprep.subr.mxu0 0.0
  %4667 = vmatpush1.msra.mxu0 0.0
  %4668 = vmatprep.subr.mxu0 0.0
  %4669 = vmatpush1.msra.mxu0 0.0
  %4670 = vmatprep.subr.mxu0 0.0
  %4671 = vmatpush1.msra.mxu0 0.0
  %4672 = vmatprep.subr.mxu0 0.0
  %4673 = vmatpush1.msra.mxu0 0.0
  %4674 = vmatprep.subr.mxu0 0.0
  %4675 = vmatpush1.msra.mxu0 0.0
  %4676 = vmatprep.subr.mxu0 0.0
  %4677 = vmatpush1.msra.mxu0 0.0
  %4678 = vmatprep.subr.mxu0 0.0
  %4679 = vmatpush1.msra.mxu0 0.0
  %4680 = vmatprep.subr.mxu0 0.0
  %4681 = vmatpush1.msra.mxu0 0.0
  %4682 = vmatprep.subr.mxu0 0.0
  %4683 = vmatpush1.msra.mxu0 0.0
  %4684 = vmatprep.subr.mxu0 0.0
  %4685 = vmatpush1.msra.mxu0 0.0
  %4686 = vmatprep.mubr.f32.mxu0 0.0
  %4687 = vmatmul.mubr.f32.gmra.mrb[0].mxu0 %v4620
  %v4688 = vpop.f32.mrb[0].mxu0
  %v4689 = vadd.f32 %v4616, %v4688
  %v4690 = vpop.f32.mrb[0].mxu0
  %4691 = vdwg.mxu0
  %vm4692 = vcmask 9216
  %4693 = vst.msk [vmem:[%s20] sm:$0x3] %vm4692, %v4689
  // Predicated region
  $region82: #{forward.1} parent=0 // pred_check
    _
  $region83: #{forward.1} parent=0 // pred_check_branch
    %4695 = sbr.rel (0) target = $region85
  $region84: #{forward.1} parent=0 // pred_region
    _
  $region85: #{forward.1} parent=0 // pred_fallthru
    _
  // Predicated region
  $region86: #{forward.1} parent=0 // pred_check
    _
  $region87: #{forward.1} parent=0 // pred_check_branch
    %4697 = sbr.rel (0) target = $region89
  $region88: #{forward.1} parent=0 // pred_region
    _
  $region89: #{forward.1} parent=0 // pred_fallthru
    _

</llo_original>
